<compile_context>
chip_gen: v5e
topology: v5e:2x2
jax: 0.10.0
libtpu: 0.0.40
codegen_flags: <defaults>
</compile_context>

<pallas_src>
import jax
import jax.numpy as jnp
from jax.experimental import pallas as pl
from jax.experimental.pallas import tpu as pltpu

_SQRT_2_OVER_PI = 0.7978845608028654


def gelu_tanh(x):
    return 0.5 * x * (1.0 + jnp.tanh(_SQRT_2_OVER_PI * (x + 0.044715 * x * x * x)))


def make_frm_kernel(dim, HW, NB):
    f32 = jnp.float32
    K1 = 4 * dim           # channel-MLP hidden width (reduction = 1)
    K2 = 2 * dim           # channel-MLP output width
    inv_hw = 1.0 / HW

    # Row offsets inside the packed parameter blocks (see _pack_params).
    C_W2_R = K1 + 8
    C_B2_R = K1 + 8 + K2
    S_W1B_R = dim
    S_W2_R = 2 * dim
    S_B1_R = 2 * dim + 8
    S_B2_R = 3 * dim + 8

    def kernel(x1_ref, x2_ref, ch_ref, sp_ref, o1_ref, o2_ref):
        # ------- unpack grid-resident parameters (tiny, once per grid step) --------
        c_w1t = ch_ref[0:K1, :]                         # (4d, 4d) = cw_w1.T
        c_b1 = ch_ref[K1:K1 + 1, :]                     # (1, 4d)  bias row
        c_w2 = ch_ref[C_W2_R:C_W2_R + K2, :]            # (2d, 4d) = cw_w2 (PyTorch layout)
        c_b2 = ch_ref[C_B2_R:C_B2_R + K2, 0:1]          # (2d, 1)  bias column

        s_w1a = sp_ref[0:dim, :]                        # (d, d) = sw_w1[:, :d]
        s_w1b = sp_ref[S_W1B_R:S_W1B_R + dim, :]        # (d, d) = sw_w1[:, d:]
        s_w2 = sp_ref[S_W2_R:S_W2_R + 2, :]             # (2, d)
        s_b1 = sp_ref[S_B1_R:S_B1_R + dim, 0:1]         # (d, 1)
        s_b2 = sp_ref[S_B2_R:S_B2_R + 2, 0:1]           # (2, 1)

        for n in range(NB):                             # NB is tiny and static
            x1 = x1_ref[n]                              # (d, HW)  lane-dense
            x2 = x2_ref[n]                              # (d, HW)

            # ---- channel weights: avg/max pool -> 2-layer MLP -> sigmoid ----------
            avg1 = jnp.sum(x1, axis=1, keepdims=True) * inv_hw      # (d, 1)
            avg2 = jnp.sum(x2, axis=1, keepdims=True) * inv_hw
            mx1 = jnp.max(x1, axis=1, keepdims=True)
            mx2 = jnp.max(x2, axis=1, keepdims=True)
            y = jnp.concatenate([avg1, avg2, mx1, mx2], axis=0)     # (4d, 1)

            # layer 1 in row form with no relayout:
            #   (cw_w1 @ y)[o] == sum_i cw_w1.T[i, o] * y[i]
            hc = gelu_tanh(jnp.sum(c_w1t * y, axis=0, keepdims=True) + c_b1)   # (1, 4d)
            # layer 2 straight back to column form:
            #   cw[o] = sigmoid(sum_j cw_w2[o, j] * hc[j] + b2[o])
            ch_w = jax.nn.sigmoid(jnp.sum(c_w2 * hc, axis=1, keepdims=True) + c_b2)  # (2d, 1)
            cw1 = ch_w[:dim]                            # channel_weights[0] -> scales x1
            cw2 = ch_w[dim:]                            # channel_weights[1] -> scales x2

            # ---- spatial weights: 1x1-conv MLP -> sigmoid -------------------------
            hs = gelu_tanh(jnp.dot(s_w1a, x1, preferred_element_type=f32)
                           + jnp.dot(s_w1b, x2, preferred_element_type=f32)
                           + s_b1)                                           # (d, HW)
            sp_w = jax.nn.sigmoid(jnp.dot(s_w2, hs, preferred_element_type=f32)
                                  + s_b2)                                    # (2, HW)
            sw1 = sp_w[0:1, :]                          # spatial_weights[0] -> scales x1
            sw2 = sp_w[1:2, :]                          # spatial_weights[1] -> scales x2

            # ---- rectify (lambda_c = lambda_s = 0.5), weights fused ---------------
            o1_ref[n] = (x1 + 0.5 * (cw2 + sw2) * x2).astype(o1_ref.dtype)
            o2_ref[n] = (x2 + 0.5 * (cw1 + sw1) * x1).astype(o2_ref.dtype)

    return kernel


def _pack_params(p, dim):
    """Pack the 8 FRM parameters into 2 grid-resident blocks (fewer DMA pipelines)."""
    f32 = jnp.float32
    K1, K2 = 4 * dim, 2 * dim
    # Channel block (width 4*dim lanes): [cw_w1^T | cw_b1 row | cw_w2 | cw_b2 col].
    ch = jnp.zeros((K1 + 8 + 2 * K2, K1), f32)
    ch = ch.at[0:K1, :].set(p['cw_w1'].T.astype(f32))
    ch = ch.at[K1, :].set(p['cw_b1'][:, 0].astype(f32))
    ch = ch.at[K1 + 8:K1 + 8 + K2, :].set(p['cw_w2'].astype(f32))
    ch = ch.at[K1 + 8 + K2:K1 + 8 + 2 * K2, 0:1].set(p['cw_b2'].astype(f32))
    # Spatial block (width dim lanes): [sw_w1[:, :d] ; sw_w1[:, d:] ; sw_w2 ; b1 col ; b2 col].
    sp = jnp.zeros((3 * dim + 16, dim), f32)
    sp = sp.at[0:dim, :].set(p['sw_w1'][:, :dim].astype(f32))
    sp = sp.at[dim:2 * dim, :].set(p['sw_w1'][:, dim:].astype(f32))
    sp = sp.at[2 * dim:2 * dim + 2, :].set(p['sw_w2'].astype(f32))
    sp = sp.at[2 * dim + 8:3 * dim + 8, 0:1].set(p['sw_b1'].astype(f32))
    sp = sp.at[3 * dim + 8:3 * dim + 10, 0:1].set(p['sw_b2'].astype(f32))
    return ch, sp


def _batch_block_default(n_batch):
    # v7x has 2 TensorCores per chip: keep one batch element per "parallel" grid
    # step so the batch axis shards across cores.  v5e/v6e are single-TC, so the
    # grid is a serial loop: fold the whole (tiny) batch into one step to avoid
    # per-step pipeline overhead.
    try:
        kind = jax.devices()[0].device_kind.lower()
    except Exception:
        kind = ""
    multi_tc = ("v7" in kind) or ("7x" in kind)
    return 1 if multi_tc else n_batch


def feature_rectify(x1, x2, p, batch_block=None):
    """x1, x2: (N, dim, H, W) float32 (PyTorch NCHW). Returns (out_x1, out_x2)."""
    N, dim, H, W = x1.shape
    HW = H * W
    assert dim % 8 == 0 and HW % 128 == 0, "expect sublane/lane-aligned feature maps"

    NB = batch_block if batch_block is not None else _batch_block_default(N)
    if NB < 1 or (N % NB) != 0:
        NB = 1
    G = N // NB

    x1f = x1.reshape(N, dim, HW)
    x2f = x2.reshape(N, dim, HW)
    ch_pack, sp_pack = _pack_params(p, dim)

    kernel = make_frm_kernel(dim, HW, NB)

    act_spec = pl.BlockSpec((NB, dim, HW), lambda n: (n, 0, 0))
    ch_spec = pl.BlockSpec(ch_pack.shape, lambda n: (0, 0))
    sp_spec = pl.BlockSpec(sp_pack.shape, lambda n: (0, 0))

    grid_spec = pltpu.PrefetchScalarGridSpec(
        num_scalar_prefetch=0,
        grid=(G,),
        in_specs=[act_spec, act_spec, ch_spec, sp_spec],
        out_specs=(act_spec, act_spec),
    )

    o1, o2 = pl.pallas_call(
        kernel,
        out_shape=(jax.ShapeDtypeStruct((N, dim, HW), x1.dtype),
                   jax.ShapeDtypeStruct((N, dim, HW), x1.dtype)),
        grid_spec=grid_spec,
        compiler_params=pltpu.CompilerParams(dimension_semantics=("parallel",)),
    )(x1f, x2f, ch_pack, sp_pack)

    return o1.reshape(N, dim, H, W), o2.reshape(N, dim, H, W)


def reference(x1, x2, p):
    """Pure-JAX reference mirroring the PyTorch forward (NCHW)."""
    N, dim, H, W = x1.shape
    hp = jax.lax.Precision.HIGHEST
    x = jnp.concatenate([x1, x2], axis=1)                       # (N, 2*dim, H, W)

    # CNNChannelWeights
    avg = x.mean(axis=(2, 3))                                   # (N, 2*dim)
    mx = x.max(axis=(2, 3))                                     # (N, 2*dim)
    y = jnp.concatenate([avg, mx], axis=1)                      # (N, 4*dim)
    h = gelu_tanh(jnp.dot(y, p['cw_w1'].T, precision=hp) + p['cw_b1'][:, 0])
    cw = jax.nn.sigmoid(jnp.dot(h, p['cw_w2'].T, precision=hp) + p['cw_b2'][:, 0])
    cw1 = cw[:, :dim][:, :, None, None]                         # channel_weights[0]
    cw2 = cw[:, dim:][:, :, None, None]                         # channel_weights[1]

    # CNNSpatialWeights
    xf = x.reshape(N, 2 * dim, H * W)
    hs = gelu_tanh(jnp.einsum('oi,nis->nos', p['sw_w1'], xf, precision=hp)
                   + p['sw_b1'][None])
    s = jax.nn.sigmoid(jnp.einsum('oi,nis->nos', p['sw_w2'], hs, precision=hp)
                       + p['sw_b2'][None])
    s = s.reshape(N, 2, H, W)
    sw1 = s[:, 0:1]                                             # spatial_weights[0]
    sw2 = s[:, 1:2]                                             # spatial_weights[1]

    out1 = x1 + 0.5 * cw2 * x2 + 0.5 * sw2 * x2
    out2 = x2 + 0.5 * cw1 * x1 + 0.5 * sw1 * x1
    return out1, out2


if __name__ == "__main__":
    jax.config.update("jax_default_matmul_precision", "highest")

    N, DIM, H, W = 2, 32, 16, 16
    key = jax.random.PRNGKey(0)
    ks = jax.random.split(key, 10)

    # Synthetic parameters, shapes matching the PyTorch __init__ (reduction=1).
    # Conv2d 1x1 weights are (out_ch, in_ch); biases kept as (out_ch, 1) columns.
    params = dict(
        cw_w1=jax.random.normal(ks[0], (4 * DIM, 4 * DIM), jnp.float32) * 0.08,
        cw_b1=jax.random.normal(ks[1], (4 * DIM, 1), jnp.float32) * 0.10,
        cw_w2=jax.random.normal(ks[2], (2 * DIM, 4 * DIM), jnp.float32) * 0.08,
        cw_b2=jax.random.normal(ks[3], (2 * DIM, 1), jnp.float32) * 0.10,
        sw_w1=jax.random.normal(ks[4], (DIM, 2 * DIM), jnp.float32) * 0.10,
        sw_b1=jax.random.normal(ks[5], (DIM, 1), jnp.float32) * 0.10,
        sw_w2=jax.random.normal(ks[6], (2, DIM), jnp.float32) * 0.15,
        sw_b2=jax.random.normal(ks[7], (2, 1), jnp.float32) * 0.10,
    )

    x1 = jax.random.normal(ks[8], (N, DIM, H, W), jnp.float32)
    x2 = jax.random.normal(ks[9], (N, DIM, H, W), jnp.float32)

    o1, o2 = feature_rectify(x1, x2, params)
    o1, o2 = jax.block_until_ready((o1, o2))

    r1, r2 = reference(x1, x2, params)
    assert o1.shape == (N, DIM, H, W) and o2.shape == (N, DIM, H, W)
    assert jnp.allclose(o1, r1, atol=1e-4, rtol=1e-4), "out_x1 mismatch vs reference"
    assert jnp.allclose(o2, r2, atol=1e-4, rtol=1e-4), "out_x2 mismatch vs reference"

    print("KERNEL_OK")
</pallas_src>

<mosaic_0001>
module attributes {stable_mosaic.version = 11 : i64} {
  func.func @kernel(%arg0: i32, %arg1: memref<2x32x256xf32, #tpu.memory_space<vmem>>, %arg2: memref<2x32x256xf32, #tpu.memory_space<vmem>>, %arg3: memref<264x128xf32, #tpu.memory_space<vmem>>, %arg4: memref<112x32xf32, #tpu.memory_space<vmem>>, %arg5: memref<2x32x256xf32, #tpu.memory_space<vmem>>, %arg6: memref<2x32x256xf32, #tpu.memory_space<vmem>>) attributes {dimension_semantics = [#tpu.dimension_semantics<parallel>], iteration_bounds = array<i64: 1>, scalar_prefetch = 0 : i64, scratch_operands = 0 : i64, tpu.core_type = #tpu.core_type<tc>, window_params = [{transform_indices = @transform_0, window_bounds = array<i64: 2, 32, 256>}, {transform_indices = @transform_1, window_bounds = array<i64: 2, 32, 256>}, {pipeline_mode = #tpu.pipeline_mode<synchronous>, transform_indices = @transform_2, window_bounds = array<i64: 264, 128>}, {pipeline_mode = #tpu.pipeline_mode<synchronous>, transform_indices = @transform_3, window_bounds = array<i64: 112, 32>}, {transform_indices = @transform_4, window_bounds = array<i64: 2, 32, 256>}, {transform_indices = @transform_5, window_bounds = array<i64: 2, 32, 256>}]} {
    %c0 = arith.constant 0 : index
    %c0_0 = arith.constant 0 : index
    %0 = vector.load %arg3[%c0, %c0_0] : memref<264x128xf32, #tpu.memory_space<vmem>>, vector<128x128xf32>
    %c128 = arith.constant 128 : index
    %c0_1 = arith.constant 0 : index
    %1 = vector.load %arg3[%c128, %c0_1] : memref<264x128xf32, #tpu.memory_space<vmem>>, vector<1x128xf32>
    %c136 = arith.constant 136 : index
    %c0_2 = arith.constant 0 : index
    %2 = vector.load %arg3[%c136, %c0_2] : memref<264x128xf32, #tpu.memory_space<vmem>>, vector<64x128xf32>
    %c200 = arith.constant 200 : index
    %c0_3 = arith.constant 0 : index
    %3 = vector.load %arg3[%c200, %c0_3] : memref<264x128xf32, #tpu.memory_space<vmem>>, vector<64x1xf32>
    %c0_4 = arith.constant 0 : index
    %c0_5 = arith.constant 0 : index
    %4 = vector.load %arg4[%c0_4, %c0_5] : memref<112x32xf32, #tpu.memory_space<vmem>>, vector<32x32xf32>
    %c32 = arith.constant 32 : index
    %c0_6 = arith.constant 0 : index
    %5 = vector.load %arg4[%c32, %c0_6] : memref<112x32xf32, #tpu.memory_space<vmem>>, vector<32x32xf32>
    %c64 = arith.constant 64 : index
    %c0_7 = arith.constant 0 : index
    %6 = vector.load %arg4[%c64, %c0_7] : memref<112x32xf32, #tpu.memory_space<vmem>>, vector<2x32xf32>
    %c72 = arith.constant 72 : index
    %c0_8 = arith.constant 0 : index
    %7 = vector.load %arg4[%c72, %c0_8] : memref<112x32xf32, #tpu.memory_space<vmem>>, vector<32x1xf32>
    %c104 = arith.constant 104 : index
    %c0_9 = arith.constant 0 : index
    %8 = vector.load %arg4[%c104, %c0_9] : memref<112x32xf32, #tpu.memory_space<vmem>>, vector<2x1xf32>
    %c0_10 = arith.constant 0 : index
    %c0_11 = arith.constant 0 : index
    %c0_12 = arith.constant 0 : index
    %9 = vector.load %arg1[%c0_10, %c0_11, %c0_12] : memref<2x32x256xf32, #tpu.memory_space<vmem>>, vector<1x32x256xf32>
    %10 = vector.shape_cast %9 : vector<1x32x256xf32> to vector<32x256xf32>
    %c0_13 = arith.constant 0 : index
    %c0_14 = arith.constant 0 : index
    %c0_15 = arith.constant 0 : index
    %11 = vector.load %arg2[%c0_13, %c0_14, %c0_15] : memref<2x32x256xf32, #tpu.memory_space<vmem>>, vector<1x32x256xf32>
    %12 = vector.shape_cast %11 : vector<1x32x256xf32> to vector<32x256xf32>
    %cst = arith.constant dense<0.000000e+00> : vector<32xf32>
    %13 = vector.multi_reduction <add>, %10, %cst [1] : vector<32x256xf32> to vector<32xf32>
    %14 = vector.shape_cast %13 : vector<32xf32> to vector<32x1xf32>
    %cst_16 = arith.constant 3.906250e-03 : f32
    %15 = vector.broadcast %cst_16 : f32 to vector<32x1xf32>
    %16 = arith.mulf %14, %15 : vector<32x1xf32>
    %cst_17 = arith.constant dense<0.000000e+00> : vector<32xf32>
    %17 = vector.multi_reduction <add>, %12, %cst_17 [1] : vector<32x256xf32> to vector<32xf32>
    %18 = vector.shape_cast %17 : vector<32xf32> to vector<32x1xf32>
    %cst_18 = arith.constant 3.906250e-03 : f32
    %19 = vector.broadcast %cst_18 : f32 to vector<32x1xf32>
    %20 = arith.mulf %18, %19 : vector<32x1xf32>
    %cst_19 = arith.constant dense<0xFF800000> : vector<32xf32>
    %21 = vector.multi_reduction <maximumf>, %10, %cst_19 [1] : vector<32x256xf32> to vector<32xf32>
    %22 = vector.shape_cast %21 : vector<32xf32> to vector<32x1xf32>
    %cst_20 = arith.constant dense<0xFF800000> : vector<32xf32>
    %23 = vector.multi_reduction <maximumf>, %12, %cst_20 [1] : vector<32x256xf32> to vector<32xf32>
    %24 = vector.shape_cast %23 : vector<32xf32> to vector<32x1xf32>
    %25 = tpu.concatenate %16, %20, %22, %24 in 0 : vector<32x1xf32>, vector<32x1xf32>, vector<32x1xf32>, vector<32x1xf32> -> vector<128x1xf32>
    %26 = vector.broadcast %25 : vector<128x1xf32> to vector<128x128xf32>
    %27 = arith.mulf %0, %26 : vector<128x128xf32>
    %cst_21 = arith.constant dense<0.000000e+00> : vector<128xf32>
    %28 = vector.multi_reduction <add>, %27, %cst_21 [0] : vector<128x128xf32> to vector<128xf32>
    %29 = vector.shape_cast %28 : vector<128xf32> to vector<1x128xf32>
    %30 = arith.addf %29, %1 : vector<1x128xf32>
    %cst_22 = arith.constant 5.000000e-01 : f32
    %31 = vector.broadcast %cst_22 : f32 to vector<1x128xf32>
    %32 = arith.mulf %31, %30 : vector<1x128xf32>
    %cst_23 = arith.constant 4.471500e-02 : f32
    %33 = vector.broadcast %cst_23 : f32 to vector<1x128xf32>
    %34 = arith.mulf %33, %30 : vector<1x128xf32>
    %35 = arith.mulf %34, %30 : vector<1x128xf32>
    %36 = arith.mulf %35, %30 : vector<1x128xf32>
    %37 = arith.addf %30, %36 : vector<1x128xf32>
    %cst_24 = arith.constant 0.797884583 : f32
    %38 = vector.broadcast %cst_24 : f32 to vector<1x128xf32>
    %39 = arith.mulf %38, %37 : vector<1x128xf32>
    %40 = math.tanh %39 : vector<1x128xf32>
    %cst_25 = arith.constant 1.000000e+00 : f32
    %41 = vector.broadcast %cst_25 : f32 to vector<1x128xf32>
    %42 = arith.addf %41, %40 : vector<1x128xf32>
    %43 = arith.mulf %32, %42 : vector<1x128xf32>
    %44 = vector.broadcast %43 : vector<1x128xf32> to vector<64x128xf32>
    %45 = arith.mulf %2, %44 : vector<64x128xf32>
    %cst_26 = arith.constant dense<0.000000e+00> : vector<64xf32>
    %46 = vector.multi_reduction <add>, %45, %cst_26 [1] : vector<64x128xf32> to vector<64xf32>
    %47 = vector.shape_cast %46 : vector<64xf32> to vector<64x1xf32>
    %48 = arith.addf %47, %3 : vector<64x1xf32>
    %49 = arith.negf %48 : vector<64x1xf32>
    %50 = math.exp %49 : vector<64x1xf32>
    %cst_27 = arith.constant 1.000000e+00 : f32
    %51 = vector.broadcast %cst_27 : f32 to vector<64x1xf32>
    %52 = arith.addf %51, %50 : vector<64x1xf32>
    %53 = arith.divf %51, %52 : vector<64x1xf32>
    %54 = vector.extract_strided_slice %53 {offsets = [0, 0], sizes = [32, 1], strides = [1, 1]} : vector<64x1xf32> to vector<32x1xf32>
    %55 = vector.extract_strided_slice %53 {offsets = [32, 0], sizes = [32, 1], strides = [1, 1]} : vector<64x1xf32> to vector<32x1xf32>
    %cst_28 = arith.constant dense<0.000000e+00> : vector<32x256xf32>
    %56 = tpu.matmul %4, %10, %cst_28 {dimension_numbers = #tpu.dot_dimension_numbers<[1], [0], [0], [1], [0, 0, 1, 1], [], []>, precision = #tpu.contract_precision<fp32>} : vector<32x32xf32>, vector<32x256xf32>, vector<32x256xf32> -> vector<32x256xf32>
    %cst_29 = arith.constant dense<0.000000e+00> : vector<32x256xf32>
    %57 = tpu.matmul %5, %12, %cst_29 {dimension_numbers = #tpu.dot_dimension_numbers<[1], [0], [0], [1], [0, 0, 1, 1], [], []>, precision = #tpu.contract_precision<fp32>} : vector<32x32xf32>, vector<32x256xf32>, vector<32x256xf32> -> vector<32x256xf32>
    %58 = arith.addf %56, %57 : vector<32x256xf32>
    %59 = vector.broadcast %7 : vector<32x1xf32> to vector<32x256xf32>
    %60 = arith.addf %58, %59 : vector<32x256xf32>
    %cst_30 = arith.constant 5.000000e-01 : f32
    %61 = vector.broadcast %cst_30 : f32 to vector<32x256xf32>
    %62 = arith.mulf %61, %60 : vector<32x256xf32>
    %cst_31 = arith.constant 4.471500e-02 : f32
    %63 = vector.broadcast %cst_31 : f32 to vector<32x256xf32>
    %64 = arith.mulf %63, %60 : vector<32x256xf32>
    %65 = arith.mulf %64, %60 : vector<32x256xf32>
    %66 = arith.mulf %65, %60 : vector<32x256xf32>
    %67 = arith.addf %60, %66 : vector<32x256xf32>
    %cst_32 = arith.constant 0.797884583 : f32
    %68 = vector.broadcast %cst_32 : f32 to vector<32x256xf32>
    %69 = arith.mulf %68, %67 : vector<32x256xf32>
    %70 = math.tanh %69 : vector<32x256xf32>
    %cst_33 = arith.constant 1.000000e+00 : f32
    %71 = vector.broadcast %cst_33 : f32 to vector<32x256xf32>
    %72 = arith.addf %71, %70 : vector<32x256xf32>
    %73 = arith.mulf %62, %72 : vector<32x256xf32>
    %cst_34 = arith.constant dense<0.000000e+00> : vector<2x256xf32>
    %74 = tpu.matmul %6, %73, %cst_34 {dimension_numbers = #tpu.dot_dimension_numbers<[1], [0], [0], [1], [0, 0, 1, 1], [], []>, precision = #tpu.contract_precision<fp32>} : vector<2x32xf32>, vector<32x256xf32>, vector<2x256xf32> -> vector<2x256xf32>
    %75 = vector.broadcast %8 : vector<2x1xf32> to vector<2x256xf32>
    %76 = arith.addf %74, %75 : vector<2x256xf32>
    %77 = arith.negf %76 : vector<2x256xf32>
    %78 = math.exp %77 : vector<2x256xf32>
    %cst_35 = arith.constant 1.000000e+00 : f32
    %79 = vector.broadcast %cst_35 : f32 to vector<2x256xf32>
    %80 = arith.addf %79, %78 : vector<2x256xf32>
    %81 = arith.divf %79, %80 : vector<2x256xf32>
    %82 = vector.extract_strided_slice %81 {offsets = [0, 0], sizes = [1, 256], strides = [1, 1]} : vector<2x256xf32> to vector<1x256xf32>
    %83 = vector.extract_strided_slice %81 {offsets = [1, 0], sizes = [1, 256], strides = [1, 1]} : vector<2x256xf32> to vector<1x256xf32>
    %84 = vector.broadcast %55 : vector<32x1xf32> to vector<32x256xf32>
    %85 = vector.broadcast %83 : vector<1x256xf32> to vector<32x256xf32>
    %86 = arith.addf %84, %85 : vector<32x256xf32>
    %cst_36 = arith.constant 5.000000e-01 : f32
    %87 = vector.broadcast %cst_36 : f32 to vector<32x256xf32>
    %88 = arith.mulf %87, %86 : vector<32x256xf32>
    %89 = arith.mulf %88, %12 : vector<32x256xf32>
    %90 = arith.addf %10, %89 : vector<32x256xf32>
    %c0_37 = arith.constant 0 : index
    %c0_38 = arith.constant 0 : index
    %c0_39 = arith.constant 0 : index
    %91 = vector.load %arg5[%c0_37, %c0_38, %c0_39] : memref<2x32x256xf32, #tpu.memory_space<vmem>>, vector<1x32x256xf32>
    %92 = vector.shape_cast %91 : vector<1x32x256xf32> to vector<32x256xf32>
    %93 = vector.shape_cast %90 : vector<32x256xf32> to vector<1x32x256xf32>
    tpu.vector_store %arg5[%c0_37, %c0_38, %c0_39], %93 {strides = array<i32>} : memref<2x32x256xf32, #tpu.memory_space<vmem>>, vector<1x32x256xf32>,
    %94 = vector.broadcast %54 : vector<32x1xf32> to vector<32x256xf32>
    %95 = vector.broadcast %82 : vector<1x256xf32> to vector<32x256xf32>
    %96 = arith.addf %94, %95 : vector<32x256xf32>
    %cst_40 = arith.constant 5.000000e-01 : f32
    %97 = vector.broadcast %cst_40 : f32 to vector<32x256xf32>
    %98 = arith.mulf %97, %96 : vector<32x256xf32>
    %99 = arith.mulf %98, %10 : vector<32x256xf32>
    %100 = arith.addf %12, %99 : vector<32x256xf32>
    %c0_41 = arith.constant 0 : index
    %c0_42 = arith.constant 0 : index
    %c0_43 = arith.constant 0 : index
    %101 = vector.load %arg6[%c0_41, %c0_42, %c0_43] : memref<2x32x256xf32, #tpu.memory_space<vmem>>, vector<1x32x256xf32>
    %102 = vector.shape_cast %101 : vector<1x32x256xf32> to vector<32x256xf32>
    %103 = vector.shape_cast %100 : vector<32x256xf32> to vector<1x32x256xf32>
    tpu.vector_store %arg6[%c0_41, %c0_42, %c0_43], %103 {strides = array<i32>} : memref<2x32x256xf32, #tpu.memory_space<vmem>>, vector<1x32x256xf32>,
    %c1 = arith.constant 1 : index
    %c0_44 = arith.constant 0 : index
    %c0_45 = arith.constant 0 : index
    %104 = vector.load %arg1[%c1, %c0_44, %c0_45] : memref<2x32x256xf32, #tpu.memory_space<vmem>>, vector<1x32x256xf32>
    %105 = vector.shape_cast %104 : vector<1x32x256xf32> to vector<32x256xf32>
    %c1_46 = arith.constant 1 : index
    %c0_47 = arith.constant 0 : index
    %c0_48 = arith.constant 0 : index
    %106 = vector.load %arg2[%c1_46, %c0_47, %c0_48] : memref<2x32x256xf32, #tpu.memory_space<vmem>>, vector<1x32x256xf32>
    %107 = vector.shape_cast %106 : vector<1x32x256xf32> to vector<32x256xf32>
    %cst_49 = arith.constant dense<0.000000e+00> : vector<32xf32>
    %108 = vector.multi_reduction <add>, %105, %cst_49 [1] : vector<32x256xf32> to vector<32xf32>
    %109 = vector.shape_cast %108 : vector<32xf32> to vector<32x1xf32>
    %cst_50 = arith.constant 3.906250e-03 : f32
    %110 = vector.broadcast %cst_50 : f32 to vector<32x1xf32>
    %111 = arith.mulf %109, %110 : vector<32x1xf32>
    %cst_51 = arith.constant dense<0.000000e+00> : vector<32xf32>
    %112 = vector.multi_reduction <add>, %107, %cst_51 [1] : vector<32x256xf32> to vector<32xf32>
    %113 = vector.shape_cast %112 : vector<32xf32> to vector<32x1xf32>
    %cst_52 = arith.constant 3.906250e-03 : f32
    %114 = vector.broadcast %cst_52 : f32 to vector<32x1xf32>
    %115 = arith.mulf %113, %114 : vector<32x1xf32>
    %cst_53 = arith.constant dense<0xFF800000> : vector<32xf32>
    %116 = vector.multi_reduction <maximumf>, %105, %cst_53 [1] : vector<32x256xf32> to vector<32xf32>
    %117 = vector.shape_cast %116 : vector<32xf32> to vector<32x1xf32>
    %cst_54 = arith.constant dense<0xFF800000> : vector<32xf32>
    %118 = vector.multi_reduction <maximumf>, %107, %cst_54 [1] : vector<32x256xf32> to vector<32xf32>
    %119 = vector.shape_cast %118 : vector<32xf32> to vector<32x1xf32>
    %120 = tpu.concatenate %111, %115, %117, %119 in 0 : vector<32x1xf32>, vector<32x1xf32>, vector<32x1xf32>, vector<32x1xf32> -> vector<128x1xf32>
    %121 = vector.broadcast %120 : vector<128x1xf32> to vector<128x128xf32>
    %122 = arith.mulf %0, %121 : vector<128x128xf32>
    %cst_55 = arith.constant dense<0.000000e+00> : vector<128xf32>
    %123 = vector.multi_reduction <add>, %122, %cst_55 [0] : vector<128x128xf32> to vector<128xf32>
    %124 = vector.shape_cast %123 : vector<128xf32> to vector<1x128xf32>
    %125 = arith.addf %124, %1 : vector<1x128xf32>
    %cst_56 = arith.constant 5.000000e-01 : f32
    %126 = vector.broadcast %cst_56 : f32 to vector<1x128xf32>
    %127 = arith.mulf %126, %125 : vector<1x128xf32>
    %cst_57 = arith.constant 4.471500e-02 : f32
    %128 = vector.broadcast %cst_57 : f32 to vector<1x128xf32>
    %129 = arith.mulf %128, %125 : vector<1x128xf32>
    %130 = arith.mulf %129, %125 : vector<1x128xf32>
    %131 = arith.mulf %130, %125 : vector<1x128xf32>
    %132 = arith.addf %125, %131 : vector<1x128xf32>
    %cst_58 = arith.constant 0.797884583 : f32
    %133 = vector.broadcast %cst_58 : f32 to vector<1x128xf32>
    %134 = arith.mulf %133, %132 : vector<1x128xf32>
    %135 = math.tanh %134 : vector<1x128xf32>
    %cst_59 = arith.constant 1.000000e+00 : f32
    %136 = vector.broadcast %cst_59 : f32 to vector<1x128xf32>
    %137 = arith.addf %136, %135 : vector<1x128xf32>
    %138 = arith.mulf %127, %137 : vector<1x128xf32>
    %139 = vector.broadcast %138 : vector<1x128xf32> to vector<64x128xf32>
    %140 = arith.mulf %2, %139 : vector<64x128xf32>
    %cst_60 = arith.constant dense<0.000000e+00> : vector<64xf32>
    %141 = vector.multi_reduction <add>, %140, %cst_60 [1] : vector<64x128xf32> to vector<64xf32>
    %142 = vector.shape_cast %141 : vector<64xf32> to vector<64x1xf32>
    %143 = arith.addf %142, %3 : vector<64x1xf32>
    %144 = arith.negf %143 : vector<64x1xf32>
    %145 = math.exp %144 : vector<64x1xf32>
    %cst_61 = arith.constant 1.000000e+00 : f32
    %146 = vector.broadcast %cst_61 : f32 to vector<64x1xf32>
    %147 = arith.addf %146, %145 : vector<64x1xf32>
    %148 = arith.divf %146, %147 : vector<64x1xf32>
    %149 = vector.extract_strided_slice %148 {offsets = [0, 0], sizes = [32, 1], strides = [1, 1]} : vector<64x1xf32> to vector<32x1xf32>
    %150 = vector.extract_strided_slice %148 {offsets = [32, 0], sizes = [32, 1], strides = [1, 1]} : vector<64x1xf32> to vector<32x1xf32>
    %cst_62 = arith.constant dense<0.000000e+00> : vector<32x256xf32>
    %151 = tpu.matmul %4, %105, %cst_62 {dimension_numbers = #tpu.dot_dimension_numbers<[1], [0], [0], [1], [0, 0, 1, 1], [], []>, precision = #tpu.contract_precision<fp32>} : vector<32x32xf32>, vector<32x256xf32>, vector<32x256xf32> -> vector<32x256xf32>
    %cst_63 = arith.constant dense<0.000000e+00> : vector<32x256xf32>
    %152 = tpu.matmul %5, %107, %cst_63 {dimension_numbers = #tpu.dot_dimension_numbers<[1], [0], [0], [1], [0, 0, 1, 1], [], []>, precision = #tpu.contract_precision<fp32>} : vector<32x32xf32>, vector<32x256xf32>, vector<32x256xf32> -> vector<32x256xf32>
    %153 = arith.addf %151, %152 : vector<32x256xf32>
    %154 = vector.broadcast %7 : vector<32x1xf32> to vector<32x256xf32>
    %155 = arith.addf %153, %154 : vector<32x256xf32>
    %cst_64 = arith.constant 5.000000e-01 : f32
    %156 = vector.broadcast %cst_64 : f32 to vector<32x256xf32>
    %157 = arith.mulf %156, %155 : vector<32x256xf32>
    %cst_65 = arith.constant 4.471500e-02 : f32
    %158 = vector.broadcast %cst_65 : f32 to vector<32x256xf32>
    %159 = arith.mulf %158, %155 : vector<32x256xf32>
    %160 = arith.mulf %159, %155 : vector<32x256xf32>
    %161 = arith.mulf %160, %155 : vector<32x256xf32>
    %162 = arith.addf %155, %161 : vector<32x256xf32>
    %cst_66 = arith.constant 0.797884583 : f32
    %163 = vector.broadcast %cst_66 : f32 to vector<32x256xf32>
    %164 = arith.mulf %163, %162 : vector<32x256xf32>
    %165 = math.tanh %164 : vector<32x256xf32>
    %cst_67 = arith.constant 1.000000e+00 : f32
    %166 = vector.broadcast %cst_67 : f32 to vector<32x256xf32>
    %167 = arith.addf %166, %165 : vector<32x256xf32>
    %168 = arith.mulf %157, %167 : vector<32x256xf32>
    %cst_68 = arith.constant dense<0.000000e+00> : vector<2x256xf32>
    %169 = tpu.matmul %6, %168, %cst_68 {dimension_numbers = #tpu.dot_dimension_numbers<[1], [0], [0], [1], [0, 0, 1, 1], [], []>, precision = #tpu.contract_precision<fp32>} : vector<2x32xf32>, vector<32x256xf32>, vector<2x256xf32> -> vector<2x256xf32>
    %170 = vector.broadcast %8 : vector<2x1xf32> to vector<2x256xf32>
    %171 = arith.addf %169, %170 : vector<2x256xf32>
    %172 = arith.negf %171 : vector<2x256xf32>
    %173 = math.exp %172 : vector<2x256xf32>
    %cst_69 = arith.constant 1.000000e+00 : f32
    %174 = vector.broadcast %cst_69 : f32 to vector<2x256xf32>
    %175 = arith.addf %174, %173 : vector<2x256xf32>
    %176 = arith.divf %174, %175 : vector<2x256xf32>
    %177 = vector.extract_strided_slice %176 {offsets = [0, 0], sizes = [1, 256], strides = [1, 1]} : vector<2x256xf32> to vector<1x256xf32>
    %178 = vector.extract_strided_slice %176 {offsets = [1, 0], sizes = [1, 256], strides = [1, 1]} : vector<2x256xf32> to vector<1x256xf32>
    %179 = vector.broadcast %150 : vector<32x1xf32> to vector<32x256xf32>
    %180 = vector.broadcast %178 : vector<1x256xf32> to vector<32x256xf32>
    %181 = arith.addf %179, %180 : vector<32x256xf32>
    %cst_70 = arith.constant 5.000000e-01 : f32
    %182 = vector.broadcast %cst_70 : f32 to vector<32x256xf32>
    %183 = arith.mulf %182, %181 : vector<32x256xf32>
    %184 = arith.mulf %183, %107 : vector<32x256xf32>
    %185 = arith.addf %105, %184 : vector<32x256xf32>
    %c1_71 = arith.constant 1 : index
    %c0_72 = arith.constant 0 : index
    %c0_73 = arith.constant 0 : index
    %186 = vector.load %arg5[%c1_71, %c0_72, %c0_73] : memref<2x32x256xf32, #tpu.memory_space<vmem>>, vector<1x32x256xf32>
    %187 = vector.shape_cast %186 : vector<1x32x256xf32> to vector<32x256xf32>
    %188 = vector.shape_cast %185 : vector<32x256xf32> to vector<1x32x256xf32>
    tpu.vector_store %arg5[%c1_71, %c0_72, %c0_73], %188 {strides = array<i32>} : memref<2x32x256xf32, #tpu.memory_space<vmem>>, vector<1x32x256xf32>,
    %189 = vector.broadcast %149 : vector<32x1xf32> to vector<32x256xf32>
    %190 = vector.broadcast %177 : vector<1x256xf32> to vector<32x256xf32>
    %191 = arith.addf %189, %190 : vector<32x256xf32>
    %cst_74 = arith.constant 5.000000e-01 : f32
    %192 = vector.broadcast %cst_74 : f32 to vector<32x256xf32>
    %193 = arith.mulf %192, %191 : vector<32x256xf32>
    %194 = arith.mulf %193, %105 : vector<32x256xf32>
    %195 = arith.addf %107, %194 : vector<32x256xf32>
    %c1_75 = arith.constant 1 : index
    %c0_76 = arith.constant 0 : index
    %c0_77 = arith.constant 0 : index
    %196 = vector.load %arg6[%c1_75, %c0_76, %c0_77] : memref<2x32x256xf32, #tpu.memory_space<vmem>>, vector<1x32x256xf32>
    %197 = vector.shape_cast %196 : vector<1x32x256xf32> to vector<32x256xf32>
    %198 = vector.shape_cast %195 : vector<32x256xf32> to vector<1x32x256xf32>
    tpu.vector_store %arg6[%c1_75, %c0_76, %c0_77], %198 {strides = array<i32>} : memref<2x32x256xf32, #tpu.memory_space<vmem>>, vector<1x32x256xf32>,
    return
  }
  func.func @transform_0(%arg0: i32) -> (i32, i32, i32) {
    %c0_i32 = arith.constant 0 : i32
    %c0_i32_0 = arith.constant 0 : i32
    %c0_i32_1 = arith.constant 0 : i32
    return %arg0, %c0_i32, %c0_i32_0 : i32, i32, i32
  }
  func.func @transform_1(%arg0: i32) -> (i32, i32, i32) {
    %c0_i32 = arith.constant 0 : i32
    %c0_i32_0 = arith.constant 0 : i32
    %c0_i32_1 = arith.constant 0 : i32
    return %arg0, %c0_i32, %c0_i32_0 : i32, i32, i32
  }
  func.func @transform_2(%arg0: i32) -> (i32, i32) {
    %c0_i32 = arith.constant 0 : i32
    %c0_i32_0 = arith.constant 0 : i32
    %c0_i32_1 = arith.constant 0 : i32
    return %c0_i32, %c0_i32_0 : i32, i32
  }
  func.func @transform_3(%arg0: i32) -> (i32, i32) {
    %c0_i32 = arith.constant 0 : i32
    %c0_i32_0 = arith.constant 0 : i32
    %c0_i32_1 = arith.constant 0 : i32
    return %c0_i32, %c0_i32_0 : i32, i32
  }
  func.func @transform_4(%arg0: i32) -> (i32, i32, i32) {
    %c0_i32 = arith.constant 0 : i32
    %c0_i32_0 = arith.constant 0 : i32
    %c0_i32_1 = arith.constant 0 : i32
    return %arg0, %c0_i32, %c0_i32_0 : i32, i32, i32
  }
  func.func @transform_5(%arg0: i32) -> (i32, i32, i32) {
    %c0_i32 = arith.constant 0 : i32
    %c0_i32_0 = arith.constant 0 : i32
    %c0_i32_1 = arith.constant 0 : i32
    return %arg0, %c0_i32, %c0_i32_0 : i32, i32, i32
  }
}

</mosaic_0001>

<llo_original>
// kernel: tpu_custom_call.1
$region0: #{tpu_custom_call.1}
  #allocation0 [shape = 'u32[]', space=smem, size = 0x4, offset = 0x4, fixed_abs, tag = 'smem constant byte address 0x4 - core index']
  #allocation1 [shape = 'u32[72,128]{1,0:T(1,128)}', space=vmem, size = 0x9000, scoped, tag = 'internal scratch']
  %s0 = inlined_call_operand.vmem [shape: f32[2,32,256], index: 0, kind: input, shape index: {}]
  %s1 = inlined_call_operand.hbm [shape: f32[2,32,256], index: 1, kind: input, shape index: {}]
  %s2 = inlined_call_operand.hbm [shape: f32[264,128], index: 2, kind: input, shape index: {}]
  %s3 = inlined_call_operand.vmem [shape: f32[112,32], index: 3, kind: input, shape index: {}]
  %s4 = inlined_call_operand.hbm [shape: f32[2,32,256], index: 4, kind: output, shape index: {0}]
  %s5 = inlined_call_operand.hbm [shape: f32[2,32,256], index: 5, kind: output, shape index: {1}]
  %6 = xla_tuple %s4, %s5
  %s7 = sld [smem:[#allocation0]]
  $region42: #{tpu_custom_call.1} parent=0
    _
  %s9 = ssub.s32 1, %s7
  %s10 = scalar_select 0, %s9, %s7
  $region1: #{tpu_custom_call.1} parent=0
    #allocation2 [shape = 'u8[65536]{0}', space=vmem, size = 0x10000, scoped, tag = 'input window, operand 1, single buffered']
    #allocation3 [shape = 's32[1]{0}', space=sflag, size = 0x4, scoped, tag = 'scoped memory for tpu_custom_call.1']
    #allocation4 [shape = 's32[1]{0}', space=sflag, size = 0x4, scoped, tag = 'scoped memory for tpu_custom_call.1']
    #allocation5 [shape = 'u8[135168]{0}', space=vmem, size = 0x21000, scoped, tag = 'input window, operand 2, single buffered']
    #allocation6 [shape = 's32[1]{0}', space=sflag, size = 0x4, scoped, tag = 'scoped memory for tpu_custom_call.1']
    #allocation7 [shape = 'u8[65536]{0}', space=vmem, size = 0x10000, scoped, tag = 'output window, operand 0, single buffered']
    #allocation8 [shape = 'u8[65536]{0}', space=vmem, size = 0x10000, scoped, tag = 'output window, operand 1, single buffered']
    #allocation9 [shape = 's32[1]{0}', space=sflag, size = 0x4, scoped, tag = 'scoped memory for tpu_custom_call.1']
    %11 = vsyncpa [#allocation3], 0
    %12 = vsyncpa [#allocation6], 0
    %13 = vsyncpa [#allocation4], 0
    %14 = vsyncpa [#allocation9], 0
    // Predicated region
    $region2: #{tpu_custom_call.1} parent=1 // pred_check
      _
    $region3: #{tpu_custom_call.1} parent=1 // pred_check_branch
      %16 = sbr.rel (0) target = $region5
    $region4: #{tpu_custom_call.1} parent=1 // pred_region
      _
    $region5: #{tpu_custom_call.1} parent=1 // pred_fallthru
      _
    // Predicated region
    $region6: #{tpu_custom_call.1} parent=1 // pred_check
      _
    $region7: #{tpu_custom_call.1} parent=1 // pred_check_branch
      %18 = sbr.rel (0) target = $region9
    $region8: #{tpu_custom_call.1} parent=1 // pred_region
      %20 = vsyncadd [#allocation3], 0
      %s21 = sshll.u32 %s1, 4
      %s22 = int_to_ptr.hbm [resolvable:$true] %s21
      %s23 = sshll.u32 [#allocation2], 4
      %s24 = int_to_ptr.vmem [resolvable:$true] %s23
      %29 = dma.hbm_to_vmem [thread:$0]  %s22, 2048, %s24, [#allocation3], 256, 256, 16
    $region9: #{tpu_custom_call.1} parent=1 // pred_fallthru
      _
    // Predicated region
    $region10: #{tpu_custom_call.1} parent=1 // pred_check
      _
    $region11: #{tpu_custom_call.1} parent=1 // pred_check_branch
      %31 = sbr.rel (0) target = $region13
    $region12: #{tpu_custom_call.1} parent=1 // pred_region
      %33 = vsyncadd [#allocation6], 0
      %s34 = sshll.u32 %s2, 4
      %s35 = int_to_ptr.hbm [resolvable:$true] %s34
      %s36 = sshll.u32 [#allocation5], 4
      %s37 = int_to_ptr.vmem [resolvable:$true] %s36
      %42 = dma.hbm_to_vmem [thread:$0]  %s35, 4224, %s37, [#allocation6], 128, 128, 8
    $region13: #{tpu_custom_call.1} parent=1 // pred_fallthru
      _
    // Predicated region
    $region14: #{tpu_custom_call.1} parent=1 // pred_check
      _
    $region15: #{tpu_custom_call.1} parent=1 // pred_check_branch
      %44 = sbr.rel (0) target = $region17
    $region16: #{tpu_custom_call.1} parent=1 // pred_region
      _
    $region17: #{tpu_custom_call.1} parent=1 // pred_fallthru
      _
    // Predicated region
    $region18: #{tpu_custom_call.1} parent=1 // pred_check
      _
    $region19: #{tpu_custom_call.1} parent=1 // pred_check_branch
      %46 = sbr.rel (0) target = $region21
    $region20: #{tpu_custom_call.1} parent=1 // pred_region
      %48 = dma.done [#allocation3], 2048
    $region21: #{tpu_custom_call.1} parent=1 // pred_fallthru
      _
    // Predicated region
    $region22: #{tpu_custom_call.1} parent=1 // pred_check
      _
    $region23: #{tpu_custom_call.1} parent=1 // pred_check_branch
      %50 = sbr.rel (0) target = $region25
    $region24: #{tpu_custom_call.1} parent=1 // pred_region
      %52 = dma.done [#allocation6], 4224
    $region25: #{tpu_custom_call.1} parent=1 // pred_fallthru
      _
    %v53 = vld [vmem:[#allocation5] sm:$0xff]
    %v54 = vld [vmem:[#allocation5 + $0x8] sm:$0xff]
    %v55 = vld [vmem:[#allocation5 + $0x10] sm:$0xff]
    %v56 = vld [vmem:[#allocation5 + $0x18] sm:$0xff]
    %v57 = vld [vmem:[#allocation5 + $0x20] sm:$0xff]
    %v58 = vld [vmem:[#allocation5 + $0x28] sm:$0xff]
    %v59 = vld [vmem:[#allocation5 + $0x30] sm:$0xff]
    %v60 = vld [vmem:[#allocation5 + $0x38] sm:$0xff]
    %v61 = vld [vmem:[#allocation5 + $0x40] sm:$0xff]
    %v62 = vld [vmem:[#allocation5 + $0x48] sm:$0xff]
    %v63 = vld [vmem:[#allocation5 + $0x50] sm:$0xff]
    %v64 = vld [vmem:[#allocation5 + $0x58] sm:$0xff]
    %v65 = vld [vmem:[#allocation5 + $0x60] sm:$0xff]
    %v66 = vld [vmem:[#allocation5 + $0x68] sm:$0xff]
    %v67 = vld [vmem:[#allocation5 + $0x70] sm:$0xff]
    %v68 = vld [vmem:[#allocation5 + $0x78] sm:$0xff]
    %v69 = vld [vmem:[#allocation5 + $0x80] sm:$0x1]
    %v70 = vld [vmem:[#allocation5 + $0x88] sm:$0xff]
    %v71 = vld [vmem:[#allocation5 + $0x90] sm:$0xff]
    %v72 = vld [vmem:[#allocation5 + $0x98] sm:$0xff]
    %v73 = vld [vmem:[#allocation5 + $0xa0] sm:$0xff]
    %v74 = vld [vmem:[#allocation5 + $0xa8] sm:$0xff]
    %v75 = vld [vmem:[#allocation5 + $0xb0] sm:$0xff]
    %v76 = vld [vmem:[#allocation5 + $0xb8] sm:$0xff]
    %v77 = vld [vmem:[#allocation5 + $0xc0] sm:$0xff]
    %v78 = vld [vmem:[#allocation5 + $0xc8] sm:$0xff]
    %v79 = vld [vmem:[#allocation5 + $0xd0] sm:$0xff]
    %v80 = vld [vmem:[#allocation5 + $0xd8] sm:$0xff]
    %v81 = vld [vmem:[#allocation5 + $0xe0] sm:$0xff]
    %v82 = vld [vmem:[#allocation5 + $0xe8] sm:$0xff]
    %v83 = vld [vmem:[#allocation5 + $0xf0] sm:$0xff]
    %v84 = vld [vmem:[#allocation5 + $0xf8] sm:$0xff]
    %v85 = vld [vmem:[#allocation5 + $0x100] sm:$0xff]
    %v86 = vld [vmem:[%s3] sm:$0xff]
    %v87 = vld [vmem:[%s3 + $0x8] sm:$0xff]
    %v88 = vld [vmem:[%s3 + $0x10] sm:$0xff]
    %v89 = vld [vmem:[%s3 + $0x18] sm:$0xff]
    %v90 = vld [vmem:[%s3 + $0x20] sm:$0xff]
    %v91 = vld [vmem:[%s3 + $0x28] sm:$0xff]
    %v92 = vld [vmem:[%s3 + $0x30] sm:$0xff]
    %v93 = vld [vmem:[%s3 + $0x38] sm:$0xff]
    %v94 = vld [vmem:[%s3 + $0x40] sm:$0x3]
    %v95 = vld [vmem:[%s3 + $0x48] sm:$0xff]
    %v96 = vld [vmem:[%s3 + $0x50] sm:$0xff]
    %v97 = vld [vmem:[%s3 + $0x58] sm:$0xff]
    %v98 = vld [vmem:[%s3 + $0x60] sm:$0xff]
    %v99 = vld [vmem:[%s3 + $0x68] sm:$0x3]
    %v100 = vld [vmem:[%s0] sm:$0xff]
    %v101 = vld [vmem:[%s0 + $0x8] sm:$0xff]
    %v102 = vld [vmem:[%s0 + $0x10] sm:$0xff]
    %v103 = vld [vmem:[%s0 + $0x18] sm:$0xff]
    %v104 = vld [vmem:[%s0 + $0x20] sm:$0xff]
    %v105 = vld [vmem:[%s0 + $0x28] sm:$0xff]
    %v106 = vld [vmem:[%s0 + $0x30] sm:$0xff]
    %v107 = vld [vmem:[%s0 + $0x38] sm:$0xff]
    %v108 = vld [vmem:[#allocation2] sm:$0xff]
    %v109 = vld [vmem:[#allocation2 + $0x8] sm:$0xff]
    %v110 = vld [vmem:[#allocation2 + $0x10] sm:$0xff]
    %v111 = vld [vmem:[#allocation2 + $0x18] sm:$0xff]
    %v112 = vld [vmem:[#allocation2 + $0x20] sm:$0xff]
    %v113 = vld [vmem:[#allocation2 + $0x28] sm:$0xff]
    %v114 = vld [vmem:[#allocation2 + $0x30] sm:$0xff]
    %v115 = vld [vmem:[#allocation2 + $0x38] sm:$0xff]
    %v116 = vadd.f32 %v100, %v101
    %117 = vadd.xlane.f32.xlu0 %v116
    %v118 = vpop.xlane.xlu0 %117
    %v119 = vadd.f32 %v102, %v103
    %120 = vadd.xlane.f32.xlu0 %v119
    %v121 = vpop.xlane.xlu0 %120
    %v122 = vadd.f32 %v104, %v105
    %123 = vadd.xlane.f32.xlu0 %v122
    %v124 = vpop.xlane.xlu0 %123
    %v125 = vadd.f32 %v106, %v107
    %126 = vadd.xlane.f32.xlu0 %v125
    %v127 = vpop.xlane.xlu0 %126
    %v128 = vmul.f32 %v118, 0.00390625
    %v129 = vmul.f32 %v121, 0.00390625
    %v130 = vmul.f32 %v124, 0.00390625
    %v131 = vmul.f32 %v127, 0.00390625
    %v132 = vadd.f32 %v108, %v109
    %133 = vadd.xlane.f32.xlu0 %v132
    %v134 = vpop.xlane.xlu0 %133
    %v135 = vadd.f32 %v110, %v111
    %136 = vadd.xlane.f32.xlu0 %v135
    %v137 = vpop.xlane.xlu0 %136
    %v138 = vadd.f32 %v112, %v113
    %139 = vadd.xlane.f32.xlu0 %v138
    %v140 = vpop.xlane.xlu0 %139
    %v141 = vadd.f32 %v114, %v115
    %142 = vadd.xlane.f32.xlu0 %v141
    %v143 = vpop.xlane.xlu0 %142
    %v144 = vmul.f32 %v134, 0.00390625
    %v145 = vmul.f32 %v137, 0.00390625
    %v146 = vmul.f32 %v140, 0.00390625
    %v147 = vmul.f32 %v143, 0.00390625
    %v148 = vmax.f32 %v100, %v101
    %149 = vmax.xlane.f32.xlu0 %v148
    %v150 = vpop.xlane.xlu0 %149
    %v151 = vmax.f32 %v102, %v103
    %152 = vmax.xlane.f32.xlu0 %v151
    %v153 = vpop.xlane.xlu0 %152
    %v154 = vmax.f32 %v104, %v105
    %155 = vmax.xlane.f32.xlu0 %v154
    %v156 = vpop.xlane.xlu0 %155
    %v157 = vmax.f32 %v106, %v107
    %158 = vmax.xlane.f32.xlu0 %v157
    %v159 = vpop.xlane.xlu0 %158
    %v160 = vmax.f32 %v108, %v109
    %161 = vmax.xlane.f32.xlu0 %v160
    %v162 = vpop.xlane.xlu0 %161
    %v163 = vmax.f32 %v110, %v111
    %164 = vmax.xlane.f32.xlu0 %v163
    %v165 = vpop.xlane.xlu0 %164
    %v166 = vmax.f32 %v112, %v113
    %167 = vmax.xlane.f32.xlu0 %v166
    %v168 = vpop.xlane.xlu0 %167
    %v169 = vmax.f32 %v114, %v115
    %170 = vmax.xlane.f32.xlu0 %v169
    %v171 = vpop.xlane.xlu0 %170
    %173 = vset.pattern.permute.xlu0 0
    %174 = vperm.xlu0 %173, %v128
    %v175 = vpop.permute.xlu0 %174
    %178 = vset.pattern.permute.xlu0 0
    %179 = vperm.xlu0 %178, %v129
    %v180 = vpop.permute.xlu0 %179
    %183 = vset.pattern.permute.xlu0 0
    %184 = vperm.xlu0 %183, %v130
    %v185 = vpop.permute.xlu0 %184
    %188 = vset.pattern.permute.xlu0 0
    %189 = vperm.xlu0 %188, %v131
    %v190 = vpop.permute.xlu0 %189
    %193 = vset.pattern.permute.xlu0 0
    %194 = vperm.xlu0 %193, %v144
    %v195 = vpop.permute.xlu0 %194
    %198 = vset.pattern.permute.xlu0 0
    %199 = vperm.xlu0 %198, %v145
    %v200 = vpop.permute.xlu0 %199
    %203 = vset.pattern.permute.xlu0 0
    %204 = vperm.xlu0 %203, %v146
    %v205 = vpop.permute.xlu0 %204
    %208 = vset.pattern.permute.xlu0 0
    %209 = vperm.xlu0 %208, %v147
    %v210 = vpop.permute.xlu0 %209
    %213 = vset.pattern.permute.xlu0 0
    %214 = vperm.xlu0 %213, %v150
    %v215 = vpop.permute.xlu0 %214
    %218 = vset.pattern.permute.xlu0 0
    %219 = vperm.xlu0 %218, %v153
    %v220 = vpop.permute.xlu0 %219
    %223 = vset.pattern.permute.xlu0 0
    %224 = vperm.xlu0 %223, %v156
    %v225 = vpop.permute.xlu0 %224
    %228 = vset.pattern.permute.xlu0 0
    %229 = vperm.xlu0 %228, %v159
    %v230 = vpop.permute.xlu0 %229
    %233 = vset.pattern.permute.xlu0 0
    %234 = vperm.xlu0 %233, %v162
    %v235 = vpop.permute.xlu0 %234
    %238 = vset.pattern.permute.xlu0 0
    %239 = vperm.xlu0 %238, %v165
    %v240 = vpop.permute.xlu0 %239
    %243 = vset.pattern.permute.xlu0 0
    %244 = vperm.xlu0 %243, %v168
    %v245 = vpop.permute.xlu0 %244
    %248 = vset.pattern.permute.xlu0 0
    %249 = vperm.xlu0 %248, %v171
    %v250 = vpop.permute.xlu0 %249
    %v252 = vmul.f32 %v53, %v175
    %v253 = vmul.f32 %v54, %v180
    %v254 = vmul.f32 %v55, %v185
    %v255 = vmul.f32 %v56, %v190
    %v256 = vmul.f32 %v57, %v195
    %v257 = vmul.f32 %v58, %v200
    %v258 = vmul.f32 %v59, %v205
    %v259 = vmul.f32 %v60, %v210
    %v260 = vmul.f32 %v61, %v215
    %v261 = vmul.f32 %v62, %v220
    %v262 = vmul.f32 %v63, %v225
    %v263 = vmul.f32 %v64, %v230
    %v264 = vmul.f32 %v65, %v235
    %v265 = vmul.f32 %v66, %v240
    %v266 = vmul.f32 %v67, %v245
    %v267 = vmul.f32 %v68, %v250
    %v268 = vadd.f32 %v252, %v253
    %v269 = vadd.f32 %v268, %v254
    %v270 = vadd.f32 %v269, %v255
    %v271 = vadd.f32 %v270, %v256
    %v272 = vadd.f32 %v271, %v257
    %v273 = vadd.f32 %v272, %v258
    %v274 = vadd.f32 %v273, %v259
    %v275 = vadd.f32 %v274, %v260
    %v276 = vadd.f32 %v275, %v261
    %v277 = vadd.f32 %v276, %v262
    %v278 = vadd.f32 %v277, %v263
    %v279 = vadd.f32 %v278, %v264
    %v280 = vadd.f32 %v279, %v265
    %v281 = vadd.f32 %v280, %v266
    %v282 = vadd.f32 %v281, %v267
    %v283 = vrot.slane %v282, 4
    %v284 = vadd.f32 %v282, %v283
    %v285 = vrot.slane %v284, 2
    %v286 = vadd.f32 %v284, %v285
    %v287 = vrot.slane %v286, 1
    %v288 = vadd.f32 %v286, %v287
    %v289 = vadd.f32 %v288, %v69
    %v290 = vmul.f32 %v289, 0.5
    %v291 = vmul.f32 %v289, 0.044715
    %v292 = vmul.f32 %v291, %v289
    %v293 = vmul.f32 %v292, %v289
    %v294 = vadd.f32 %v289, %v293
    %v295 = vmul.f32 %v294, 0.7978846
    %v296 = vtanh.pop %v295
    %v297 = vadd.f32 %v296, 1.0
    %v298 = vmul.f32 %v290, %v297
    %v299 = vperm.slane %v298, 0
    %v300 = vmul.f32 %v70, %v299
    %v301 = vmul.f32 %v71, %v299
    %v302 = vmul.f32 %v72, %v299
    %v303 = vmul.f32 %v73, %v299
    %v304 = vmul.f32 %v74, %v299
    %v305 = vmul.f32 %v75, %v299
    %v306 = vmul.f32 %v76, %v299
    %v307 = vmul.f32 %v77, %v299
    %308 = vadd.xlane.f32.xlu0 %v300
    %v309 = vpop.xlane.xlu0 %308
    %310 = vadd.xlane.f32.xlu0 %v301
    %v311 = vpop.xlane.xlu0 %310
    %312 = vadd.xlane.f32.xlu0 %v302
    %v313 = vpop.xlane.xlu0 %312
    %314 = vadd.xlane.f32.xlu0 %v303
    %v315 = vpop.xlane.xlu0 %314
    %316 = vadd.xlane.f32.xlu0 %v304
    %v317 = vpop.xlane.xlu0 %316
    %318 = vadd.xlane.f32.xlu0 %v305
    %v319 = vpop.xlane.xlu0 %318
    %320 = vadd.xlane.f32.xlu0 %v306
    %v321 = vpop.xlane.xlu0 %320
    %322 = vadd.xlane.f32.xlu0 %v307
    %v323 = vpop.xlane.xlu0 %322
    %v324 = vadd.f32 %v309, %v78
    %v325 = vadd.f32 %v311, %v79
    %v326 = vadd.f32 %v313, %v80
    %v327 = vadd.f32 %v315, %v81
    %v328 = vadd.f32 %v317, %v82
    %v329 = vadd.f32 %v319, %v83
    %v330 = vadd.f32 %v321, %v84
    %v331 = vadd.f32 %v323, %v85
    %v332 = vxor.u32 %v324, 2147483648
    %v333 = vxor.u32 %v325, 2147483648
    %v334 = vxor.u32 %v326, 2147483648
    %v335 = vxor.u32 %v327, 2147483648
    %v336 = vxor.u32 %v328, 2147483648
    %v337 = vxor.u32 %v329, 2147483648
    %v338 = vxor.u32 %v330, 2147483648
    %v339 = vxor.u32 %v331, 2147483648
    %v340 = vmul.f32 %v332, 1.442695
    %v341 = vpow.pop %v340
    %v342 = vmul.f32 %v333, 1.442695
    %v343 = vpow.pop %v342
    %v344 = vmul.f32 %v334, 1.442695
    %v345 = vpow.pop %v344
    %v346 = vmul.f32 %v335, 1.442695
    %v347 = vpow.pop %v346
    %v348 = vmul.f32 %v336, 1.442695
    %v349 = vpow.pop %v348
    %v350 = vmul.f32 %v337, 1.442695
    %v351 = vpow.pop %v350
    %v352 = vmul.f32 %v338, 1.442695
    %v353 = vpow.pop %v352
    %v354 = vmul.f32 %v339, 1.442695
    %v355 = vpow.pop %v354
    %v356 = vadd.f32 %v341, 1.0
    %v357 = vadd.f32 %v343, 1.0
    %v358 = vadd.f32 %v345, 1.0
    %v359 = vadd.f32 %v347, 1.0
    %v360 = vadd.f32 %v349, 1.0
    %v361 = vadd.f32 %v351, 1.0
    %v362 = vadd.f32 %v353, 1.0
    %v363 = vadd.f32 %v355, 1.0
    %v364 = vrcp.pop %v356
    %v365 = vmul.f32 %v356, %v364
    %v366 = vsub.f32 1.0, %v365
    %v367 = vmul.f32 %v364, %v366
    %v368 = vadd.f32 %v364, %v367
    %vm369 = vweird.f32 %v356
    %vm370 = vweird.f32 %v364
    %vm371 = vmor %vm369, %vm370
    %v372 = vsel %vm371, %v364, %v368
    %v373 = vand.u32 2147483647, %v356
    %vm374 = vcmp.eq.f32.partialorder %v373, 8.507059e+37
    %v375 = vand.u32 %v356, 2147483648
    %v376 = vor.u32 1.1754944e-38, %v375
    %v377 = vsel %vm374, %v376, %v372
    %v378 = vmul.f32 1.0, %v377
    %v379 = vrcp.pop %v357
    %v380 = vmul.f32 %v357, %v379
    %v381 = vsub.f32 1.0, %v380
    %v382 = vmul.f32 %v379, %v381
    %v383 = vadd.f32 %v379, %v382
    %vm384 = vweird.f32 %v357
    %vm385 = vweird.f32 %v379
    %vm386 = vmor %vm384, %vm385
    %v387 = vsel %vm386, %v379, %v383
    %v388 = vand.u32 2147483647, %v357
    %vm389 = vcmp.eq.f32.partialorder %v388, 8.507059e+37
    %v390 = vand.u32 %v357, 2147483648
    %v391 = vor.u32 1.1754944e-38, %v390
    %v392 = vsel %vm389, %v391, %v387
    %v393 = vmul.f32 1.0, %v392
    %v394 = vrcp.pop %v358
    %v395 = vmul.f32 %v358, %v394
    %v396 = vsub.f32 1.0, %v395
    %v397 = vmul.f32 %v394, %v396
    %v398 = vadd.f32 %v394, %v397
    %vm399 = vweird.f32 %v358
    %vm400 = vweird.f32 %v394
    %vm401 = vmor %vm399, %vm400
    %v402 = vsel %vm401, %v394, %v398
    %v403 = vand.u32 2147483647, %v358
    %vm404 = vcmp.eq.f32.partialorder %v403, 8.507059e+37
    %v405 = vand.u32 %v358, 2147483648
    %v406 = vor.u32 1.1754944e-38, %v405
    %v407 = vsel %vm404, %v406, %v402
    %v408 = vmul.f32 1.0, %v407
    %v409 = vrcp.pop %v359
    %v410 = vmul.f32 %v359, %v409
    %v411 = vsub.f32 1.0, %v410
    %v412 = vmul.f32 %v409, %v411
    %v413 = vadd.f32 %v409, %v412
    %vm414 = vweird.f32 %v359
    %vm415 = vweird.f32 %v409
    %vm416 = vmor %vm414, %vm415
    %v417 = vsel %vm416, %v409, %v413
    %v418 = vand.u32 2147483647, %v359
    %vm419 = vcmp.eq.f32.partialorder %v418, 8.507059e+37
    %v420 = vand.u32 %v359, 2147483648
    %v421 = vor.u32 1.1754944e-38, %v420
    %v422 = vsel %vm419, %v421, %v417
    %v423 = vmul.f32 1.0, %v422
    %v424 = vrcp.pop %v360
    %v425 = vmul.f32 %v360, %v424
    %v426 = vsub.f32 1.0, %v425
    %v427 = vmul.f32 %v424, %v426
    %v428 = vadd.f32 %v424, %v427
    %vm429 = vweird.f32 %v360
    %vm430 = vweird.f32 %v424
    %vm431 = vmor %vm429, %vm430
    %v432 = vsel %vm431, %v424, %v428
    %v433 = vand.u32 2147483647, %v360
    %vm434 = vcmp.eq.f32.partialorder %v433, 8.507059e+37
    %v435 = vand.u32 %v360, 2147483648
    %v436 = vor.u32 1.1754944e-38, %v435
    %v437 = vsel %vm434, %v436, %v432
    %v438 = vmul.f32 1.0, %v437
    %v439 = vrcp.pop %v361
    %v440 = vmul.f32 %v361, %v439
    %v441 = vsub.f32 1.0, %v440
    %v442 = vmul.f32 %v439, %v441
    %v443 = vadd.f32 %v439, %v442
    %vm444 = vweird.f32 %v361
    %vm445 = vweird.f32 %v439
    %vm446 = vmor %vm444, %vm445
    %v447 = vsel %vm446, %v439, %v443
    %v448 = vand.u32 2147483647, %v361
    %vm449 = vcmp.eq.f32.partialorder %v448, 8.507059e+37
    %v450 = vand.u32 %v361, 2147483648
    %v451 = vor.u32 1.1754944e-38, %v450
    %v452 = vsel %vm449, %v451, %v447
    %v453 = vmul.f32 1.0, %v452
    %v454 = vrcp.pop %v362
    %v455 = vmul.f32 %v362, %v454
    %v456 = vsub.f32 1.0, %v455
    %v457 = vmul.f32 %v454, %v456
    %v458 = vadd.f32 %v454, %v457
    %vm459 = vweird.f32 %v362
    %vm460 = vweird.f32 %v454
    %vm461 = vmor %vm459, %vm460
    %v462 = vsel %vm461, %v454, %v458
    %v463 = vand.u32 2147483647, %v362
    %vm464 = vcmp.eq.f32.partialorder %v463, 8.507059e+37
    %v465 = vand.u32 %v362, 2147483648
    %v466 = vor.u32 1.1754944e-38, %v465
    %v467 = vsel %vm464, %v466, %v462
    %v468 = vmul.f32 1.0, %v467
    %v469 = vrcp.pop %v363
    %v470 = vmul.f32 %v363, %v469
    %v471 = vsub.f32 1.0, %v470
    %v472 = vmul.f32 %v469, %v471
    %v473 = vadd.f32 %v469, %v472
    %vm474 = vweird.f32 %v363
    %vm475 = vweird.f32 %v469
    %vm476 = vmor %vm474, %vm475
    %v477 = vsel %vm476, %v469, %v473
    %v478 = vand.u32 2147483647, %v363
    %vm479 = vcmp.eq.f32.partialorder %v478, 8.507059e+37
    %v480 = vand.u32 %v363, 2147483648
    %v481 = vor.u32 1.1754944e-38, %v480
    %v482 = vsel %vm479, %v481, %v477
    %v483 = vmul.f32 1.0, %v482
    %vm484 = vcmask 261120
    %v486 = vsel %vm484, %v90, 0
    %v489 = vsel %vm484, %v91, 0
    %v492 = vsel %vm484, %v92, 0
    %v495 = vsel %vm484, %v93, 0
    %497 = vmatpush.msra.mxu0 0.0
    %498 = vmatpush.msra.mxu0 0.0
    %499 = vmatpush.msra.mxu0 0.0
    %500 = vmatpush.msra.mxu0 0.0
    %501 = vmatpush.msra.mxu0 0.0
    %502 = vmatpush.msra.mxu0 0.0
    %503 = vmatpush.msra.mxu0 0.0
    %504 = vmatpush.msra.mxu0 0.0
    %505 = vmatpush.msra.mxu0 0.0
    %506 = vmatpush.msra.mxu0 0.0
    %507 = vmatpush.msra.mxu0 0.0
    %508 = vmatpush.msra.mxu0 0.0
    %v509 = vand.u32 %v114, 4294901760
    %510 = vmatpush.msra.mxu0 %v509
    %v511 = vand.u32 %v112, 4294901760
    %512 = vmatpush.msra.mxu0 %v511
    %v513 = vand.u32 %v110, 4294901760
    %514 = vmatpush.msra.mxu0 %v513
    %v515 = vand.u32 %v108, 4294901760
    %516 = vmatpush.msra.mxu0 %v515
    %v517 = vand.u32 %v486, 4294901760
    %v518 = vsub.f32 %v486, %v517
    %v519 = vand.u32 %v518, 4294901760
    %v520 = vsub.f32 %v518, %v519
    %v521 = vand.u32 %v520, 4294901760
    %522 = vmatmul.f32.gmra.mxu0 %v521
    %v523 = vpop.f32.mrf.mxu0
    %v524 = vadd.f32 0.0, %v523
    %v525 = vand.u32 %v489, 4294901760
    %v526 = vsub.f32 %v489, %v525
    %v527 = vand.u32 %v526, 4294901760
    %v528 = vsub.f32 %v526, %v527
    %v529 = vand.u32 %v528, 4294901760
    %530 = vmatmul.f32.gmra.mxu0 %v529
    %v531 = vpop.f32.mrf.mxu0
    %v532 = vadd.f32 0.0, %v531
    %v533 = vand.u32 %v492, 4294901760
    %v534 = vsub.f32 %v492, %v533
    %v535 = vand.u32 %v534, 4294901760
    %v536 = vsub.f32 %v534, %v535
    %v537 = vand.u32 %v536, 4294901760
    %538 = vmatmul.f32.gmra.mxu0 %v537
    %v539 = vpop.f32.mrf.mxu0
    %v540 = vadd.f32 0.0, %v539
    %v541 = vand.u32 %v495, 4294901760
    %v542 = vsub.f32 %v495, %v541
    %v543 = vand.u32 %v542, 4294901760
    %v544 = vsub.f32 %v542, %v543
    %v545 = vand.u32 %v544, 4294901760
    %546 = vmatmul.f32.gmra.mxu0 %v545
    %v547 = vpop.f32.mrf.mxu0
    %v548 = vadd.f32 0.0, %v547
    %549 = vdwg.mxu0
    %550 = vmatpush.msra.mxu0 0.0
    %551 = vmatpush.msra.mxu0 0.0
    %552 = vmatpush.msra.mxu0 0.0
    %553 = vmatpush.msra.mxu0 0.0
    %554 = vmatpush.msra.mxu0 0.0
    %555 = vmatpush.msra.mxu0 0.0
    %556 = vmatpush.msra.mxu0 0.0
    %557 = vmatpush.msra.mxu0 0.0
    %558 = vmatpush.msra.mxu0 0.0
    %559 = vmatpush.msra.mxu0 0.0
    %560 = vmatpush.msra.mxu0 0.0
    %561 = vmatpush.msra.mxu0 0.0
    %v562 = vand.u32 %v114, 4294901760
    %v563 = vsub.f32 %v114, %v562
    %v564 = vand.u32 %v563, 4294901760
    %v565 = vsub.f32 %v563, %v564
    %v566 = vand.u32 %v565, 4294901760
    %567 = vmatpush.msra.mxu0 %v566
    %v568 = vand.u32 %v112, 4294901760
    %v569 = vsub.f32 %v112, %v568
    %v570 = vand.u32 %v569, 4294901760
    %v571 = vsub.f32 %v569, %v570
    %v572 = vand.u32 %v571, 4294901760
    %573 = vmatpush.msra.mxu0 %v572
    %v574 = vand.u32 %v110, 4294901760
    %v575 = vsub.f32 %v110, %v574
    %v576 = vand.u32 %v575, 4294901760
    %v577 = vsub.f32 %v575, %v576
    %v578 = vand.u32 %v577, 4294901760
    %579 = vmatpush.msra.mxu0 %v578
    %v580 = vand.u32 %v108, 4294901760
    %v581 = vsub.f32 %v108, %v580
    %v582 = vand.u32 %v581, 4294901760
    %v583 = vsub.f32 %v581, %v582
    %v584 = vand.u32 %v583, 4294901760
    %585 = vmatpush.msra.mxu0 %v584
    %v586 = vand.u32 %v486, 4294901760
    %587 = vmatmul.f32.gmra.mxu0 %v586
    %v588 = vpop.f32.mrf.mxu0
    %v589 = vadd.f32 %v524, %v588
    %v590 = vand.u32 %v489, 4294901760
    %591 = vmatmul.f32.gmra.mxu0 %v590
    %v592 = vpop.f32.mrf.mxu0
    %v593 = vadd.f32 %v532, %v592
    %v594 = vand.u32 %v492, 4294901760
    %595 = vmatmul.f32.gmra.mxu0 %v594
    %v596 = vpop.f32.mrf.mxu0
    %v597 = vadd.f32 %v540, %v596
    %v598 = vand.u32 %v495, 4294901760
    %599 = vmatmul.f32.gmra.mxu0 %v598
    %v600 = vpop.f32.mrf.mxu0
    %v601 = vadd.f32 %v548, %v600
    %602 = vdwg.mxu0
    %603 = vmatpush.msra.mxu0 0.0
    %604 = vmatpush.msra.mxu0 0.0
    %605 = vmatpush.msra.mxu0 0.0
    %606 = vmatpush.msra.mxu0 0.0
    %607 = vmatpush.msra.mxu0 0.0
    %608 = vmatpush.msra.mxu0 0.0
    %609 = vmatpush.msra.mxu0 0.0
    %610 = vmatpush.msra.mxu0 0.0
    %611 = vmatpush.msra.mxu0 0.0
    %612 = vmatpush.msra.mxu0 0.0
    %613 = vmatpush.msra.mxu0 0.0
    %614 = vmatpush.msra.mxu0 0.0
    %v615 = vand.u32 %v114, 4294901760
    %v616 = vsub.f32 %v114, %v615
    %617 = vmatpush.msra.mxu0 %v616
    %v618 = vand.u32 %v112, 4294901760
    %v619 = vsub.f32 %v112, %v618
    %620 = vmatpush.msra.mxu0 %v619
    %v621 = vand.u32 %v110, 4294901760
    %v622 = vsub.f32 %v110, %v621
    %623 = vmatpush.msra.mxu0 %v622
    %v624 = vand.u32 %v108, 4294901760
    %v625 = vsub.f32 %v108, %v624
    %626 = vmatpush.msra.mxu0 %v625
    %v627 = vand.u32 %v486, 4294901760
    %v628 = vsub.f32 %v486, %v627
    %629 = vmatmul.f32.gmra.mxu0 %v628
    %v630 = vpop.f32.mrf.mxu0
    %v631 = vadd.f32 %v589, %v630
    %v632 = vand.u32 %v489, 4294901760
    %v633 = vsub.f32 %v489, %v632
    %634 = vmatmul.f32.gmra.mxu0 %v633
    %v635 = vpop.f32.mrf.mxu0
    %v636 = vadd.f32 %v593, %v635
    %v637 = vand.u32 %v492, 4294901760
    %v638 = vsub.f32 %v492, %v637
    %639 = vmatmul.f32.gmra.mxu0 %v638
    %v640 = vpop.f32.mrf.mxu0
    %v641 = vadd.f32 %v597, %v640
    %v642 = vand.u32 %v495, 4294901760
    %v643 = vsub.f32 %v495, %v642
    %644 = vmatmul.f32.gmra.mxu0 %v643
    %v645 = vpop.f32.mrf.mxu0
    %v646 = vadd.f32 %v601, %v645
    %647 = vdwg.mxu0
    %648 = vmatpush.msra.mxu0 0.0
    %649 = vmatpush.msra.mxu0 0.0
    %650 = vmatpush.msra.mxu0 0.0
    %651 = vmatpush.msra.mxu0 0.0
    %652 = vmatpush.msra.mxu0 0.0
    %653 = vmatpush.msra.mxu0 0.0
    %654 = vmatpush.msra.mxu0 0.0
    %655 = vmatpush.msra.mxu0 0.0
    %656 = vmatpush.msra.mxu0 0.0
    %657 = vmatpush.msra.mxu0 0.0
    %658 = vmatpush.msra.mxu0 0.0
    %659 = vmatpush.msra.mxu0 0.0
    %v660 = vand.u32 %v114, 4294901760
    %661 = vmatpush.msra.mxu0 %v660
    %v662 = vand.u32 %v112, 4294901760
    %663 = vmatpush.msra.mxu0 %v662
    %v664 = vand.u32 %v110, 4294901760
    %665 = vmatpush.msra.mxu0 %v664
    %v666 = vand.u32 %v108, 4294901760
    %667 = vmatpush.msra.mxu0 %v666
    %v668 = vand.u32 %v486, 4294901760
    %v669 = vsub.f32 %v486, %v668
    %v670 = vand.u32 %v669, 4294901760
    %671 = vmatmul.f32.gmra.mxu0 %v670
    %v672 = vpop.f32.mrf.mxu0
    %v673 = vadd.f32 %v631, %v672
    %v674 = vand.u32 %v489, 4294901760
    %v675 = vsub.f32 %v489, %v674
    %v676 = vand.u32 %v675, 4294901760
    %677 = vmatmul.f32.gmra.mxu0 %v676
    %v678 = vpop.f32.mrf.mxu0
    %v679 = vadd.f32 %v636, %v678
    %v680 = vand.u32 %v492, 4294901760
    %v681 = vsub.f32 %v492, %v680
    %v682 = vand.u32 %v681, 4294901760
    %683 = vmatmul.f32.gmra.mxu0 %v682
    %v684 = vpop.f32.mrf.mxu0
    %v685 = vadd.f32 %v641, %v684
    %v686 = vand.u32 %v495, 4294901760
    %v687 = vsub.f32 %v495, %v686
    %v688 = vand.u32 %v687, 4294901760
    %689 = vmatmul.f32.gmra.mxu0 %v688
    %v690 = vpop.f32.mrf.mxu0
    %v691 = vadd.f32 %v646, %v690
    %692 = vdwg.mxu0
    %693 = vmatpush.msra.mxu0 0.0
    %694 = vmatpush.msra.mxu0 0.0
    %695 = vmatpush.msra.mxu0 0.0
    %696 = vmatpush.msra.mxu0 0.0
    %697 = vmatpush.msra.mxu0 0.0
    %698 = vmatpush.msra.mxu0 0.0
    %699 = vmatpush.msra.mxu0 0.0
    %700 = vmatpush.msra.mxu0 0.0
    %701 = vmatpush.msra.mxu0 0.0
    %702 = vmatpush.msra.mxu0 0.0
    %703 = vmatpush.msra.mxu0 0.0
    %704 = vmatpush.msra.mxu0 0.0
    %v705 = vand.u32 %v114, 4294901760
    %v706 = vsub.f32 %v114, %v705
    %v707 = vand.u32 %v706, 4294901760
    %708 = vmatpush.msra.mxu0 %v707
    %v709 = vand.u32 %v112, 4294901760
    %v710 = vsub.f32 %v112, %v709
    %v711 = vand.u32 %v710, 4294901760
    %712 = vmatpush.msra.mxu0 %v711
    %v713 = vand.u32 %v110, 4294901760
    %v714 = vsub.f32 %v110, %v713
    %v715 = vand.u32 %v714, 4294901760
    %716 = vmatpush.msra.mxu0 %v715
    %v717 = vand.u32 %v108, 4294901760
    %v718 = vsub.f32 %v108, %v717
    %v719 = vand.u32 %v718, 4294901760
    %720 = vmatpush.msra.mxu0 %v719
    %v721 = vand.u32 %v486, 4294901760
    %722 = vmatmul.f32.gmra.mxu0 %v721
    %v723 = vpop.f32.mrf.mxu0
    %v724 = vadd.f32 %v673, %v723
    %v725 = vand.u32 %v489, 4294901760
    %726 = vmatmul.f32.gmra.mxu0 %v725
    %v727 = vpop.f32.mrf.mxu0
    %v728 = vadd.f32 %v679, %v727
    %v729 = vand.u32 %v492, 4294901760
    %730 = vmatmul.f32.gmra.mxu0 %v729
    %v731 = vpop.f32.mrf.mxu0
    %v732 = vadd.f32 %v685, %v731
    %v733 = vand.u32 %v495, 4294901760
    %734 = vmatmul.f32.gmra.mxu0 %v733
    %v735 = vpop.f32.mrf.mxu0
    %v736 = vadd.f32 %v691, %v735
    %737 = vdwg.mxu0
    %738 = vmatpush.msra.mxu0 0.0
    %739 = vmatpush.msra.mxu0 0.0
    %740 = vmatpush.msra.mxu0 0.0
    %741 = vmatpush.msra.mxu0 0.0
    %742 = vmatpush.msra.mxu0 0.0
    %743 = vmatpush.msra.mxu0 0.0
    %744 = vmatpush.msra.mxu0 0.0
    %745 = vmatpush.msra.mxu0 0.0
    %746 = vmatpush.msra.mxu0 0.0
    %747 = vmatpush.msra.mxu0 0.0
    %748 = vmatpush.msra.mxu0 0.0
    %749 = vmatpush.msra.mxu0 0.0
    %v750 = vand.u32 %v114, 4294901760
    %751 = vmatpush.msra.mxu0 %v750
    %v752 = vand.u32 %v112, 4294901760
    %753 = vmatpush.msra.mxu0 %v752
    %v754 = vand.u32 %v110, 4294901760
    %755 = vmatpush.msra.mxu0 %v754
    %v756 = vand.u32 %v108, 4294901760
    %757 = vmatpush.msra.mxu0 %v756
    %v758 = vand.u32 %v486, 4294901760
    %759 = vmatmul.f32.gmra.mxu0 %v758
    %v760 = vpop.f32.mrf.mxu0
    %v761 = vadd.f32 %v724, %v760
    %v762 = vand.u32 %v489, 4294901760
    %763 = vmatmul.f32.gmra.mxu0 %v762
    %v764 = vpop.f32.mrf.mxu0
    %v765 = vadd.f32 %v728, %v764
    %v766 = vand.u32 %v492, 4294901760
    %767 = vmatmul.f32.gmra.mxu0 %v766
    %v768 = vpop.f32.mrf.mxu0
    %v769 = vadd.f32 %v732, %v768
    %v770 = vand.u32 %v495, 4294901760
    %771 = vmatmul.f32.gmra.mxu0 %v770
    %v772 = vpop.f32.mrf.mxu0
    %v773 = vadd.f32 %v736, %v772
    %774 = vdwg.mxu0
    %775 = vmatpush.msra.mxu0 0.0
    %776 = vmatpush.msra.mxu0 0.0
    %777 = vmatpush.msra.mxu0 0.0
    %778 = vmatpush.msra.mxu0 0.0
    %779 = vmatpush.msra.mxu0 0.0
    %780 = vmatpush.msra.mxu0 0.0
    %781 = vmatpush.msra.mxu0 0.0
    %782 = vmatpush.msra.mxu0 0.0
    %783 = vmatpush.msra.mxu0 0.0
    %784 = vmatpush.msra.mxu0 0.0
    %785 = vmatpush.msra.mxu0 0.0
    %786 = vmatpush.msra.mxu0 0.0
    %v787 = vand.u32 %v115, 4294901760
    %788 = vmatpush.msra.mxu0 %v787
    %v789 = vand.u32 %v113, 4294901760
    %790 = vmatpush.msra.mxu0 %v789
    %v791 = vand.u32 %v111, 4294901760
    %792 = vmatpush.msra.mxu0 %v791
    %v793 = vand.u32 %v109, 4294901760
    %794 = vmatpush.msra.mxu0 %v793
    %v795 = vand.u32 %v486, 4294901760
    %v796 = vsub.f32 %v486, %v795
    %v797 = vand.u32 %v796, 4294901760
    %v798 = vsub.f32 %v796, %v797
    %v799 = vand.u32 %v798, 4294901760
    %800 = vmatmul.f32.gmra.mxu0 %v799
    %v801 = vpop.f32.mrf.mxu0
    %v802 = vadd.f32 0.0, %v801
    %v803 = vand.u32 %v489, 4294901760
    %v804 = vsub.f32 %v489, %v803
    %v805 = vand.u32 %v804, 4294901760
    %v806 = vsub.f32 %v804, %v805
    %v807 = vand.u32 %v806, 4294901760
    %808 = vmatmul.f32.gmra.mxu0 %v807
    %v809 = vpop.f32.mrf.mxu0
    %v810 = vadd.f32 0.0, %v809
    %v811 = vand.u32 %v492, 4294901760
    %v812 = vsub.f32 %v492, %v811
    %v813 = vand.u32 %v812, 4294901760
    %v814 = vsub.f32 %v812, %v813
    %v815 = vand.u32 %v814, 4294901760
    %816 = vmatmul.f32.gmra.mxu0 %v815
    %v817 = vpop.f32.mrf.mxu0
    %v818 = vadd.f32 0.0, %v817
    %v819 = vand.u32 %v495, 4294901760
    %v820 = vsub.f32 %v495, %v819
    %v821 = vand.u32 %v820, 4294901760
    %v822 = vsub.f32 %v820, %v821
    %v823 = vand.u32 %v822, 4294901760
    %824 = vmatmul.f32.gmra.mxu0 %v823
    %v825 = vpop.f32.mrf.mxu0
    %v826 = vadd.f32 0.0, %v825
    %827 = vdwg.mxu0
    %828 = vmatpush.msra.mxu0 0.0
    %829 = vmatpush.msra.mxu0 0.0
    %830 = vmatpush.msra.mxu0 0.0
    %831 = vmatpush.msra.mxu0 0.0
    %832 = vmatpush.msra.mxu0 0.0
    %833 = vmatpush.msra.mxu0 0.0
    %834 = vmatpush.msra.mxu0 0.0
    %835 = vmatpush.msra.mxu0 0.0
    %836 = vmatpush.msra.mxu0 0.0
    %837 = vmatpush.msra.mxu0 0.0
    %838 = vmatpush.msra.mxu0 0.0
    %839 = vmatpush.msra.mxu0 0.0
    %v840 = vand.u32 %v115, 4294901760
    %v841 = vsub.f32 %v115, %v840
    %v842 = vand.u32 %v841, 4294901760
    %v843 = vsub.f32 %v841, %v842
    %v844 = vand.u32 %v843, 4294901760
    %845 = vmatpush.msra.mxu0 %v844
    %v846 = vand.u32 %v113, 4294901760
    %v847 = vsub.f32 %v113, %v846
    %v848 = vand.u32 %v847, 4294901760
    %v849 = vsub.f32 %v847, %v848
    %v850 = vand.u32 %v849, 4294901760
    %851 = vmatpush.msra.mxu0 %v850
    %v852 = vand.u32 %v111, 4294901760
    %v853 = vsub.f32 %v111, %v852
    %v854 = vand.u32 %v853, 4294901760
    %v855 = vsub.f32 %v853, %v854
    %v856 = vand.u32 %v855, 4294901760
    %857 = vmatpush.msra.mxu0 %v856
    %v858 = vand.u32 %v109, 4294901760
    %v859 = vsub.f32 %v109, %v858
    %v860 = vand.u32 %v859, 4294901760
    %v861 = vsub.f32 %v859, %v860
    %v862 = vand.u32 %v861, 4294901760
    %863 = vmatpush.msra.mxu0 %v862
    %v864 = vand.u32 %v486, 4294901760
    %865 = vmatmul.f32.gmra.mxu0 %v864
    %v866 = vpop.f32.mrf.mxu0
    %v867 = vadd.f32 %v802, %v866
    %v868 = vand.u32 %v489, 4294901760
    %869 = vmatmul.f32.gmra.mxu0 %v868
    %v870 = vpop.f32.mrf.mxu0
    %v871 = vadd.f32 %v810, %v870
    %v872 = vand.u32 %v492, 4294901760
    %873 = vmatmul.f32.gmra.mxu0 %v872
    %v874 = vpop.f32.mrf.mxu0
    %v875 = vadd.f32 %v818, %v874
    %v876 = vand.u32 %v495, 4294901760
    %877 = vmatmul.f32.gmra.mxu0 %v876
    %v878 = vpop.f32.mrf.mxu0
    %v879 = vadd.f32 %v826, %v878
    %880 = vdwg.mxu0
    %881 = vmatpush.msra.mxu0 0.0
    %882 = vmatpush.msra.mxu0 0.0
    %883 = vmatpush.msra.mxu0 0.0
    %884 = vmatpush.msra.mxu0 0.0
    %885 = vmatpush.msra.mxu0 0.0
    %886 = vmatpush.msra.mxu0 0.0
    %887 = vmatpush.msra.mxu0 0.0
    %888 = vmatpush.msra.mxu0 0.0
    %889 = vmatpush.msra.mxu0 0.0
    %890 = vmatpush.msra.mxu0 0.0
    %891 = vmatpush.msra.mxu0 0.0
    %892 = vmatpush.msra.mxu0 0.0
    %v893 = vand.u32 %v115, 4294901760
    %v894 = vsub.f32 %v115, %v893
    %895 = vmatpush.msra.mxu0 %v894
    %v896 = vand.u32 %v113, 4294901760
    %v897 = vsub.f32 %v113, %v896
    %898 = vmatpush.msra.mxu0 %v897
    %v899 = vand.u32 %v111, 4294901760
    %v900 = vsub.f32 %v111, %v899
    %901 = vmatpush.msra.mxu0 %v900
    %v902 = vand.u32 %v109, 4294901760
    %v903 = vsub.f32 %v109, %v902
    %904 = vmatpush.msra.mxu0 %v903
    %v905 = vand.u32 %v486, 4294901760
    %v906 = vsub.f32 %v486, %v905
    %907 = vmatmul.f32.gmra.mxu0 %v906
    %v908 = vpop.f32.mrf.mxu0
    %v909 = vadd.f32 %v867, %v908
    %v910 = vand.u32 %v489, 4294901760
    %v911 = vsub.f32 %v489, %v910
    %912 = vmatmul.f32.gmra.mxu0 %v911
    %v913 = vpop.f32.mrf.mxu0
    %v914 = vadd.f32 %v871, %v913
    %v915 = vand.u32 %v492, 4294901760
    %v916 = vsub.f32 %v492, %v915
    %917 = vmatmul.f32.gmra.mxu0 %v916
    %v918 = vpop.f32.mrf.mxu0
    %v919 = vadd.f32 %v875, %v918
    %v920 = vand.u32 %v495, 4294901760
    %v921 = vsub.f32 %v495, %v920
    %922 = vmatmul.f32.gmra.mxu0 %v921
    %v923 = vpop.f32.mrf.mxu0
    %v924 = vadd.f32 %v879, %v923
    %925 = vdwg.mxu0
    %926 = vmatpush.msra.mxu0 0.0
    %927 = vmatpush.msra.mxu0 0.0
    %928 = vmatpush.msra.mxu0 0.0
    %929 = vmatpush.msra.mxu0 0.0
    %930 = vmatpush.msra.mxu0 0.0
    %931 = vmatpush.msra.mxu0 0.0
    %932 = vmatpush.msra.mxu0 0.0
    %933 = vmatpush.msra.mxu0 0.0
    %934 = vmatpush.msra.mxu0 0.0
    %935 = vmatpush.msra.mxu0 0.0
    %936 = vmatpush.msra.mxu0 0.0
    %937 = vmatpush.msra.mxu0 0.0
    %v938 = vand.u32 %v115, 4294901760
    %939 = vmatpush.msra.mxu0 %v938
    %v940 = vand.u32 %v113, 4294901760
    %941 = vmatpush.msra.mxu0 %v940
    %v942 = vand.u32 %v111, 4294901760
    %943 = vmatpush.msra.mxu0 %v942
    %v944 = vand.u32 %v109, 4294901760
    %945 = vmatpush.msra.mxu0 %v944
    %v946 = vand.u32 %v486, 4294901760
    %v947 = vsub.f32 %v486, %v946
    %v948 = vand.u32 %v947, 4294901760
    %949 = vmatmul.f32.gmra.mxu0 %v948
    %v950 = vpop.f32.mrf.mxu0
    %v951 = vadd.f32 %v909, %v950
    %v952 = vand.u32 %v489, 4294901760
    %v953 = vsub.f32 %v489, %v952
    %v954 = vand.u32 %v953, 4294901760
    %955 = vmatmul.f32.gmra.mxu0 %v954
    %v956 = vpop.f32.mrf.mxu0
    %v957 = vadd.f32 %v914, %v956
    %v958 = vand.u32 %v492, 4294901760
    %v959 = vsub.f32 %v492, %v958
    %v960 = vand.u32 %v959, 4294901760
    %961 = vmatmul.f32.gmra.mxu0 %v960
    %v962 = vpop.f32.mrf.mxu0
    %v963 = vadd.f32 %v919, %v962
    %v964 = vand.u32 %v495, 4294901760
    %v965 = vsub.f32 %v495, %v964
    %v966 = vand.u32 %v965, 4294901760
    %967 = vmatmul.f32.gmra.mxu0 %v966
    %v968 = vpop.f32.mrf.mxu0
    %v969 = vadd.f32 %v924, %v968
    %970 = vdwg.mxu0
    %971 = vmatpush.msra.mxu0 0.0
    %972 = vmatpush.msra.mxu0 0.0
    %973 = vmatpush.msra.mxu0 0.0
    %974 = vmatpush.msra.mxu0 0.0
    %975 = vmatpush.msra.mxu0 0.0
    %976 = vmatpush.msra.mxu0 0.0
    %977 = vmatpush.msra.mxu0 0.0
    %978 = vmatpush.msra.mxu0 0.0
    %979 = vmatpush.msra.mxu0 0.0
    %980 = vmatpush.msra.mxu0 0.0
    %981 = vmatpush.msra.mxu0 0.0
    %982 = vmatpush.msra.mxu0 0.0
    %v983 = vand.u32 %v115, 4294901760
    %v984 = vsub.f32 %v115, %v983
    %v985 = vand.u32 %v984, 4294901760
    %986 = vmatpush.msra.mxu0 %v985
    %v987 = vand.u32 %v113, 4294901760
    %v988 = vsub.f32 %v113, %v987
    %v989 = vand.u32 %v988, 4294901760
    %990 = vmatpush.msra.mxu0 %v989
    %v991 = vand.u32 %v111, 4294901760
    %v992 = vsub.f32 %v111, %v991
    %v993 = vand.u32 %v992, 4294901760
    %994 = vmatpush.msra.mxu0 %v993
    %v995 = vand.u32 %v109, 4294901760
    %v996 = vsub.f32 %v109, %v995
    %v997 = vand.u32 %v996, 4294901760
    %998 = vmatpush.msra.mxu0 %v997
    %v999 = vand.u32 %v486, 4294901760
    %1000 = vmatmul.f32.gmra.mxu0 %v999
    %v1001 = vpop.f32.mrf.mxu0
    %v1002 = vadd.f32 %v951, %v1001
    %v1003 = vand.u32 %v489, 4294901760
    %1004 = vmatmul.f32.gmra.mxu0 %v1003
    %v1005 = vpop.f32.mrf.mxu0
    %v1006 = vadd.f32 %v957, %v1005
    %v1007 = vand.u32 %v492, 4294901760
    %1008 = vmatmul.f32.gmra.mxu0 %v1007
    %v1009 = vpop.f32.mrf.mxu0
    %v1010 = vadd.f32 %v963, %v1009
    %v1011 = vand.u32 %v495, 4294901760
    %1012 = vmatmul.f32.gmra.mxu0 %v1011
    %v1013 = vpop.f32.mrf.mxu0
    %v1014 = vadd.f32 %v969, %v1013
    %1015 = vdwg.mxu0
    %1016 = vmatpush.msra.mxu0 0.0
    %1017 = vmatpush.msra.mxu0 0.0
    %1018 = vmatpush.msra.mxu0 0.0
    %1019 = vmatpush.msra.mxu0 0.0
    %1020 = vmatpush.msra.mxu0 0.0
    %1021 = vmatpush.msra.mxu0 0.0
    %1022 = vmatpush.msra.mxu0 0.0
    %1023 = vmatpush.msra.mxu0 0.0
    %1024 = vmatpush.msra.mxu0 0.0
    %1025 = vmatpush.msra.mxu0 0.0
    %1026 = vmatpush.msra.mxu0 0.0
    %1027 = vmatpush.msra.mxu0 0.0
    %v1028 = vand.u32 %v115, 4294901760
    %1029 = vmatpush.msra.mxu0 %v1028
    %v1030 = vand.u32 %v113, 4294901760
    %1031 = vmatpush.msra.mxu0 %v1030
    %v1032 = vand.u32 %v111, 4294901760
    %1033 = vmatpush.msra.mxu0 %v1032
    %v1034 = vand.u32 %v109, 4294901760
    %1035 = vmatpush.msra.mxu0 %v1034
    %v1036 = vand.u32 %v486, 4294901760
    %1037 = vmatmul.f32.gmra.mxu0 %v1036
    %v1038 = vpop.f32.mrf.mxu0
    %v1039 = vadd.f32 %v1002, %v1038
    %v1040 = vand.u32 %v489, 4294901760
    %1041 = vmatmul.f32.gmra.mxu0 %v1040
    %v1042 = vpop.f32.mrf.mxu0
    %v1043 = vadd.f32 %v1006, %v1042
    %v1044 = vand.u32 %v492, 4294901760
    %1045 = vmatmul.f32.gmra.mxu0 %v1044
    %v1046 = vpop.f32.mrf.mxu0
    %v1047 = vadd.f32 %v1010, %v1046
    %v1048 = vand.u32 %v495, 4294901760
    %1049 = vmatmul.f32.gmra.mxu0 %v1048
    %v1050 = vpop.f32.mrf.mxu0
    %v1051 = vadd.f32 %v1014, %v1050
    %1052 = vdwg.mxu0
    %v1054 = vsel %vm484, %v86, 0
    %v1057 = vsel %vm484, %v87, 0
    %v1060 = vsel %vm484, %v88, 0
    %v1063 = vsel %vm484, %v89, 0
    %1065 = vmatpush.msra.mxu0 0.0
    %1066 = vmatpush.msra.mxu0 0.0
    %1067 = vmatpush.msra.mxu0 0.0
    %1068 = vmatpush.msra.mxu0 0.0
    %1069 = vmatpush.msra.mxu0 0.0
    %1070 = vmatpush.msra.mxu0 0.0
    %1071 = vmatpush.msra.mxu0 0.0
    %1072 = vmatpush.msra.mxu0 0.0
    %1073 = vmatpush.msra.mxu0 0.0
    %1074 = vmatpush.msra.mxu0 0.0
    %1075 = vmatpush.msra.mxu0 0.0
    %1076 = vmatpush.msra.mxu0 0.0
    %v1077 = vand.u32 %v106, 4294901760
    %1078 = vmatpush.msra.mxu0 %v1077
    %v1079 = vand.u32 %v104, 4294901760
    %1080 = vmatpush.msra.mxu0 %v1079
    %v1081 = vand.u32 %v102, 4294901760
    %1082 = vmatpush.msra.mxu0 %v1081
    %v1083 = vand.u32 %v100, 4294901760
    %1084 = vmatpush.msra.mxu0 %v1083
    %v1085 = vand.u32 %v1054, 4294901760
    %v1086 = vsub.f32 %v1054, %v1085
    %v1087 = vand.u32 %v1086, 4294901760
    %v1088 = vsub.f32 %v1086, %v1087
    %v1089 = vand.u32 %v1088, 4294901760
    %1090 = vmatmul.f32.gmra.mxu0 %v1089
    %v1091 = vpop.f32.mrf.mxu0
    %v1092 = vadd.f32 %v761, %v1091
    %v1093 = vand.u32 %v1057, 4294901760
    %v1094 = vsub.f32 %v1057, %v1093
    %v1095 = vand.u32 %v1094, 4294901760
    %v1096 = vsub.f32 %v1094, %v1095
    %v1097 = vand.u32 %v1096, 4294901760
    %1098 = vmatmul.f32.gmra.mxu0 %v1097
    %v1099 = vpop.f32.mrf.mxu0
    %v1100 = vadd.f32 %v765, %v1099
    %v1101 = vand.u32 %v1060, 4294901760
    %v1102 = vsub.f32 %v1060, %v1101
    %v1103 = vand.u32 %v1102, 4294901760
    %v1104 = vsub.f32 %v1102, %v1103
    %v1105 = vand.u32 %v1104, 4294901760
    %1106 = vmatmul.f32.gmra.mxu0 %v1105
    %v1107 = vpop.f32.mrf.mxu0
    %v1108 = vadd.f32 %v769, %v1107
    %v1109 = vand.u32 %v1063, 4294901760
    %v1110 = vsub.f32 %v1063, %v1109
    %v1111 = vand.u32 %v1110, 4294901760
    %v1112 = vsub.f32 %v1110, %v1111
    %v1113 = vand.u32 %v1112, 4294901760
    %1114 = vmatmul.f32.gmra.mxu0 %v1113
    %v1115 = vpop.f32.mrf.mxu0
    %v1116 = vadd.f32 %v773, %v1115
    %1117 = vdwg.mxu0
    %1118 = vmatpush.msra.mxu0 0.0
    %1119 = vmatpush.msra.mxu0 0.0
    %1120 = vmatpush.msra.mxu0 0.0
    %1121 = vmatpush.msra.mxu0 0.0
    %1122 = vmatpush.msra.mxu0 0.0
    %1123 = vmatpush.msra.mxu0 0.0
    %1124 = vmatpush.msra.mxu0 0.0
    %1125 = vmatpush.msra.mxu0 0.0
    %1126 = vmatpush.msra.mxu0 0.0
    %1127 = vmatpush.msra.mxu0 0.0
    %1128 = vmatpush.msra.mxu0 0.0
    %1129 = vmatpush.msra.mxu0 0.0
    %v1130 = vand.u32 %v106, 4294901760
    %v1131 = vsub.f32 %v106, %v1130
    %v1132 = vand.u32 %v1131, 4294901760
    %v1133 = vsub.f32 %v1131, %v1132
    %v1134 = vand.u32 %v1133, 4294901760
    %1135 = vmatpush.msra.mxu0 %v1134
    %v1136 = vand.u32 %v104, 4294901760
    %v1137 = vsub.f32 %v104, %v1136
    %v1138 = vand.u32 %v1137, 4294901760
    %v1139 = vsub.f32 %v1137, %v1138
    %v1140 = vand.u32 %v1139, 4294901760
    %1141 = vmatpush.msra.mxu0 %v1140
    %v1142 = vand.u32 %v102, 4294901760
    %v1143 = vsub.f32 %v102, %v1142
    %v1144 = vand.u32 %v1143, 4294901760
    %v1145 = vsub.f32 %v1143, %v1144
    %v1146 = vand.u32 %v1145, 4294901760
    %1147 = vmatpush.msra.mxu0 %v1146
    %v1148 = vand.u32 %v100, 4294901760
    %v1149 = vsub.f32 %v100, %v1148
    %v1150 = vand.u32 %v1149, 4294901760
    %v1151 = vsub.f32 %v1149, %v1150
    %v1152 = vand.u32 %v1151, 4294901760
    %1153 = vmatpush.msra.mxu0 %v1152
    %v1154 = vand.u32 %v1054, 4294901760
    %1155 = vmatmul.f32.gmra.mxu0 %v1154
    %v1156 = vpop.f32.mrf.mxu0
    %v1157 = vadd.f32 %v1092, %v1156
    %v1158 = vand.u32 %v1057, 4294901760
    %1159 = vmatmul.f32.gmra.mxu0 %v1158
    %v1160 = vpop.f32.mrf.mxu0
    %v1161 = vadd.f32 %v1100, %v1160
    %v1162 = vand.u32 %v1060, 4294901760
    %1163 = vmatmul.f32.gmra.mxu0 %v1162
    %v1164 = vpop.f32.mrf.mxu0
    %v1165 = vadd.f32 %v1108, %v1164
    %v1166 = vand.u32 %v1063, 4294901760
    %1167 = vmatmul.f32.gmra.mxu0 %v1166
    %v1168 = vpop.f32.mrf.mxu0
    %v1169 = vadd.f32 %v1116, %v1168
    %1170 = vdwg.mxu0
    %1171 = vmatpush.msra.mxu0 0.0
    %1172 = vmatpush.msra.mxu0 0.0
    %1173 = vmatpush.msra.mxu0 0.0
    %1174 = vmatpush.msra.mxu0 0.0
    %1175 = vmatpush.msra.mxu0 0.0
    %1176 = vmatpush.msra.mxu0 0.0
    %1177 = vmatpush.msra.mxu0 0.0
    %1178 = vmatpush.msra.mxu0 0.0
    %1179 = vmatpush.msra.mxu0 0.0
    %1180 = vmatpush.msra.mxu0 0.0
    %1181 = vmatpush.msra.mxu0 0.0
    %1182 = vmatpush.msra.mxu0 0.0
    %v1183 = vand.u32 %v106, 4294901760
    %v1184 = vsub.f32 %v106, %v1183
    %1185 = vmatpush.msra.mxu0 %v1184
    %v1186 = vand.u32 %v104, 4294901760
    %v1187 = vsub.f32 %v104, %v1186
    %1188 = vmatpush.msra.mxu0 %v1187
    %v1189 = vand.u32 %v102, 4294901760
    %v1190 = vsub.f32 %v102, %v1189
    %1191 = vmatpush.msra.mxu0 %v1190
    %v1192 = vand.u32 %v100, 4294901760
    %v1193 = vsub.f32 %v100, %v1192
    %1194 = vmatpush.msra.mxu0 %v1193
    %v1195 = vand.u32 %v1054, 4294901760
    %v1196 = vsub.f32 %v1054, %v1195
    %1197 = vmatmul.f32.gmra.mxu0 %v1196
    %v1198 = vpop.f32.mrf.mxu0
    %v1199 = vadd.f32 %v1157, %v1198
    %v1200 = vand.u32 %v1057, 4294901760
    %v1201 = vsub.f32 %v1057, %v1200
    %1202 = vmatmul.f32.gmra.mxu0 %v1201
    %v1203 = vpop.f32.mrf.mxu0
    %v1204 = vadd.f32 %v1161, %v1203
    %v1205 = vand.u32 %v1060, 4294901760
    %v1206 = vsub.f32 %v1060, %v1205
    %1207 = vmatmul.f32.gmra.mxu0 %v1206
    %v1208 = vpop.f32.mrf.mxu0
    %v1209 = vadd.f32 %v1165, %v1208
    %v1210 = vand.u32 %v1063, 4294901760
    %v1211 = vsub.f32 %v1063, %v1210
    %1212 = vmatmul.f32.gmra.mxu0 %v1211
    %v1213 = vpop.f32.mrf.mxu0
    %v1214 = vadd.f32 %v1169, %v1213
    %1215 = vdwg.mxu0
    %1216 = vmatpush.msra.mxu0 0.0
    %1217 = vmatpush.msra.mxu0 0.0
    %1218 = vmatpush.msra.mxu0 0.0
    %1219 = vmatpush.msra.mxu0 0.0
    %1220 = vmatpush.msra.mxu0 0.0
    %1221 = vmatpush.msra.mxu0 0.0
    %1222 = vmatpush.msra.mxu0 0.0
    %1223 = vmatpush.msra.mxu0 0.0
    %1224 = vmatpush.msra.mxu0 0.0
    %1225 = vmatpush.msra.mxu0 0.0
    %1226 = vmatpush.msra.mxu0 0.0
    %1227 = vmatpush.msra.mxu0 0.0
    %v1228 = vand.u32 %v106, 4294901760
    %1229 = vmatpush.msra.mxu0 %v1228
    %v1230 = vand.u32 %v104, 4294901760
    %1231 = vmatpush.msra.mxu0 %v1230
    %v1232 = vand.u32 %v102, 4294901760
    %1233 = vmatpush.msra.mxu0 %v1232
    %v1234 = vand.u32 %v100, 4294901760
    %1235 = vmatpush.msra.mxu0 %v1234
    %v1236 = vand.u32 %v1054, 4294901760
    %v1237 = vsub.f32 %v1054, %v1236
    %v1238 = vand.u32 %v1237, 4294901760
    %1239 = vmatmul.f32.gmra.mxu0 %v1238
    %v1240 = vpop.f32.mrf.mxu0
    %v1241 = vadd.f32 %v1199, %v1240
    %v1242 = vand.u32 %v1057, 4294901760
    %v1243 = vsub.f32 %v1057, %v1242
    %v1244 = vand.u32 %v1243, 4294901760
    %1245 = vmatmul.f32.gmra.mxu0 %v1244
    %v1246 = vpop.f32.mrf.mxu0
    %v1247 = vadd.f32 %v1204, %v1246
    %v1248 = vand.u32 %v1060, 4294901760
    %v1249 = vsub.f32 %v1060, %v1248
    %v1250 = vand.u32 %v1249, 4294901760
    %1251 = vmatmul.f32.gmra.mxu0 %v1250
    %v1252 = vpop.f32.mrf.mxu0
    %v1253 = vadd.f32 %v1209, %v1252
    %v1254 = vand.u32 %v1063, 4294901760
    %v1255 = vsub.f32 %v1063, %v1254
    %v1256 = vand.u32 %v1255, 4294901760
    %1257 = vmatmul.f32.gmra.mxu0 %v1256
    %v1258 = vpop.f32.mrf.mxu0
    %v1259 = vadd.f32 %v1214, %v1258
    %1260 = vdwg.mxu0
    %1261 = vmatpush.msra.mxu0 0.0
    %1262 = vmatpush.msra.mxu0 0.0
    %1263 = vmatpush.msra.mxu0 0.0
    %1264 = vmatpush.msra.mxu0 0.0
    %1265 = vmatpush.msra.mxu0 0.0
    %1266 = vmatpush.msra.mxu0 0.0
    %1267 = vmatpush.msra.mxu0 0.0
    %1268 = vmatpush.msra.mxu0 0.0
    %1269 = vmatpush.msra.mxu0 0.0
    %1270 = vmatpush.msra.mxu0 0.0
    %1271 = vmatpush.msra.mxu0 0.0
    %1272 = vmatpush.msra.mxu0 0.0
    %v1273 = vand.u32 %v106, 4294901760
    %v1274 = vsub.f32 %v106, %v1273
    %v1275 = vand.u32 %v1274, 4294901760
    %1276 = vmatpush.msra.mxu0 %v1275
    %v1277 = vand.u32 %v104, 4294901760
    %v1278 = vsub.f32 %v104, %v1277
    %v1279 = vand.u32 %v1278, 4294901760
    %1280 = vmatpush.msra.mxu0 %v1279
    %v1281 = vand.u32 %v102, 4294901760
    %v1282 = vsub.f32 %v102, %v1281
    %v1283 = vand.u32 %v1282, 4294901760
    %1284 = vmatpush.msra.mxu0 %v1283
    %v1285 = vand.u32 %v100, 4294901760
    %v1286 = vsub.f32 %v100, %v1285
    %v1287 = vand.u32 %v1286, 4294901760
    %1288 = vmatpush.msra.mxu0 %v1287
    %v1289 = vand.u32 %v1054, 4294901760
    %1290 = vmatmul.f32.gmra.mxu0 %v1289
    %v1291 = vpop.f32.mrf.mxu0
    %v1292 = vadd.f32 %v1241, %v1291
    %v1293 = vand.u32 %v1057, 4294901760
    %1294 = vmatmul.f32.gmra.mxu0 %v1293
    %v1295 = vpop.f32.mrf.mxu0
    %v1296 = vadd.f32 %v1247, %v1295
    %v1297 = vand.u32 %v1060, 4294901760
    %1298 = vmatmul.f32.gmra.mxu0 %v1297
    %v1299 = vpop.f32.mrf.mxu0
    %v1300 = vadd.f32 %v1253, %v1299
    %v1301 = vand.u32 %v1063, 4294901760
    %1302 = vmatmul.f32.gmra.mxu0 %v1301
    %v1303 = vpop.f32.mrf.mxu0
    %v1304 = vadd.f32 %v1259, %v1303
    %1305 = vdwg.mxu0
    %1306 = vmatpush.msra.mxu0 0.0
    %1307 = vmatpush.msra.mxu0 0.0
    %1308 = vmatpush.msra.mxu0 0.0
    %1309 = vmatpush.msra.mxu0 0.0
    %1310 = vmatpush.msra.mxu0 0.0
    %1311 = vmatpush.msra.mxu0 0.0
    %1312 = vmatpush.msra.mxu0 0.0
    %1313 = vmatpush.msra.mxu0 0.0
    %1314 = vmatpush.msra.mxu0 0.0
    %1315 = vmatpush.msra.mxu0 0.0
    %1316 = vmatpush.msra.mxu0 0.0
    %1317 = vmatpush.msra.mxu0 0.0
    %v1318 = vand.u32 %v106, 4294901760
    %1319 = vmatpush.msra.mxu0 %v1318
    %v1320 = vand.u32 %v104, 4294901760
    %1321 = vmatpush.msra.mxu0 %v1320
    %v1322 = vand.u32 %v102, 4294901760
    %1323 = vmatpush.msra.mxu0 %v1322
    %v1324 = vand.u32 %v100, 4294901760
    %1325 = vmatpush.msra.mxu0 %v1324
    %v1326 = vand.u32 %v1054, 4294901760
    %1327 = vmatmul.f32.gmra.mxu0 %v1326
    %v1328 = vpop.f32.mrf.mxu0
    %v1329 = vadd.f32 %v1292, %v1328
    %v1330 = vand.u32 %v1057, 4294901760
    %1331 = vmatmul.f32.gmra.mxu0 %v1330
    %v1332 = vpop.f32.mrf.mxu0
    %v1333 = vadd.f32 %v1296, %v1332
    %v1334 = vand.u32 %v1060, 4294901760
    %1335 = vmatmul.f32.gmra.mxu0 %v1334
    %v1336 = vpop.f32.mrf.mxu0
    %v1337 = vadd.f32 %v1300, %v1336
    %v1338 = vand.u32 %v1063, 4294901760
    %1339 = vmatmul.f32.gmra.mxu0 %v1338
    %v1340 = vpop.f32.mrf.mxu0
    %v1341 = vadd.f32 %v1304, %v1340
    %1342 = vdwg.mxu0
    %1343 = vmatpush.msra.mxu0 0.0
    %1344 = vmatpush.msra.mxu0 0.0
    %1345 = vmatpush.msra.mxu0 0.0
    %1346 = vmatpush.msra.mxu0 0.0
    %1347 = vmatpush.msra.mxu0 0.0
    %1348 = vmatpush.msra.mxu0 0.0
    %1349 = vmatpush.msra.mxu0 0.0
    %1350 = vmatpush.msra.mxu0 0.0
    %1351 = vmatpush.msra.mxu0 0.0
    %1352 = vmatpush.msra.mxu0 0.0
    %1353 = vmatpush.msra.mxu0 0.0
    %1354 = vmatpush.msra.mxu0 0.0
    %v1355 = vand.u32 %v107, 4294901760
    %1356 = vmatpush.msra.mxu0 %v1355
    %v1357 = vand.u32 %v105, 4294901760
    %1358 = vmatpush.msra.mxu0 %v1357
    %v1359 = vand.u32 %v103, 4294901760
    %1360 = vmatpush.msra.mxu0 %v1359
    %v1361 = vand.u32 %v101, 4294901760
    %1362 = vmatpush.msra.mxu0 %v1361
    %v1363 = vand.u32 %v1054, 4294901760
    %v1364 = vsub.f32 %v1054, %v1363
    %v1365 = vand.u32 %v1364, 4294901760
    %v1366 = vsub.f32 %v1364, %v1365
    %v1367 = vand.u32 %v1366, 4294901760
    %1368 = vmatmul.f32.gmra.mxu0 %v1367
    %v1369 = vpop.f32.mrf.mxu0
    %v1370 = vadd.f32 %v1039, %v1369
    %v1371 = vand.u32 %v1057, 4294901760
    %v1372 = vsub.f32 %v1057, %v1371
    %v1373 = vand.u32 %v1372, 4294901760
    %v1374 = vsub.f32 %v1372, %v1373
    %v1375 = vand.u32 %v1374, 4294901760
    %1376 = vmatmul.f32.gmra.mxu0 %v1375
    %v1377 = vpop.f32.mrf.mxu0
    %v1378 = vadd.f32 %v1043, %v1377
    %v1379 = vand.u32 %v1060, 4294901760
    %v1380 = vsub.f32 %v1060, %v1379
    %v1381 = vand.u32 %v1380, 4294901760
    %v1382 = vsub.f32 %v1380, %v1381
    %v1383 = vand.u32 %v1382, 4294901760
    %1384 = vmatmul.f32.gmra.mxu0 %v1383
    %v1385 = vpop.f32.mrf.mxu0
    %v1386 = vadd.f32 %v1047, %v1385
    %v1387 = vand.u32 %v1063, 4294901760
    %v1388 = vsub.f32 %v1063, %v1387
    %v1389 = vand.u32 %v1388, 4294901760
    %v1390 = vsub.f32 %v1388, %v1389
    %v1391 = vand.u32 %v1390, 4294901760
    %1392 = vmatmul.f32.gmra.mxu0 %v1391
    %v1393 = vpop.f32.mrf.mxu0
    %v1394 = vadd.f32 %v1051, %v1393
    %1395 = vdwg.mxu0
    %1396 = vmatpush.msra.mxu0 0.0
    %1397 = vmatpush.msra.mxu0 0.0
    %1398 = vmatpush.msra.mxu0 0.0
    %1399 = vmatpush.msra.mxu0 0.0
    %1400 = vmatpush.msra.mxu0 0.0
    %1401 = vmatpush.msra.mxu0 0.0
    %1402 = vmatpush.msra.mxu0 0.0
    %1403 = vmatpush.msra.mxu0 0.0
    %1404 = vmatpush.msra.mxu0 0.0
    %1405 = vmatpush.msra.mxu0 0.0
    %1406 = vmatpush.msra.mxu0 0.0
    %1407 = vmatpush.msra.mxu0 0.0
    %v1408 = vand.u32 %v107, 4294901760
    %v1409 = vsub.f32 %v107, %v1408
    %v1410 = vand.u32 %v1409, 4294901760
    %v1411 = vsub.f32 %v1409, %v1410
    %v1412 = vand.u32 %v1411, 4294901760
    %1413 = vmatpush.msra.mxu0 %v1412
    %v1414 = vand.u32 %v105, 4294901760
    %v1415 = vsub.f32 %v105, %v1414
    %v1416 = vand.u32 %v1415, 4294901760
    %v1417 = vsub.f32 %v1415, %v1416
    %v1418 = vand.u32 %v1417, 4294901760
    %1419 = vmatpush.msra.mxu0 %v1418
    %v1420 = vand.u32 %v103, 4294901760
    %v1421 = vsub.f32 %v103, %v1420
    %v1422 = vand.u32 %v1421, 4294901760
    %v1423 = vsub.f32 %v1421, %v1422
    %v1424 = vand.u32 %v1423, 4294901760
    %1425 = vmatpush.msra.mxu0 %v1424
    %v1426 = vand.u32 %v101, 4294901760
    %v1427 = vsub.f32 %v101, %v1426
    %v1428 = vand.u32 %v1427, 4294901760
    %v1429 = vsub.f32 %v1427, %v1428
    %v1430 = vand.u32 %v1429, 4294901760
    %1431 = vmatpush.msra.mxu0 %v1430
    %v1432 = vand.u32 %v1054, 4294901760
    %1433 = vmatmul.f32.gmra.mxu0 %v1432
    %v1434 = vpop.f32.mrf.mxu0
    %v1435 = vadd.f32 %v1370, %v1434
    %v1436 = vand.u32 %v1057, 4294901760
    %1437 = vmatmul.f32.gmra.mxu0 %v1436
    %v1438 = vpop.f32.mrf.mxu0
    %v1439 = vadd.f32 %v1378, %v1438
    %v1440 = vand.u32 %v1060, 4294901760
    %1441 = vmatmul.f32.gmra.mxu0 %v1440
    %v1442 = vpop.f32.mrf.mxu0
    %v1443 = vadd.f32 %v1386, %v1442
    %v1444 = vand.u32 %v1063, 4294901760
    %1445 = vmatmul.f32.gmra.mxu0 %v1444
    %v1446 = vpop.f32.mrf.mxu0
    %v1447 = vadd.f32 %v1394, %v1446
    %1448 = vdwg.mxu0
    %1449 = vmatpush.msra.mxu0 0.0
    %1450 = vmatpush.msra.mxu0 0.0
    %1451 = vmatpush.msra.mxu0 0.0
    %1452 = vmatpush.msra.mxu0 0.0
    %1453 = vmatpush.msra.mxu0 0.0
    %1454 = vmatpush.msra.mxu0 0.0
    %1455 = vmatpush.msra.mxu0 0.0
    %1456 = vmatpush.msra.mxu0 0.0
    %1457 = vmatpush.msra.mxu0 0.0
    %1458 = vmatpush.msra.mxu0 0.0
    %1459 = vmatpush.msra.mxu0 0.0
    %1460 = vmatpush.msra.mxu0 0.0
    %v1461 = vand.u32 %v107, 4294901760
    %v1462 = vsub.f32 %v107, %v1461
    %1463 = vmatpush.msra.mxu0 %v1462
    %v1464 = vand.u32 %v105, 4294901760
    %v1465 = vsub.f32 %v105, %v1464
    %1466 = vmatpush.msra.mxu0 %v1465
    %v1467 = vand.u32 %v103, 4294901760
    %v1468 = vsub.f32 %v103, %v1467
    %1469 = vmatpush.msra.mxu0 %v1468
    %v1470 = vand.u32 %v101, 4294901760
    %v1471 = vsub.f32 %v101, %v1470
    %1472 = vmatpush.msra.mxu0 %v1471
    %v1473 = vand.u32 %v1054, 4294901760
    %v1474 = vsub.f32 %v1054, %v1473
    %1475 = vmatmul.f32.gmra.mxu0 %v1474
    %v1476 = vpop.f32.mrf.mxu0
    %v1477 = vadd.f32 %v1435, %v1476
    %v1478 = vand.u32 %v1057, 4294901760
    %v1479 = vsub.f32 %v1057, %v1478
    %1480 = vmatmul.f32.gmra.mxu0 %v1479
    %v1481 = vpop.f32.mrf.mxu0
    %v1482 = vadd.f32 %v1439, %v1481
    %v1483 = vand.u32 %v1060, 4294901760
    %v1484 = vsub.f32 %v1060, %v1483
    %1485 = vmatmul.f32.gmra.mxu0 %v1484
    %v1486 = vpop.f32.mrf.mxu0
    %v1487 = vadd.f32 %v1443, %v1486
    %v1488 = vand.u32 %v1063, 4294901760
    %v1489 = vsub.f32 %v1063, %v1488
    %1490 = vmatmul.f32.gmra.mxu0 %v1489
    %v1491 = vpop.f32.mrf.mxu0
    %v1492 = vadd.f32 %v1447, %v1491
    %1493 = vdwg.mxu0
    %1494 = vmatpush.msra.mxu0 0.0
    %1495 = vmatpush.msra.mxu0 0.0
    %1496 = vmatpush.msra.mxu0 0.0
    %1497 = vmatpush.msra.mxu0 0.0
    %1498 = vmatpush.msra.mxu0 0.0
    %1499 = vmatpush.msra.mxu0 0.0
    %1500 = vmatpush.msra.mxu0 0.0
    %1501 = vmatpush.msra.mxu0 0.0
    %1502 = vmatpush.msra.mxu0 0.0
    %1503 = vmatpush.msra.mxu0 0.0
    %1504 = vmatpush.msra.mxu0 0.0
    %1505 = vmatpush.msra.mxu0 0.0
    %v1506 = vand.u32 %v107, 4294901760
    %1507 = vmatpush.msra.mxu0 %v1506
    %v1508 = vand.u32 %v105, 4294901760
    %1509 = vmatpush.msra.mxu0 %v1508
    %v1510 = vand.u32 %v103, 4294901760
    %1511 = vmatpush.msra.mxu0 %v1510
    %v1512 = vand.u32 %v101, 4294901760
    %1513 = vmatpush.msra.mxu0 %v1512
    %v1514 = vand.u32 %v1054, 4294901760
    %v1515 = vsub.f32 %v1054, %v1514
    %v1516 = vand.u32 %v1515, 4294901760
    %1517 = vmatmul.f32.gmra.mxu0 %v1516
    %v1518 = vpop.f32.mrf.mxu0
    %v1519 = vadd.f32 %v1477, %v1518
    %v1520 = vand.u32 %v1057, 4294901760
    %v1521 = vsub.f32 %v1057, %v1520
    %v1522 = vand.u32 %v1521, 4294901760
    %1523 = vmatmul.f32.gmra.mxu0 %v1522
    %v1524 = vpop.f32.mrf.mxu0
    %v1525 = vadd.f32 %v1482, %v1524
    %v1526 = vand.u32 %v1060, 4294901760
    %v1527 = vsub.f32 %v1060, %v1526
    %v1528 = vand.u32 %v1527, 4294901760
    %1529 = vmatmul.f32.gmra.mxu0 %v1528
    %v1530 = vpop.f32.mrf.mxu0
    %v1531 = vadd.f32 %v1487, %v1530
    %v1532 = vand.u32 %v1063, 4294901760
    %v1533 = vsub.f32 %v1063, %v1532
    %v1534 = vand.u32 %v1533, 4294901760
    %1535 = vmatmul.f32.gmra.mxu0 %v1534
    %v1536 = vpop.f32.mrf.mxu0
    %v1537 = vadd.f32 %v1492, %v1536
    %1538 = vdwg.mxu0
    %1539 = vmatpush.msra.mxu0 0.0
    %1540 = vmatpush.msra.mxu0 0.0
    %1541 = vmatpush.msra.mxu0 0.0
    %1542 = vmatpush.msra.mxu0 0.0
    %1543 = vmatpush.msra.mxu0 0.0
    %1544 = vmatpush.msra.mxu0 0.0
    %1545 = vmatpush.msra.mxu0 0.0
    %1546 = vmatpush.msra.mxu0 0.0
    %1547 = vmatpush.msra.mxu0 0.0
    %1548 = vmatpush.msra.mxu0 0.0
    %1549 = vmatpush.msra.mxu0 0.0
    %1550 = vmatpush.msra.mxu0 0.0
    %v1551 = vand.u32 %v107, 4294901760
    %v1552 = vsub.f32 %v107, %v1551
    %v1553 = vand.u32 %v1552, 4294901760
    %1554 = vmatpush.msra.mxu0 %v1553
    %v1555 = vand.u32 %v105, 4294901760
    %v1556 = vsub.f32 %v105, %v1555
    %v1557 = vand.u32 %v1556, 4294901760
    %1558 = vmatpush.msra.mxu0 %v1557
    %v1559 = vand.u32 %v103, 4294901760
    %v1560 = vsub.f32 %v103, %v1559
    %v1561 = vand.u32 %v1560, 4294901760
    %1562 = vmatpush.msra.mxu0 %v1561
    %v1563 = vand.u32 %v101, 4294901760
    %v1564 = vsub.f32 %v101, %v1563
    %v1565 = vand.u32 %v1564, 4294901760
    %1566 = vmatpush.msra.mxu0 %v1565
    %v1567 = vand.u32 %v1054, 4294901760
    %1568 = vmatmul.f32.gmra.mxu0 %v1567
    %v1569 = vpop.f32.mrf.mxu0
    %v1570 = vadd.f32 %v1519, %v1569
    %v1571 = vand.u32 %v1057, 4294901760
    %1572 = vmatmul.f32.gmra.mxu0 %v1571
    %v1573 = vpop.f32.mrf.mxu0
    %v1574 = vadd.f32 %v1525, %v1573
    %v1575 = vand.u32 %v1060, 4294901760
    %1576 = vmatmul.f32.gmra.mxu0 %v1575
    %v1577 = vpop.f32.mrf.mxu0
    %v1578 = vadd.f32 %v1531, %v1577
    %v1579 = vand.u32 %v1063, 4294901760
    %1580 = vmatmul.f32.gmra.mxu0 %v1579
    %v1581 = vpop.f32.mrf.mxu0
    %v1582 = vadd.f32 %v1537, %v1581
    %1583 = vdwg.mxu0
    %1584 = vmatpush.msra.mxu0 0.0
    %1585 = vmatpush.msra.mxu0 0.0
    %1586 = vmatpush.msra.mxu0 0.0
    %1587 = vmatpush.msra.mxu0 0.0
    %1588 = vmatpush.msra.mxu0 0.0
    %1589 = vmatpush.msra.mxu0 0.0
    %1590 = vmatpush.msra.mxu0 0.0
    %1591 = vmatpush.msra.mxu0 0.0
    %1592 = vmatpush.msra.mxu0 0.0
    %1593 = vmatpush.msra.mxu0 0.0
    %1594 = vmatpush.msra.mxu0 0.0
    %1595 = vmatpush.msra.mxu0 0.0
    %v1596 = vand.u32 %v107, 4294901760
    %1597 = vmatpush.msra.mxu0 %v1596
    %v1598 = vand.u32 %v105, 4294901760
    %1599 = vmatpush.msra.mxu0 %v1598
    %v1600 = vand.u32 %v103, 4294901760
    %1601 = vmatpush.msra.mxu0 %v1600
    %v1602 = vand.u32 %v101, 4294901760
    %1603 = vmatpush.msra.mxu0 %v1602
    %v1604 = vand.u32 %v1054, 4294901760
    %1605 = vmatmul.f32.gmra.mxu0 %v1604
    %v1606 = vpop.f32.mrf.mxu0
    %v1607 = vadd.f32 %v1570, %v1606
    %v1608 = vand.u32 %v1057, 4294901760
    %1609 = vmatmul.f32.gmra.mxu0 %v1608
    %v1610 = vpop.f32.mrf.mxu0
    %v1611 = vadd.f32 %v1574, %v1610
    %v1612 = vand.u32 %v1060, 4294901760
    %1613 = vmatmul.f32.gmra.mxu0 %v1612
    %v1614 = vpop.f32.mrf.mxu0
    %v1615 = vadd.f32 %v1578, %v1614
    %v1616 = vand.u32 %v1063, 4294901760
    %1617 = vmatmul.f32.gmra.mxu0 %v1616
    %v1618 = vpop.f32.mrf.mxu0
    %v1619 = vadd.f32 %v1582, %v1618
    %1620 = vdwg.mxu0
    %1622 = vset.pattern.permute.xlu0 0
    %1623 = vperm.xlu0 %1622, %v95
    %v1624 = vpop.permute.xlu0 %1623
    %1627 = vset.pattern.permute.xlu0 0
    %1628 = vperm.xlu0 %1627, %v96
    %v1629 = vpop.permute.xlu0 %1628
    %1632 = vset.pattern.permute.xlu0 0
    %1633 = vperm.xlu0 %1632, %v97
    %v1634 = vpop.permute.xlu0 %1633
    %1637 = vset.pattern.permute.xlu0 0
    %1638 = vperm.xlu0 %1637, %v98
    %v1639 = vpop.permute.xlu0 %1638
    %v1641 = vadd.f32 %v1329, %v1624
    %v1642 = vadd.f32 %v1607, %v1624
    %v1643 = vadd.f32 %v1333, %v1629
    %v1644 = vadd.f32 %v1611, %v1629
    %v1645 = vadd.f32 %v1337, %v1634
    %v1646 = vadd.f32 %v1615, %v1634
    %v1647 = vadd.f32 %v1341, %v1639
    %v1648 = vadd.f32 %v1619, %v1639
    %v1649 = vmul.f32 %v1641, 0.5
    %v1650 = vmul.f32 %v1642, 0.5
    %v1651 = vmul.f32 %v1643, 0.5
    %v1652 = vmul.f32 %v1644, 0.5
    %v1653 = vmul.f32 %v1645, 0.5
    %v1654 = vmul.f32 %v1646, 0.5
    %v1655 = vmul.f32 %v1647, 0.5
    %v1656 = vmul.f32 %v1648, 0.5
    %v1657 = vmul.f32 %v1641, 0.044715
    %v1658 = vmul.f32 %v1642, 0.044715
    %v1659 = vmul.f32 %v1643, 0.044715
    %v1660 = vmul.f32 %v1644, 0.044715
    %v1661 = vmul.f32 %v1645, 0.044715
    %v1662 = vmul.f32 %v1646, 0.044715
    %v1663 = vmul.f32 %v1647, 0.044715
    %v1664 = vmul.f32 %v1648, 0.044715
    %v1665 = vmul.f32 %v1657, %v1641
    %v1666 = vmul.f32 %v1658, %v1642
    %v1667 = vmul.f32 %v1659, %v1643
    %v1668 = vmul.f32 %v1660, %v1644
    %v1669 = vmul.f32 %v1661, %v1645
    %v1670 = vmul.f32 %v1662, %v1646
    %v1671 = vmul.f32 %v1663, %v1647
    %v1672 = vmul.f32 %v1664, %v1648
    %v1673 = vmul.f32 %v1665, %v1641
    %v1674 = vmul.f32 %v1666, %v1642
    %v1675 = vmul.f32 %v1667, %v1643
    %v1676 = vmul.f32 %v1668, %v1644
    %v1677 = vmul.f32 %v1669, %v1645
    %v1678 = vmul.f32 %v1670, %v1646
    %v1679 = vmul.f32 %v1671, %v1647
    %v1680 = vmul.f32 %v1672, %v1648
    %v1681 = vadd.f32 %v1641, %v1673
    %v1682 = vadd.f32 %v1642, %v1674
    %v1683 = vadd.f32 %v1643, %v1675
    %v1684 = vadd.f32 %v1644, %v1676
    %v1685 = vadd.f32 %v1645, %v1677
    %v1686 = vadd.f32 %v1646, %v1678
    %v1687 = vadd.f32 %v1647, %v1679
    %v1688 = vadd.f32 %v1648, %v1680
    %v1689 = vmul.f32 %v1681, 0.7978846
    %v1690 = vmul.f32 %v1682, 0.7978846
    %v1691 = vmul.f32 %v1683, 0.7978846
    %v1692 = vmul.f32 %v1684, 0.7978846
    %v1693 = vmul.f32 %v1685, 0.7978846
    %v1694 = vmul.f32 %v1686, 0.7978846
    %v1695 = vmul.f32 %v1687, 0.7978846
    %v1696 = vmul.f32 %v1688, 0.7978846
    %v1697 = vtanh.pop %v1689
    %v1698 = vtanh.pop %v1690
    %v1699 = vtanh.pop %v1691
    %v1700 = vtanh.pop %v1692
    %v1701 = vtanh.pop %v1693
    %v1702 = vtanh.pop %v1694
    %v1703 = vtanh.pop %v1695
    %v1704 = vtanh.pop %v1696
    %v1705 = vadd.f32 %v1697, 1.0
    %v1706 = vadd.f32 %v1698, 1.0
    %v1707 = vadd.f32 %v1699, 1.0
    %v1708 = vadd.f32 %v1700, 1.0
    %v1709 = vadd.f32 %v1701, 1.0
    %v1710 = vadd.f32 %v1702, 1.0
    %v1711 = vadd.f32 %v1703, 1.0
    %v1712 = vadd.f32 %v1704, 1.0
    %v1713 = vmul.f32 %v1649, %v1705
    %v1714 = vmul.f32 %v1650, %v1706
    %v1715 = vmul.f32 %v1651, %v1707
    %v1716 = vmul.f32 %v1652, %v1708
    %v1717 = vmul.f32 %v1653, %v1709
    %v1718 = vmul.f32 %v1654, %v1710
    %v1719 = vmul.f32 %v1655, %v1711
    %v1720 = vmul.f32 %v1656, %v1712
    %1722 = vset.pattern.permute.xlu0 0
    %1723 = vperm.xlu0 %1722, %v99
    %v1724 = vpop.permute.xlu0 %1723
    %v1727 = vsel %vm484, %v94, 0
    %1729 = vmatpush.msra.mxu0 0.0
    %1730 = vmatpush.msra.mxu0 0.0
    %1731 = vmatpush.msra.mxu0 0.0
    %1732 = vmatpush.msra.mxu0 0.0
    %1733 = vmatpush.msra.mxu0 0.0
    %1734 = vmatpush.msra.mxu0 0.0
    %1735 = vmatpush.msra.mxu0 0.0
    %1736 = vmatpush.msra.mxu0 0.0
    %1737 = vmatpush.msra.mxu0 0.0
    %1738 = vmatpush.msra.mxu0 0.0
    %1739 = vmatpush.msra.mxu0 0.0
    %1740 = vmatpush.msra.mxu0 0.0
    %v1741 = vand.u32 %v1719, 4294901760
    %1742 = vmatpush.msra.mxu0 %v1741
    %v1743 = vand.u32 %v1717, 4294901760
    %1744 = vmatpush.msra.mxu0 %v1743
    %v1745 = vand.u32 %v1715, 4294901760
    %1746 = vmatpush.msra.mxu0 %v1745
    %v1747 = vand.u32 %v1713, 4294901760
    %1748 = vmatpush.msra.mxu0 %v1747
    %v1749 = vand.u32 %v1727, 4294901760
    %v1750 = vsub.f32 %v1727, %v1749
    %v1751 = vand.u32 %v1750, 4294901760
    %v1752 = vsub.f32 %v1750, %v1751
    %v1753 = vand.u32 %v1752, 4294901760
    %1754 = vmatmul.f32.gmra.mxu0 %v1753
    %v1755 = vpop.f32.mrf.mxu0
    %v1756 = vadd.f32 %v1724, %v1755
    %1757 = vdwg.mxu0
    %1758 = vmatpush.msra.mxu0 0.0
    %1759 = vmatpush.msra.mxu0 0.0
    %1760 = vmatpush.msra.mxu0 0.0
    %1761 = vmatpush.msra.mxu0 0.0
    %1762 = vmatpush.msra.mxu0 0.0
    %1763 = vmatpush.msra.mxu0 0.0
    %1764 = vmatpush.msra.mxu0 0.0
    %1765 = vmatpush.msra.mxu0 0.0
    %1766 = vmatpush.msra.mxu0 0.0
    %1767 = vmatpush.msra.mxu0 0.0
    %1768 = vmatpush.msra.mxu0 0.0
    %1769 = vmatpush.msra.mxu0 0.0
    %v1770 = vand.u32 %v1719, 4294901760
    %v1771 = vsub.f32 %v1719, %v1770
    %v1772 = vand.u32 %v1771, 4294901760
    %v1773 = vsub.f32 %v1771, %v1772
    %v1774 = vand.u32 %v1773, 4294901760
    %1775 = vmatpush.msra.mxu0 %v1774
    %v1776 = vand.u32 %v1717, 4294901760
    %v1777 = vsub.f32 %v1717, %v1776
    %v1778 = vand.u32 %v1777, 4294901760
    %v1779 = vsub.f32 %v1777, %v1778
    %v1780 = vand.u32 %v1779, 4294901760
    %1781 = vmatpush.msra.mxu0 %v1780
    %v1782 = vand.u32 %v1715, 4294901760
    %v1783 = vsub.f32 %v1715, %v1782
    %v1784 = vand.u32 %v1783, 4294901760
    %v1785 = vsub.f32 %v1783, %v1784
    %v1786 = vand.u32 %v1785, 4294901760
    %1787 = vmatpush.msra.mxu0 %v1786
    %v1788 = vand.u32 %v1713, 4294901760
    %v1789 = vsub.f32 %v1713, %v1788
    %v1790 = vand.u32 %v1789, 4294901760
    %v1791 = vsub.f32 %v1789, %v1790
    %v1792 = vand.u32 %v1791, 4294901760
    %1793 = vmatpush.msra.mxu0 %v1792
    %v1794 = vand.u32 %v1727, 4294901760
    %1795 = vmatmul.f32.gmra.mxu0 %v1794
    %v1796 = vpop.f32.mrf.mxu0
    %v1797 = vadd.f32 %v1756, %v1796
    %1798 = vdwg.mxu0
    %1799 = vmatpush.msra.mxu0 0.0
    %1800 = vmatpush.msra.mxu0 0.0
    %1801 = vmatpush.msra.mxu0 0.0
    %1802 = vmatpush.msra.mxu0 0.0
    %1803 = vmatpush.msra.mxu0 0.0
    %1804 = vmatpush.msra.mxu0 0.0
    %1805 = vmatpush.msra.mxu0 0.0
    %1806 = vmatpush.msra.mxu0 0.0
    %1807 = vmatpush.msra.mxu0 0.0
    %1808 = vmatpush.msra.mxu0 0.0
    %1809 = vmatpush.msra.mxu0 0.0
    %1810 = vmatpush.msra.mxu0 0.0
    %v1811 = vand.u32 %v1719, 4294901760
    %v1812 = vsub.f32 %v1719, %v1811
    %1813 = vmatpush.msra.mxu0 %v1812
    %v1814 = vand.u32 %v1717, 4294901760
    %v1815 = vsub.f32 %v1717, %v1814
    %1816 = vmatpush.msra.mxu0 %v1815
    %v1817 = vand.u32 %v1715, 4294901760
    %v1818 = vsub.f32 %v1715, %v1817
    %1819 = vmatpush.msra.mxu0 %v1818
    %v1820 = vand.u32 %v1713, 4294901760
    %v1821 = vsub.f32 %v1713, %v1820
    %1822 = vmatpush.msra.mxu0 %v1821
    %v1823 = vand.u32 %v1727, 4294901760
    %v1824 = vsub.f32 %v1727, %v1823
    %1825 = vmatmul.f32.gmra.mxu0 %v1824
    %v1826 = vpop.f32.mrf.mxu0
    %v1827 = vadd.f32 %v1797, %v1826
    %1828 = vdwg.mxu0
    %1829 = vmatpush.msra.mxu0 0.0
    %1830 = vmatpush.msra.mxu0 0.0
    %1831 = vmatpush.msra.mxu0 0.0
    %1832 = vmatpush.msra.mxu0 0.0
    %1833 = vmatpush.msra.mxu0 0.0
    %1834 = vmatpush.msra.mxu0 0.0
    %1835 = vmatpush.msra.mxu0 0.0
    %1836 = vmatpush.msra.mxu0 0.0
    %1837 = vmatpush.msra.mxu0 0.0
    %1838 = vmatpush.msra.mxu0 0.0
    %1839 = vmatpush.msra.mxu0 0.0
    %1840 = vmatpush.msra.mxu0 0.0
    %v1841 = vand.u32 %v1719, 4294901760
    %1842 = vmatpush.msra.mxu0 %v1841
    %v1843 = vand.u32 %v1717, 4294901760
    %1844 = vmatpush.msra.mxu0 %v1843
    %v1845 = vand.u32 %v1715, 4294901760
    %1846 = vmatpush.msra.mxu0 %v1845
    %v1847 = vand.u32 %v1713, 4294901760
    %1848 = vmatpush.msra.mxu0 %v1847
    %v1849 = vand.u32 %v1727, 4294901760
    %v1850 = vsub.f32 %v1727, %v1849
    %v1851 = vand.u32 %v1850, 4294901760
    %1852 = vmatmul.f32.gmra.mxu0 %v1851
    %v1853 = vpop.f32.mrf.mxu0
    %v1854 = vadd.f32 %v1827, %v1853
    %1855 = vdwg.mxu0
    %1856 = vmatpush.msra.mxu0 0.0
    %1857 = vmatpush.msra.mxu0 0.0
    %1858 = vmatpush.msra.mxu0 0.0
    %1859 = vmatpush.msra.mxu0 0.0
    %1860 = vmatpush.msra.mxu0 0.0
    %1861 = vmatpush.msra.mxu0 0.0
    %1862 = vmatpush.msra.mxu0 0.0
    %1863 = vmatpush.msra.mxu0 0.0
    %1864 = vmatpush.msra.mxu0 0.0
    %1865 = vmatpush.msra.mxu0 0.0
    %1866 = vmatpush.msra.mxu0 0.0
    %1867 = vmatpush.msra.mxu0 0.0
    %v1868 = vand.u32 %v1719, 4294901760
    %v1869 = vsub.f32 %v1719, %v1868
    %v1870 = vand.u32 %v1869, 4294901760
    %1871 = vmatpush.msra.mxu0 %v1870
    %v1872 = vand.u32 %v1717, 4294901760
    %v1873 = vsub.f32 %v1717, %v1872
    %v1874 = vand.u32 %v1873, 4294901760
    %1875 = vmatpush.msra.mxu0 %v1874
    %v1876 = vand.u32 %v1715, 4294901760
    %v1877 = vsub.f32 %v1715, %v1876
    %v1878 = vand.u32 %v1877, 4294901760
    %1879 = vmatpush.msra.mxu0 %v1878
    %v1880 = vand.u32 %v1713, 4294901760
    %v1881 = vsub.f32 %v1713, %v1880
    %v1882 = vand.u32 %v1881, 4294901760
    %1883 = vmatpush.msra.mxu0 %v1882
    %v1884 = vand.u32 %v1727, 4294901760
    %1885 = vmatmul.f32.gmra.mxu0 %v1884
    %v1886 = vpop.f32.mrf.mxu0
    %v1887 = vadd.f32 %v1854, %v1886
    %1888 = vdwg.mxu0
    %1889 = vmatpush.msra.mxu0 0.0
    %1890 = vmatpush.msra.mxu0 0.0
    %1891 = vmatpush.msra.mxu0 0.0
    %1892 = vmatpush.msra.mxu0 0.0
    %1893 = vmatpush.msra.mxu0 0.0
    %1894 = vmatpush.msra.mxu0 0.0
    %1895 = vmatpush.msra.mxu0 0.0
    %1896 = vmatpush.msra.mxu0 0.0
    %1897 = vmatpush.msra.mxu0 0.0
    %1898 = vmatpush.msra.mxu0 0.0
    %1899 = vmatpush.msra.mxu0 0.0
    %1900 = vmatpush.msra.mxu0 0.0
    %v1901 = vand.u32 %v1719, 4294901760
    %1902 = vmatpush.msra.mxu0 %v1901
    %v1903 = vand.u32 %v1717, 4294901760
    %1904 = vmatpush.msra.mxu0 %v1903
    %v1905 = vand.u32 %v1715, 4294901760
    %1906 = vmatpush.msra.mxu0 %v1905
    %v1907 = vand.u32 %v1713, 4294901760
    %1908 = vmatpush.msra.mxu0 %v1907
    %v1909 = vand.u32 %v1727, 4294901760
    %1910 = vmatmul.f32.gmra.mxu0 %v1909
    %v1911 = vpop.f32.mrf.mxu0
    %v1912 = vadd.f32 %v1887, %v1911
    %1913 = vdwg.mxu0
    %1914 = vmatpush.msra.mxu0 0.0
    %1915 = vmatpush.msra.mxu0 0.0
    %1916 = vmatpush.msra.mxu0 0.0
    %1917 = vmatpush.msra.mxu0 0.0
    %1918 = vmatpush.msra.mxu0 0.0
    %1919 = vmatpush.msra.mxu0 0.0
    %1920 = vmatpush.msra.mxu0 0.0
    %1921 = vmatpush.msra.mxu0 0.0
    %1922 = vmatpush.msra.mxu0 0.0
    %1923 = vmatpush.msra.mxu0 0.0
    %1924 = vmatpush.msra.mxu0 0.0
    %1925 = vmatpush.msra.mxu0 0.0
    %v1926 = vand.u32 %v1720, 4294901760
    %1927 = vmatpush.msra.mxu0 %v1926
    %v1928 = vand.u32 %v1718, 4294901760
    %1929 = vmatpush.msra.mxu0 %v1928
    %v1930 = vand.u32 %v1716, 4294901760
    %1931 = vmatpush.msra.mxu0 %v1930
    %v1932 = vand.u32 %v1714, 4294901760
    %1933 = vmatpush.msra.mxu0 %v1932
    %v1934 = vand.u32 %v1727, 4294901760
    %v1935 = vsub.f32 %v1727, %v1934
    %v1936 = vand.u32 %v1935, 4294901760
    %v1937 = vsub.f32 %v1935, %v1936
    %v1938 = vand.u32 %v1937, 4294901760
    %1939 = vmatmul.f32.gmra.mxu0 %v1938
    %v1940 = vpop.f32.mrf.mxu0
    %v1941 = vadd.f32 %v1724, %v1940
    %1942 = vdwg.mxu0
    %1943 = vmatpush.msra.mxu0 0.0
    %1944 = vmatpush.msra.mxu0 0.0
    %1945 = vmatpush.msra.mxu0 0.0
    %1946 = vmatpush.msra.mxu0 0.0
    %1947 = vmatpush.msra.mxu0 0.0
    %1948 = vmatpush.msra.mxu0 0.0
    %1949 = vmatpush.msra.mxu0 0.0
    %1950 = vmatpush.msra.mxu0 0.0
    %1951 = vmatpush.msra.mxu0 0.0
    %1952 = vmatpush.msra.mxu0 0.0
    %1953 = vmatpush.msra.mxu0 0.0
    %1954 = vmatpush.msra.mxu0 0.0
    %v1955 = vand.u32 %v1720, 4294901760
    %v1956 = vsub.f32 %v1720, %v1955
    %v1957 = vand.u32 %v1956, 4294901760
    %v1958 = vsub.f32 %v1956, %v1957
    %v1959 = vand.u32 %v1958, 4294901760
    %1960 = vmatpush.msra.mxu0 %v1959
    %v1961 = vand.u32 %v1718, 4294901760
    %v1962 = vsub.f32 %v1718, %v1961
    %v1963 = vand.u32 %v1962, 4294901760
    %v1964 = vsub.f32 %v1962, %v1963
    %v1965 = vand.u32 %v1964, 4294901760
    %1966 = vmatpush.msra.mxu0 %v1965
    %v1967 = vand.u32 %v1716, 4294901760
    %v1968 = vsub.f32 %v1716, %v1967
    %v1969 = vand.u32 %v1968, 4294901760
    %v1970 = vsub.f32 %v1968, %v1969
    %v1971 = vand.u32 %v1970, 4294901760
    %1972 = vmatpush.msra.mxu0 %v1971
    %v1973 = vand.u32 %v1714, 4294901760
    %v1974 = vsub.f32 %v1714, %v1973
    %v1975 = vand.u32 %v1974, 4294901760
    %v1976 = vsub.f32 %v1974, %v1975
    %v1977 = vand.u32 %v1976, 4294901760
    %1978 = vmatpush.msra.mxu0 %v1977
    %v1979 = vand.u32 %v1727, 4294901760
    %1980 = vmatmul.f32.gmra.mxu0 %v1979
    %v1981 = vpop.f32.mrf.mxu0
    %v1982 = vadd.f32 %v1941, %v1981
    %1983 = vdwg.mxu0
    %1984 = vmatpush.msra.mxu0 0.0
    %1985 = vmatpush.msra.mxu0 0.0
    %1986 = vmatpush.msra.mxu0 0.0
    %1987 = vmatpush.msra.mxu0 0.0
    %1988 = vmatpush.msra.mxu0 0.0
    %1989 = vmatpush.msra.mxu0 0.0
    %1990 = vmatpush.msra.mxu0 0.0
    %1991 = vmatpush.msra.mxu0 0.0
    %1992 = vmatpush.msra.mxu0 0.0
    %1993 = vmatpush.msra.mxu0 0.0
    %1994 = vmatpush.msra.mxu0 0.0
    %1995 = vmatpush.msra.mxu0 0.0
    %v1996 = vand.u32 %v1720, 4294901760
    %v1997 = vsub.f32 %v1720, %v1996
    %1998 = vmatpush.msra.mxu0 %v1997
    %v1999 = vand.u32 %v1718, 4294901760
    %v2000 = vsub.f32 %v1718, %v1999
    %2001 = vmatpush.msra.mxu0 %v2000
    %v2002 = vand.u32 %v1716, 4294901760
    %v2003 = vsub.f32 %v1716, %v2002
    %2004 = vmatpush.msra.mxu0 %v2003
    %v2005 = vand.u32 %v1714, 4294901760
    %v2006 = vsub.f32 %v1714, %v2005
    %2007 = vmatpush.msra.mxu0 %v2006
    %v2008 = vand.u32 %v1727, 4294901760
    %v2009 = vsub.f32 %v1727, %v2008
    %2010 = vmatmul.f32.gmra.mxu0 %v2009
    %v2011 = vpop.f32.mrf.mxu0
    %v2012 = vadd.f32 %v1982, %v2011
    %2013 = vdwg.mxu0
    %2014 = vmatpush.msra.mxu0 0.0
    %2015 = vmatpush.msra.mxu0 0.0
    %2016 = vmatpush.msra.mxu0 0.0
    %2017 = vmatpush.msra.mxu0 0.0
    %2018 = vmatpush.msra.mxu0 0.0
    %2019 = vmatpush.msra.mxu0 0.0
    %2020 = vmatpush.msra.mxu0 0.0
    %2021 = vmatpush.msra.mxu0 0.0
    %2022 = vmatpush.msra.mxu0 0.0
    %2023 = vmatpush.msra.mxu0 0.0
    %2024 = vmatpush.msra.mxu0 0.0
    %2025 = vmatpush.msra.mxu0 0.0
    %v2026 = vand.u32 %v1720, 4294901760
    %2027 = vmatpush.msra.mxu0 %v2026
    %v2028 = vand.u32 %v1718, 4294901760
    %2029 = vmatpush.msra.mxu0 %v2028
    %v2030 = vand.u32 %v1716, 4294901760
    %2031 = vmatpush.msra.mxu0 %v2030
    %v2032 = vand.u32 %v1714, 4294901760
    %2033 = vmatpush.msra.mxu0 %v2032
    %v2034 = vand.u32 %v1727, 4294901760
    %v2035 = vsub.f32 %v1727, %v2034
    %v2036 = vand.u32 %v2035, 4294901760
    %2037 = vmatmul.f32.gmra.mxu0 %v2036
    %v2038 = vpop.f32.mrf.mxu0
    %v2039 = vadd.f32 %v2012, %v2038
    %2040 = vdwg.mxu0
    %2041 = vmatpush.msra.mxu0 0.0
    %2042 = vmatpush.msra.mxu0 0.0
    %2043 = vmatpush.msra.mxu0 0.0
    %2044 = vmatpush.msra.mxu0 0.0
    %2045 = vmatpush.msra.mxu0 0.0
    %2046 = vmatpush.msra.mxu0 0.0
    %2047 = vmatpush.msra.mxu0 0.0
    %2048 = vmatpush.msra.mxu0 0.0
    %2049 = vmatpush.msra.mxu0 0.0
    %2050 = vmatpush.msra.mxu0 0.0
    %2051 = vmatpush.msra.mxu0 0.0
    %2052 = vmatpush.msra.mxu0 0.0
    %v2053 = vand.u32 %v1720, 4294901760
    %v2054 = vsub.f32 %v1720, %v2053
    %v2055 = vand.u32 %v2054, 4294901760
    %2056 = vmatpush.msra.mxu0 %v2055
    %v2057 = vand.u32 %v1718, 4294901760
    %v2058 = vsub.f32 %v1718, %v2057
    %v2059 = vand.u32 %v2058, 4294901760
    %2060 = vmatpush.msra.mxu0 %v2059
    %v2061 = vand.u32 %v1716, 4294901760
    %v2062 = vsub.f32 %v1716, %v2061
    %v2063 = vand.u32 %v2062, 4294901760
    %2064 = vmatpush.msra.mxu0 %v2063
    %v2065 = vand.u32 %v1714, 4294901760
    %v2066 = vsub.f32 %v1714, %v2065
    %v2067 = vand.u32 %v2066, 4294901760
    %2068 = vmatpush.msra.mxu0 %v2067
    %v2069 = vand.u32 %v1727, 4294901760
    %2070 = vmatmul.f32.gmra.mxu0 %v2069
    %v2071 = vpop.f32.mrf.mxu0
    %v2072 = vadd.f32 %v2039, %v2071
    %2073 = vdwg.mxu0
    %2074 = vmatpush.msra.mxu0 0.0
    %2075 = vmatpush.msra.mxu0 0.0
    %2076 = vmatpush.msra.mxu0 0.0
    %2077 = vmatpush.msra.mxu0 0.0
    %2078 = vmatpush.msra.mxu0 0.0
    %2079 = vmatpush.msra.mxu0 0.0
    %2080 = vmatpush.msra.mxu0 0.0
    %2081 = vmatpush.msra.mxu0 0.0
    %2082 = vmatpush.msra.mxu0 0.0
    %2083 = vmatpush.msra.mxu0 0.0
    %2084 = vmatpush.msra.mxu0 0.0
    %2085 = vmatpush.msra.mxu0 0.0
    %v2086 = vand.u32 %v1720, 4294901760
    %2087 = vmatpush.msra.mxu0 %v2086
    %v2088 = vand.u32 %v1718, 4294901760
    %2089 = vmatpush.msra.mxu0 %v2088
    %v2090 = vand.u32 %v1716, 4294901760
    %2091 = vmatpush.msra.mxu0 %v2090
    %v2092 = vand.u32 %v1714, 4294901760
    %2093 = vmatpush.msra.mxu0 %v2092
    %v2094 = vand.u32 %v1727, 4294901760
    %2095 = vmatmul.f32.gmra.mxu0 %v2094
    %v2096 = vpop.f32.mrf.mxu0
    %v2097 = vadd.f32 %v2072, %v2096
    %2098 = vdwg.mxu0
    %v2099 = vxor.u32 %v1912, 2147483648
    %v2100 = vxor.u32 %v2097, 2147483648
    %v2101 = vmul.f32 %v2099, 1.442695
    %v2102 = vpow.pop %v2101
    %v2103 = vmul.f32 %v2100, 1.442695
    %v2104 = vpow.pop %v2103
    %v2105 = vadd.f32 %v2102, 1.0
    %v2106 = vadd.f32 %v2104, 1.0
    %v2107 = vrcp.pop %v2105
    %v2108 = vmul.f32 %v2105, %v2107
    %v2109 = vsub.f32 1.0, %v2108
    %v2110 = vmul.f32 %v2107, %v2109
    %v2111 = vadd.f32 %v2107, %v2110
    %vm2112 = vweird.f32 %v2105
    %vm2113 = vweird.f32 %v2107
    %vm2114 = vmor %vm2112, %vm2113
    %v2115 = vsel %vm2114, %v2107, %v2111
    %v2116 = vand.u32 2147483647, %v2105
    %vm2117 = vcmp.eq.f32.partialorder %v2116, 8.507059e+37
    %v2118 = vand.u32 %v2105, 2147483648
    %v2119 = vor.u32 1.1754944e-38, %v2118
    %v2120 = vsel %vm2117, %v2119, %v2115
    %v2121 = vmul.f32 1.0, %v2120
    %v2122 = vrcp.pop %v2106
    %v2123 = vmul.f32 %v2106, %v2122
    %v2124 = vsub.f32 1.0, %v2123
    %v2125 = vmul.f32 %v2122, %v2124
    %v2126 = vadd.f32 %v2122, %v2125
    %vm2127 = vweird.f32 %v2106
    %vm2128 = vweird.f32 %v2122
    %vm2129 = vmor %vm2127, %vm2128
    %v2130 = vsel %vm2129, %v2122, %v2126
    %v2131 = vand.u32 2147483647, %v2106
    %vm2132 = vcmp.eq.f32.partialorder %v2131, 8.507059e+37
    %v2133 = vand.u32 %v2106, 2147483648
    %v2134 = vor.u32 1.1754944e-38, %v2133
    %v2135 = vsel %vm2132, %v2134, %v2130
    %v2136 = vmul.f32 1.0, %v2135
    %2138 = vset.pattern.permute.xlu0 0
    %2139 = vperm.xlu0 %2138, %v438
    %v2140 = vpop.permute.xlu0 %2139
    %2143 = vset.pattern.permute.xlu0 0
    %2144 = vperm.xlu0 %2143, %v453
    %v2145 = vpop.permute.xlu0 %2144
    %2148 = vset.pattern.permute.xlu0 0
    %2149 = vperm.xlu0 %2148, %v468
    %v2150 = vpop.permute.xlu0 %2149
    %2153 = vset.pattern.permute.xlu0 0
    %2154 = vperm.xlu0 %2153, %v483
    %v2155 = vpop.permute.xlu0 %2154
    %v2157 = vperm.slane %v2121, 1
    %v2158 = vperm.slane %v2136, 1
    %v2159 = vadd.f32 %v2140, %v2157
    %v2160 = vadd.f32 %v2140, %v2158
    %v2161 = vadd.f32 %v2145, %v2157
    %v2162 = vadd.f32 %v2145, %v2158
    %v2163 = vadd.f32 %v2150, %v2157
    %v2164 = vadd.f32 %v2150, %v2158
    %v2165 = vadd.f32 %v2155, %v2157
    %v2166 = vadd.f32 %v2155, %v2158
    %v2167 = vmul.f32 %v2159, 0.5
    %v2168 = vmul.f32 %v2160, 0.5
    %v2169 = vmul.f32 %v2161, 0.5
    %v2170 = vmul.f32 %v2162, 0.5
    %v2171 = vmul.f32 %v2163, 0.5
    %v2172 = vmul.f32 %v2164, 0.5
    %v2173 = vmul.f32 %v2165, 0.5
    %v2174 = vmul.f32 %v2166, 0.5
    %v2175 = vmul.f32 %v2167, %v108
    %v2176 = vmul.f32 %v2168, %v109
    %v2177 = vmul.f32 %v2169, %v110
    %v2178 = vmul.f32 %v2170, %v111
    %v2179 = vmul.f32 %v2171, %v112
    %v2180 = vmul.f32 %v2172, %v113
    %v2181 = vmul.f32 %v2173, %v114
    %v2182 = vmul.f32 %v2174, %v115
    %v2183 = vadd.f32 %v100, %v2175
    %v2184 = vadd.f32 %v101, %v2176
    %v2185 = vadd.f32 %v102, %v2177
    %v2186 = vadd.f32 %v103, %v2178
    %v2187 = vadd.f32 %v104, %v2179
    %v2188 = vadd.f32 %v105, %v2180
    %v2189 = vadd.f32 %v106, %v2181
    %v2190 = vadd.f32 %v107, %v2182
    %2191 = vst [vmem:[#allocation7] sm:$0xff] %v2183
    %2192 = vst [vmem:[#allocation7 + $0x8] sm:$0xff] %v2184
    %2193 = vst [vmem:[#allocation7 + $0x10] sm:$0xff] %v2185
    %2194 = vst [vmem:[#allocation7 + $0x18] sm:$0xff] %v2186
    %2195 = vst [vmem:[#allocation7 + $0x20] sm:$0xff] %v2187
    %2196 = vst [vmem:[#allocation7 + $0x28] sm:$0xff] %v2188
    %2197 = vst [vmem:[#allocation7 + $0x30] sm:$0xff] %v2189
    %2198 = vst [vmem:[#allocation7 + $0x38] sm:$0xff] %v2190
    %2200 = vset.pattern.permute.xlu0 0
    %2201 = vperm.xlu0 %2200, %v378
    %v2202 = vpop.permute.xlu0 %2201
    %2205 = vset.pattern.permute.xlu0 0
    %2206 = vperm.xlu0 %2205, %v393
    %v2207 = vpop.permute.xlu0 %2206
    %2210 = vset.pattern.permute.xlu0 0
    %2211 = vperm.xlu0 %2210, %v408
    %v2212 = vpop.permute.xlu0 %2211
    %2215 = vset.pattern.permute.xlu0 0
    %2216 = vperm.xlu0 %2215, %v423
    %v2217 = vpop.permute.xlu0 %2216
    %v2219 = vperm.slane %v2121, 0
    %v2220 = vperm.slane %v2136, 0
    %v2221 = vadd.f32 %v2202, %v2219
    %v2222 = vadd.f32 %v2202, %v2220
    %v2223 = vadd.f32 %v2207, %v2219
    %v2224 = vadd.f32 %v2207, %v2220
    %v2225 = vadd.f32 %v2212, %v2219
    %v2226 = vadd.f32 %v2212, %v2220
    %v2227 = vadd.f32 %v2217, %v2219
    %v2228 = vadd.f32 %v2217, %v2220
    %v2229 = vmul.f32 %v2221, 0.5
    %v2230 = vmul.f32 %v2222, 0.5
    %v2231 = vmul.f32 %v2223, 0.5
    %v2232 = vmul.f32 %v2224, 0.5
    %v2233 = vmul.f32 %v2225, 0.5
    %v2234 = vmul.f32 %v2226, 0.5
    %v2235 = vmul.f32 %v2227, 0.5
    %v2236 = vmul.f32 %v2228, 0.5
    %v2237 = vmul.f32 %v2229, %v100
    %v2238 = vmul.f32 %v2230, %v101
    %v2239 = vmul.f32 %v2231, %v102
    %v2240 = vmul.f32 %v2232, %v103
    %v2241 = vmul.f32 %v2233, %v104
    %v2242 = vmul.f32 %v2234, %v105
    %v2243 = vmul.f32 %v2235, %v106
    %v2244 = vmul.f32 %v2236, %v107
    %v2245 = vadd.f32 %v108, %v2237
    %v2246 = vadd.f32 %v109, %v2238
    %v2247 = vadd.f32 %v110, %v2239
    %v2248 = vadd.f32 %v111, %v2240
    %v2249 = vadd.f32 %v112, %v2241
    %v2250 = vadd.f32 %v113, %v2242
    %v2251 = vadd.f32 %v114, %v2243
    %v2252 = vadd.f32 %v115, %v2244
    %2253 = vst [vmem:[#allocation8] sm:$0xff] %v2245
    %2254 = vst [vmem:[#allocation8 + $0x8] sm:$0xff] %v2246
    %2255 = vst [vmem:[#allocation8 + $0x10] sm:$0xff] %v2247
    %2256 = vst [vmem:[#allocation8 + $0x18] sm:$0xff] %v2248
    %2257 = vst [vmem:[#allocation8 + $0x20] sm:$0xff] %v2249
    %2258 = vst [vmem:[#allocation8 + $0x28] sm:$0xff] %v2250
    %2259 = vst [vmem:[#allocation8 + $0x30] sm:$0xff] %v2251
    %2260 = vst [vmem:[#allocation8 + $0x38] sm:$0xff] %v2252
    %s2261 = scalar_lea.vmem %s0, 64
    %v2262 = vld [vmem:[%s2261] sm:$0xff]
    %v2263 = vld [vmem:[%s2261 + $0x8] sm:$0xff]
    %v2264 = vld [vmem:[%s2261 + $0x10] sm:$0xff]
    %v2265 = vld [vmem:[%s2261 + $0x18] sm:$0xff]
    %v2266 = vld [vmem:[%s2261 + $0x20] sm:$0xff]
    %v2267 = vld [vmem:[%s2261 + $0x28] sm:$0xff]
    %v2268 = vld [vmem:[%s2261 + $0x30] sm:$0xff]
    %v2269 = vld [vmem:[%s2261 + $0x38] sm:$0xff]
    %s2270 = scalar_lea.vmem [#allocation2], 64
    %v2271 = vld [vmem:[%s2270] sm:$0xff]
    %v2272 = vld [vmem:[%s2270 + $0x8] sm:$0xff]
    %v2273 = vld [vmem:[%s2270 + $0x10] sm:$0xff]
    %v2274 = vld [vmem:[%s2270 + $0x18] sm:$0xff]
    %v2275 = vld [vmem:[%s2270 + $0x20] sm:$0xff]
    %v2276 = vld [vmem:[%s2270 + $0x28] sm:$0xff]
    %v2277 = vld [vmem:[%s2270 + $0x30] sm:$0xff]
    %v2278 = vld [vmem:[%s2270 + $0x38] sm:$0xff]
    %v2279 = vadd.f32 %v2262, %v2263
    %2280 = vadd.xlane.f32.xlu0 %v2279
    %v2281 = vpop.xlane.xlu0 %2280
    %v2282 = vadd.f32 %v2264, %v2265
    %2283 = vadd.xlane.f32.xlu0 %v2282
    %v2284 = vpop.xlane.xlu0 %2283
    %v2285 = vadd.f32 %v2266, %v2267
    %2286 = vadd.xlane.f32.xlu0 %v2285
    %v2287 = vpop.xlane.xlu0 %2286
    %v2288 = vadd.f32 %v2268, %v2269
    %2289 = vadd.xlane.f32.xlu0 %v2288
    %v2290 = vpop.xlane.xlu0 %2289
    %v2291 = vmul.f32 %v2281, 0.00390625
    %v2292 = vmul.f32 %v2284, 0.00390625
    %v2293 = vmul.f32 %v2287, 0.00390625
    %v2294 = vmul.f32 %v2290, 0.00390625
    %v2295 = vadd.f32 %v2271, %v2272
    %2296 = vadd.xlane.f32.xlu0 %v2295
    %v2297 = vpop.xlane.xlu0 %2296
    %v2298 = vadd.f32 %v2273, %v2274
    %2299 = vadd.xlane.f32.xlu0 %v2298
    %v2300 = vpop.xlane.xlu0 %2299
    %v2301 = vadd.f32 %v2275, %v2276
    %2302 = vadd.xlane.f32.xlu0 %v2301
    %v2303 = vpop.xlane.xlu0 %2302
    %v2304 = vadd.f32 %v2277, %v2278
    %2305 = vadd.xlane.f32.xlu0 %v2304
    %v2306 = vpop.xlane.xlu0 %2305
    %v2307 = vmul.f32 %v2297, 0.00390625
    %v2308 = vmul.f32 %v2300, 0.00390625
    %v2309 = vmul.f32 %v2303, 0.00390625
    %v2310 = vmul.f32 %v2306, 0.00390625
    %v2311 = vmax.f32 %v2262, %v2263
    %2312 = vmax.xlane.f32.xlu0 %v2311
    %v2313 = vpop.xlane.xlu0 %2312
    %v2314 = vmax.f32 %v2264, %v2265
    %2315 = vmax.xlane.f32.xlu0 %v2314
    %v2316 = vpop.xlane.xlu0 %2315
    %v2317 = vmax.f32 %v2266, %v2267
    %2318 = vmax.xlane.f32.xlu0 %v2317
    %v2319 = vpop.xlane.xlu0 %2318
    %v2320 = vmax.f32 %v2268, %v2269
    %2321 = vmax.xlane.f32.xlu0 %v2320
    %v2322 = vpop.xlane.xlu0 %2321
    %v2323 = vmax.f32 %v2271, %v2272
    %2324 = vmax.xlane.f32.xlu0 %v2323
    %v2325 = vpop.xlane.xlu0 %2324
    %v2326 = vmax.f32 %v2273, %v2274
    %2327 = vmax.xlane.f32.xlu0 %v2326
    %v2328 = vpop.xlane.xlu0 %2327
    %v2329 = vmax.f32 %v2275, %v2276
    %2330 = vmax.xlane.f32.xlu0 %v2329
    %v2331 = vpop.xlane.xlu0 %2330
    %v2332 = vmax.f32 %v2277, %v2278
    %2333 = vmax.xlane.f32.xlu0 %v2332
    %v2334 = vpop.xlane.xlu0 %2333
    %2336 = vset.pattern.permute.xlu0 0
    %2337 = vperm.xlu0 %2336, %v2291
    %v2338 = vpop.permute.xlu0 %2337
    %2341 = vset.pattern.permute.xlu0 0
    %2342 = vperm.xlu0 %2341, %v2292
    %v2343 = vpop.permute.xlu0 %2342
    %2346 = vset.pattern.permute.xlu0 0
    %2347 = vperm.xlu0 %2346, %v2293
    %v2348 = vpop.permute.xlu0 %2347
    %2351 = vset.pattern.permute.xlu0 0
    %2352 = vperm.xlu0 %2351, %v2294
    %v2353 = vpop.permute.xlu0 %2352
    %2356 = vset.pattern.permute.xlu0 0
    %2357 = vperm.xlu0 %2356, %v2307
    %v2358 = vpop.permute.xlu0 %2357
    %2361 = vset.pattern.permute.xlu0 0
    %2362 = vperm.xlu0 %2361, %v2308
    %v2363 = vpop.permute.xlu0 %2362
    %2366 = vset.pattern.permute.xlu0 0
    %2367 = vperm.xlu0 %2366, %v2309
    %v2368 = vpop.permute.xlu0 %2367
    %2371 = vset.pattern.permute.xlu0 0
    %2372 = vperm.xlu0 %2371, %v2310
    %v2373 = vpop.permute.xlu0 %2372
    %2376 = vset.pattern.permute.xlu0 0
    %2377 = vperm.xlu0 %2376, %v2313
    %v2378 = vpop.permute.xlu0 %2377
    %2381 = vset.pattern.permute.xlu0 0
    %2382 = vperm.xlu0 %2381, %v2316
    %v2383 = vpop.permute.xlu0 %2382
    %2386 = vset.pattern.permute.xlu0 0
    %2387 = vperm.xlu0 %2386, %v2319
    %v2388 = vpop.permute.xlu0 %2387
    %2391 = vset.pattern.permute.xlu0 0
    %2392 = vperm.xlu0 %2391, %v2322
    %v2393 = vpop.permute.xlu0 %2392
    %2396 = vset.pattern.permute.xlu0 0
    %2397 = vperm.xlu0 %2396, %v2325
    %v2398 = vpop.permute.xlu0 %2397
    %2401 = vset.pattern.permute.xlu0 0
    %2402 = vperm.xlu0 %2401, %v2328
    %v2403 = vpop.permute.xlu0 %2402
    %2406 = vset.pattern.permute.xlu0 0
    %2407 = vperm.xlu0 %2406, %v2331
    %v2408 = vpop.permute.xlu0 %2407
    %2411 = vset.pattern.permute.xlu0 0
    %2412 = vperm.xlu0 %2411, %v2334
    %v2413 = vpop.permute.xlu0 %2412
    %v2415 = vmul.f32 %v53, %v2338
    %v2416 = vmul.f32 %v54, %v2343
    %v2417 = vmul.f32 %v55, %v2348
    %v2418 = vmul.f32 %v56, %v2353
    %v2419 = vmul.f32 %v57, %v2358
    %v2420 = vmul.f32 %v58, %v2363
    %v2421 = vmul.f32 %v59, %v2368
    %v2422 = vmul.f32 %v60, %v2373
    %v2423 = vmul.f32 %v61, %v2378
    %v2424 = vmul.f32 %v62, %v2383
    %v2425 = vmul.f32 %v63, %v2388
    %v2426 = vmul.f32 %v64, %v2393
    %v2427 = vmul.f32 %v65, %v2398
    %v2428 = vmul.f32 %v66, %v2403
    %v2429 = vmul.f32 %v67, %v2408
    %v2430 = vmul.f32 %v68, %v2413
    %v2431 = vadd.f32 %v2415, %v2416
    %v2432 = vadd.f32 %v2431, %v2417
    %v2433 = vadd.f32 %v2432, %v2418
    %v2434 = vadd.f32 %v2433, %v2419
    %v2435 = vadd.f32 %v2434, %v2420
    %v2436 = vadd.f32 %v2435, %v2421
    %v2437 = vadd.f32 %v2436, %v2422
    %v2438 = vadd.f32 %v2437, %v2423
    %v2439 = vadd.f32 %v2438, %v2424
    %v2440 = vadd.f32 %v2439, %v2425
    %v2441 = vadd.f32 %v2440, %v2426
    %v2442 = vadd.f32 %v2441, %v2427
    %v2443 = vadd.f32 %v2442, %v2428
    %v2444 = vadd.f32 %v2443, %v2429
    %v2445 = vadd.f32 %v2444, %v2430
    %v2446 = vrot.slane %v2445, 4
    %v2447 = vadd.f32 %v2445, %v2446
    %v2448 = vrot.slane %v2447, 2
    %v2449 = vadd.f32 %v2447, %v2448
    %v2450 = vrot.slane %v2449, 1
    %v2451 = vadd.f32 %v2449, %v2450
    %v2452 = vadd.f32 %v2451, %v69
    %v2453 = vmul.f32 %v2452, 0.5
    %v2454 = vmul.f32 %v2452, 0.044715
    %v2455 = vmul.f32 %v2454, %v2452
    %v2456 = vmul.f32 %v2455, %v2452
    %v2457 = vadd.f32 %v2452, %v2456
    %v2458 = vmul.f32 %v2457, 0.7978846
    %v2459 = vtanh.pop %v2458
    %v2460 = vadd.f32 %v2459, 1.0
    %v2461 = vmul.f32 %v2453, %v2460
    %v2462 = vperm.slane %v2461, 0
    %v2463 = vmul.f32 %v70, %v2462
    %v2464 = vmul.f32 %v71, %v2462
    %v2465 = vmul.f32 %v72, %v2462
    %v2466 = vmul.f32 %v73, %v2462
    %v2467 = vmul.f32 %v74, %v2462
    %v2468 = vmul.f32 %v75, %v2462
    %v2469 = vmul.f32 %v76, %v2462
    %v2470 = vmul.f32 %v77, %v2462
    %2471 = vadd.xlane.f32.xlu0 %v2463
    %v2472 = vpop.xlane.xlu0 %2471
    %2473 = vadd.xlane.f32.xlu0 %v2464
    %v2474 = vpop.xlane.xlu0 %2473
    %2475 = vadd.xlane.f32.xlu0 %v2465
    %v2476 = vpop.xlane.xlu0 %2475
    %2477 = vadd.xlane.f32.xlu0 %v2466
    %v2478 = vpop.xlane.xlu0 %2477
    %2479 = vadd.xlane.f32.xlu0 %v2467
    %v2480 = vpop.xlane.xlu0 %2479
    %2481 = vadd.xlane.f32.xlu0 %v2468
    %v2482 = vpop.xlane.xlu0 %2481
    %2483 = vadd.xlane.f32.xlu0 %v2469
    %v2484 = vpop.xlane.xlu0 %2483
    %2485 = vadd.xlane.f32.xlu0 %v2470
    %v2486 = vpop.xlane.xlu0 %2485
    %v2487 = vadd.f32 %v2472, %v78
    %v2488 = vadd.f32 %v2474, %v79
    %v2489 = vadd.f32 %v2476, %v80
    %v2490 = vadd.f32 %v2478, %v81
    %v2491 = vadd.f32 %v2480, %v82
    %v2492 = vadd.f32 %v2482, %v83
    %v2493 = vadd.f32 %v2484, %v84
    %v2494 = vadd.f32 %v2486, %v85
    %v2495 = vxor.u32 %v2487, 2147483648
    %v2496 = vxor.u32 %v2488, 2147483648
    %v2497 = vxor.u32 %v2489, 2147483648
    %v2498 = vxor.u32 %v2490, 2147483648
    %v2499 = vxor.u32 %v2491, 2147483648
    %v2500 = vxor.u32 %v2492, 2147483648
    %v2501 = vxor.u32 %v2493, 2147483648
    %v2502 = vxor.u32 %v2494, 2147483648
    %v2503 = vmul.f32 %v2495, 1.442695
    %v2504 = vpow.pop %v2503
    %v2505 = vmul.f32 %v2496, 1.442695
    %v2506 = vpow.pop %v2505
    %v2507 = vmul.f32 %v2497, 1.442695
    %v2508 = vpow.pop %v2507
    %v2509 = vmul.f32 %v2498, 1.442695
    %v2510 = vpow.pop %v2509
    %v2511 = vmul.f32 %v2499, 1.442695
    %v2512 = vpow.pop %v2511
    %v2513 = vmul.f32 %v2500, 1.442695
    %v2514 = vpow.pop %v2513
    %v2515 = vmul.f32 %v2501, 1.442695
    %v2516 = vpow.pop %v2515
    %v2517 = vmul.f32 %v2502, 1.442695
    %v2518 = vpow.pop %v2517
    %v2519 = vadd.f32 %v2504, 1.0
    %v2520 = vadd.f32 %v2506, 1.0
    %v2521 = vadd.f32 %v2508, 1.0
    %v2522 = vadd.f32 %v2510, 1.0
    %v2523 = vadd.f32 %v2512, 1.0
    %v2524 = vadd.f32 %v2514, 1.0
    %v2525 = vadd.f32 %v2516, 1.0
    %v2526 = vadd.f32 %v2518, 1.0
    %v2527 = vrcp.pop %v2519
    %v2528 = vmul.f32 %v2519, %v2527
    %v2529 = vsub.f32 1.0, %v2528
    %v2530 = vmul.f32 %v2527, %v2529
    %v2531 = vadd.f32 %v2527, %v2530
    %vm2532 = vweird.f32 %v2519
    %vm2533 = vweird.f32 %v2527
    %vm2534 = vmor %vm2532, %vm2533
    %v2535 = vsel %vm2534, %v2527, %v2531
    %v2536 = vand.u32 2147483647, %v2519
    %vm2537 = vcmp.eq.f32.partialorder %v2536, 8.507059e+37
    %v2538 = vand.u32 %v2519, 2147483648
    %v2539 = vor.u32 1.1754944e-38, %v2538
    %v2540 = vsel %vm2537, %v2539, %v2535
    %v2541 = vmul.f32 1.0, %v2540
    %v2542 = vrcp.pop %v2520
    %v2543 = vmul.f32 %v2520, %v2542
    %v2544 = vsub.f32 1.0, %v2543
    %v2545 = vmul.f32 %v2542, %v2544
    %v2546 = vadd.f32 %v2542, %v2545
    %vm2547 = vweird.f32 %v2520
    %vm2548 = vweird.f32 %v2542
    %vm2549 = vmor %vm2547, %vm2548
    %v2550 = vsel %vm2549, %v2542, %v2546
    %v2551 = vand.u32 2147483647, %v2520
    %vm2552 = vcmp.eq.f32.partialorder %v2551, 8.507059e+37
    %v2553 = vand.u32 %v2520, 2147483648
    %v2554 = vor.u32 1.1754944e-38, %v2553
    %v2555 = vsel %vm2552, %v2554, %v2550
    %v2556 = vmul.f32 1.0, %v2555
    %v2557 = vrcp.pop %v2521
    %v2558 = vmul.f32 %v2521, %v2557
    %v2559 = vsub.f32 1.0, %v2558
    %v2560 = vmul.f32 %v2557, %v2559
    %v2561 = vadd.f32 %v2557, %v2560
    %vm2562 = vweird.f32 %v2521
    %vm2563 = vweird.f32 %v2557
    %vm2564 = vmor %vm2562, %vm2563
    %v2565 = vsel %vm2564, %v2557, %v2561
    %v2566 = vand.u32 2147483647, %v2521
    %vm2567 = vcmp.eq.f32.partialorder %v2566, 8.507059e+37
    %v2568 = vand.u32 %v2521, 2147483648
    %v2569 = vor.u32 1.1754944e-38, %v2568
    %v2570 = vsel %vm2567, %v2569, %v2565
    %v2571 = vmul.f32 1.0, %v2570
    %v2572 = vrcp.pop %v2522
    %v2573 = vmul.f32 %v2522, %v2572
    %v2574 = vsub.f32 1.0, %v2573
    %v2575 = vmul.f32 %v2572, %v2574
    %v2576 = vadd.f32 %v2572, %v2575
    %vm2577 = vweird.f32 %v2522
    %vm2578 = vweird.f32 %v2572
    %vm2579 = vmor %vm2577, %vm2578
    %v2580 = vsel %vm2579, %v2572, %v2576
    %v2581 = vand.u32 2147483647, %v2522
    %vm2582 = vcmp.eq.f32.partialorder %v2581, 8.507059e+37
    %v2583 = vand.u32 %v2522, 2147483648
    %v2584 = vor.u32 1.1754944e-38, %v2583
    %v2585 = vsel %vm2582, %v2584, %v2580
    %v2586 = vmul.f32 1.0, %v2585
    %v2587 = vrcp.pop %v2523
    %v2588 = vmul.f32 %v2523, %v2587
    %v2589 = vsub.f32 1.0, %v2588
    %v2590 = vmul.f32 %v2587, %v2589
    %v2591 = vadd.f32 %v2587, %v2590
    %vm2592 = vweird.f32 %v2523
    %vm2593 = vweird.f32 %v2587
    %vm2594 = vmor %vm2592, %vm2593
    %v2595 = vsel %vm2594, %v2587, %v2591
    %v2596 = vand.u32 2147483647, %v2523
    %vm2597 = vcmp.eq.f32.partialorder %v2596, 8.507059e+37
    %v2598 = vand.u32 %v2523, 2147483648
    %v2599 = vor.u32 1.1754944e-38, %v2598
    %v2600 = vsel %vm2597, %v2599, %v2595
    %v2601 = vmul.f32 1.0, %v2600
    %v2602 = vrcp.pop %v2524
    %v2603 = vmul.f32 %v2524, %v2602
    %v2604 = vsub.f32 1.0, %v2603
    %v2605 = vmul.f32 %v2602, %v2604
    %v2606 = vadd.f32 %v2602, %v2605
    %vm2607 = vweird.f32 %v2524
    %vm2608 = vweird.f32 %v2602
    %vm2609 = vmor %vm2607, %vm2608
    %v2610 = vsel %vm2609, %v2602, %v2606
    %v2611 = vand.u32 2147483647, %v2524
    %vm2612 = vcmp.eq.f32.partialorder %v2611, 8.507059e+37
    %v2613 = vand.u32 %v2524, 2147483648
    %v2614 = vor.u32 1.1754944e-38, %v2613
    %v2615 = vsel %vm2612, %v2614, %v2610
    %v2616 = vmul.f32 1.0, %v2615
    %v2617 = vrcp.pop %v2525
    %v2618 = vmul.f32 %v2525, %v2617
    %v2619 = vsub.f32 1.0, %v2618
    %v2620 = vmul.f32 %v2617, %v2619
    %v2621 = vadd.f32 %v2617, %v2620
    %vm2622 = vweird.f32 %v2525
    %vm2623 = vweird.f32 %v2617
    %vm2624 = vmor %vm2622, %vm2623
    %v2625 = vsel %vm2624, %v2617, %v2621
    %v2626 = vand.u32 2147483647, %v2525
    %vm2627 = vcmp.eq.f32.partialorder %v2626, 8.507059e+37
    %v2628 = vand.u32 %v2525, 2147483648
    %v2629 = vor.u32 1.1754944e-38, %v2628
    %v2630 = vsel %vm2627, %v2629, %v2625
    %v2631 = vmul.f32 1.0, %v2630
    %v2632 = vrcp.pop %v2526
    %v2633 = vmul.f32 %v2526, %v2632
    %v2634 = vsub.f32 1.0, %v2633
    %v2635 = vmul.f32 %v2632, %v2634
    %v2636 = vadd.f32 %v2632, %v2635
    %vm2637 = vweird.f32 %v2526
    %vm2638 = vweird.f32 %v2632
    %vm2639 = vmor %vm2637, %vm2638
    %v2640 = vsel %vm2639, %v2632, %v2636
    %v2641 = vand.u32 2147483647, %v2526
    %vm2642 = vcmp.eq.f32.partialorder %v2641, 8.507059e+37
    %v2643 = vand.u32 %v2526, 2147483648
    %v2644 = vor.u32 1.1754944e-38, %v2643
    %v2645 = vsel %vm2642, %v2644, %v2640
    %v2646 = vmul.f32 1.0, %v2645
    %2647 = vmatpush.msra.mxu0 0.0
    %2648 = vmatpush.msra.mxu0 0.0
    %2649 = vmatpush.msra.mxu0 0.0
    %2650 = vmatpush.msra.mxu0 0.0
    %2651 = vmatpush.msra.mxu0 0.0
    %2652 = vmatpush.msra.mxu0 0.0
    %2653 = vmatpush.msra.mxu0 0.0
    %2654 = vmatpush.msra.mxu0 0.0
    %2655 = vmatpush.msra.mxu0 0.0
    %2656 = vmatpush.msra.mxu0 0.0
    %2657 = vmatpush.msra.mxu0 0.0
    %2658 = vmatpush.msra.mxu0 0.0
    %v2659 = vand.u32 %v2277, 4294901760
    %2660 = vmatpush.msra.mxu0 %v2659
    %v2661 = vand.u32 %v2275, 4294901760
    %2662 = vmatpush.msra.mxu0 %v2661
    %v2663 = vand.u32 %v2273, 4294901760
    %2664 = vmatpush.msra.mxu0 %v2663
    %v2665 = vand.u32 %v2271, 4294901760
    %2666 = vmatpush.msra.mxu0 %v2665
    %v2667 = vand.u32 %v486, 4294901760
    %v2668 = vsub.f32 %v486, %v2667
    %v2669 = vand.u32 %v2668, 4294901760
    %v2670 = vsub.f32 %v2668, %v2669
    %v2671 = vand.u32 %v2670, 4294901760
    %2672 = vmatmul.f32.gmra.mxu0 %v2671
    %v2673 = vpop.f32.mrf.mxu0
    %v2674 = vadd.f32 0.0, %v2673
    %v2675 = vand.u32 %v489, 4294901760
    %v2676 = vsub.f32 %v489, %v2675
    %v2677 = vand.u32 %v2676, 4294901760
    %v2678 = vsub.f32 %v2676, %v2677
    %v2679 = vand.u32 %v2678, 4294901760
    %2680 = vmatmul.f32.gmra.mxu0 %v2679
    %v2681 = vpop.f32.mrf.mxu0
    %v2682 = vadd.f32 0.0, %v2681
    %v2683 = vand.u32 %v492, 4294901760
    %v2684 = vsub.f32 %v492, %v2683
    %v2685 = vand.u32 %v2684, 4294901760
    %v2686 = vsub.f32 %v2684, %v2685
    %v2687 = vand.u32 %v2686, 4294901760
    %2688 = vmatmul.f32.gmra.mxu0 %v2687
    %v2689 = vpop.f32.mrf.mxu0
    %v2690 = vadd.f32 0.0, %v2689
    %v2691 = vand.u32 %v495, 4294901760
    %v2692 = vsub.f32 %v495, %v2691
    %v2693 = vand.u32 %v2692, 4294901760
    %v2694 = vsub.f32 %v2692, %v2693
    %v2695 = vand.u32 %v2694, 4294901760
    %2696 = vmatmul.f32.gmra.mxu0 %v2695
    %v2697 = vpop.f32.mrf.mxu0
    %v2698 = vadd.f32 0.0, %v2697
    %2699 = vdwg.mxu0
    %2700 = vmatpush.msra.mxu0 0.0
    %2701 = vmatpush.msra.mxu0 0.0
    %2702 = vmatpush.msra.mxu0 0.0
    %2703 = vmatpush.msra.mxu0 0.0
    %2704 = vmatpush.msra.mxu0 0.0
    %2705 = vmatpush.msra.mxu0 0.0
    %2706 = vmatpush.msra.mxu0 0.0
    %2707 = vmatpush.msra.mxu0 0.0
    %2708 = vmatpush.msra.mxu0 0.0
    %2709 = vmatpush.msra.mxu0 0.0
    %2710 = vmatpush.msra.mxu0 0.0
    %2711 = vmatpush.msra.mxu0 0.0
    %v2712 = vand.u32 %v2277, 4294901760
    %v2713 = vsub.f32 %v2277, %v2712
    %v2714 = vand.u32 %v2713, 4294901760
    %v2715 = vsub.f32 %v2713, %v2714
    %v2716 = vand.u32 %v2715, 4294901760
    %2717 = vmatpush.msra.mxu0 %v2716
    %v2718 = vand.u32 %v2275, 4294901760
    %v2719 = vsub.f32 %v2275, %v2718
    %v2720 = vand.u32 %v2719, 4294901760
    %v2721 = vsub.f32 %v2719, %v2720
    %v2722 = vand.u32 %v2721, 4294901760
    %2723 = vmatpush.msra.mxu0 %v2722
    %v2724 = vand.u32 %v2273, 4294901760
    %v2725 = vsub.f32 %v2273, %v2724
    %v2726 = vand.u32 %v2725, 4294901760
    %v2727 = vsub.f32 %v2725, %v2726
    %v2728 = vand.u32 %v2727, 4294901760
    %2729 = vmatpush.msra.mxu0 %v2728
    %v2730 = vand.u32 %v2271, 4294901760
    %v2731 = vsub.f32 %v2271, %v2730
    %v2732 = vand.u32 %v2731, 4294901760
    %v2733 = vsub.f32 %v2731, %v2732
    %v2734 = vand.u32 %v2733, 4294901760
    %2735 = vmatpush.msra.mxu0 %v2734
    %v2736 = vand.u32 %v486, 4294901760
    %2737 = vmatmul.f32.gmra.mxu0 %v2736
    %v2738 = vpop.f32.mrf.mxu0
    %v2739 = vadd.f32 %v2674, %v2738
    %v2740 = vand.u32 %v489, 4294901760
    %2741 = vmatmul.f32.gmra.mxu0 %v2740
    %v2742 = vpop.f32.mrf.mxu0
    %v2743 = vadd.f32 %v2682, %v2742
    %v2744 = vand.u32 %v492, 4294901760
    %2745 = vmatmul.f32.gmra.mxu0 %v2744
    %v2746 = vpop.f32.mrf.mxu0
    %v2747 = vadd.f32 %v2690, %v2746
    %v2748 = vand.u32 %v495, 4294901760
    %2749 = vmatmul.f32.gmra.mxu0 %v2748
    %v2750 = vpop.f32.mrf.mxu0
    %v2751 = vadd.f32 %v2698, %v2750
    %2752 = vdwg.mxu0
    %2753 = vmatpush.msra.mxu0 0.0
    %2754 = vmatpush.msra.mxu0 0.0
    %2755 = vmatpush.msra.mxu0 0.0
    %2756 = vmatpush.msra.mxu0 0.0
    %2757 = vmatpush.msra.mxu0 0.0
    %2758 = vmatpush.msra.mxu0 0.0
    %2759 = vmatpush.msra.mxu0 0.0
    %2760 = vmatpush.msra.mxu0 0.0
    %2761 = vmatpush.msra.mxu0 0.0
    %2762 = vmatpush.msra.mxu0 0.0
    %2763 = vmatpush.msra.mxu0 0.0
    %2764 = vmatpush.msra.mxu0 0.0
    %v2765 = vand.u32 %v2277, 4294901760
    %v2766 = vsub.f32 %v2277, %v2765
    %2767 = vmatpush.msra.mxu0 %v2766
    %v2768 = vand.u32 %v2275, 4294901760
    %v2769 = vsub.f32 %v2275, %v2768
    %2770 = vmatpush.msra.mxu0 %v2769
    %v2771 = vand.u32 %v2273, 4294901760
    %v2772 = vsub.f32 %v2273, %v2771
    %2773 = vmatpush.msra.mxu0 %v2772
    %v2774 = vand.u32 %v2271, 4294901760
    %v2775 = vsub.f32 %v2271, %v2774
    %2776 = vmatpush.msra.mxu0 %v2775
    %v2777 = vand.u32 %v486, 4294901760
    %v2778 = vsub.f32 %v486, %v2777
    %2779 = vmatmul.f32.gmra.mxu0 %v2778
    %v2780 = vpop.f32.mrf.mxu0
    %v2781 = vadd.f32 %v2739, %v2780
    %v2782 = vand.u32 %v489, 4294901760
    %v2783 = vsub.f32 %v489, %v2782
    %2784 = vmatmul.f32.gmra.mxu0 %v2783
    %v2785 = vpop.f32.mrf.mxu0
    %v2786 = vadd.f32 %v2743, %v2785
    %v2787 = vand.u32 %v492, 4294901760
    %v2788 = vsub.f32 %v492, %v2787
    %2789 = vmatmul.f32.gmra.mxu0 %v2788
    %v2790 = vpop.f32.mrf.mxu0
    %v2791 = vadd.f32 %v2747, %v2790
    %v2792 = vand.u32 %v495, 4294901760
    %v2793 = vsub.f32 %v495, %v2792
    %2794 = vmatmul.f32.gmra.mxu0 %v2793
    %v2795 = vpop.f32.mrf.mxu0
    %v2796 = vadd.f32 %v2751, %v2795
    %2797 = vdwg.mxu0
    %2798 = vmatpush.msra.mxu0 0.0
    %2799 = vmatpush.msra.mxu0 0.0
    %2800 = vmatpush.msra.mxu0 0.0
    %2801 = vmatpush.msra.mxu0 0.0
    %2802 = vmatpush.msra.mxu0 0.0
    %2803 = vmatpush.msra.mxu0 0.0
    %2804 = vmatpush.msra.mxu0 0.0
    %2805 = vmatpush.msra.mxu0 0.0
    %2806 = vmatpush.msra.mxu0 0.0
    %2807 = vmatpush.msra.mxu0 0.0
    %2808 = vmatpush.msra.mxu0 0.0
    %2809 = vmatpush.msra.mxu0 0.0
    %v2810 = vand.u32 %v2277, 4294901760
    %2811 = vmatpush.msra.mxu0 %v2810
    %v2812 = vand.u32 %v2275, 4294901760
    %2813 = vmatpush.msra.mxu0 %v2812
    %v2814 = vand.u32 %v2273, 4294901760
    %2815 = vmatpush.msra.mxu0 %v2814
    %v2816 = vand.u32 %v2271, 4294901760
    %2817 = vmatpush.msra.mxu0 %v2816
    %v2818 = vand.u32 %v486, 4294901760
    %v2819 = vsub.f32 %v486, %v2818
    %v2820 = vand.u32 %v2819, 4294901760
    %2821 = vmatmul.f32.gmra.mxu0 %v2820
    %v2822 = vpop.f32.mrf.mxu0
    %v2823 = vadd.f32 %v2781, %v2822
    %v2824 = vand.u32 %v489, 4294901760
    %v2825 = vsub.f32 %v489, %v2824
    %v2826 = vand.u32 %v2825, 4294901760
    %2827 = vmatmul.f32.gmra.mxu0 %v2826
    %v2828 = vpop.f32.mrf.mxu0
    %v2829 = vadd.f32 %v2786, %v2828
    %v2830 = vand.u32 %v492, 4294901760
    %v2831 = vsub.f32 %v492, %v2830
    %v2832 = vand.u32 %v2831, 4294901760
    %2833 = vmatmul.f32.gmra.mxu0 %v2832
    %v2834 = vpop.f32.mrf.mxu0
    %v2835 = vadd.f32 %v2791, %v2834
    %v2836 = vand.u32 %v495, 4294901760
    %v2837 = vsub.f32 %v495, %v2836
    %v2838 = vand.u32 %v2837, 4294901760
    %2839 = vmatmul.f32.gmra.mxu0 %v2838
    %v2840 = vpop.f32.mrf.mxu0
    %v2841 = vadd.f32 %v2796, %v2840
    %2842 = vdwg.mxu0
    %2843 = vmatpush.msra.mxu0 0.0
    %2844 = vmatpush.msra.mxu0 0.0
    %2845 = vmatpush.msra.mxu0 0.0
    %2846 = vmatpush.msra.mxu0 0.0
    %2847 = vmatpush.msra.mxu0 0.0
    %2848 = vmatpush.msra.mxu0 0.0
    %2849 = vmatpush.msra.mxu0 0.0
    %2850 = vmatpush.msra.mxu0 0.0
    %2851 = vmatpush.msra.mxu0 0.0
    %2852 = vmatpush.msra.mxu0 0.0
    %2853 = vmatpush.msra.mxu0 0.0
    %2854 = vmatpush.msra.mxu0 0.0
    %v2855 = vand.u32 %v2277, 4294901760
    %v2856 = vsub.f32 %v2277, %v2855
    %v2857 = vand.u32 %v2856, 4294901760
    %2858 = vmatpush.msra.mxu0 %v2857
    %v2859 = vand.u32 %v2275, 4294901760
    %v2860 = vsub.f32 %v2275, %v2859
    %v2861 = vand.u32 %v2860, 4294901760
    %2862 = vmatpush.msra.mxu0 %v2861
    %v2863 = vand.u32 %v2273, 4294901760
    %v2864 = vsub.f32 %v2273, %v2863
    %v2865 = vand.u32 %v2864, 4294901760
    %2866 = vmatpush.msra.mxu0 %v2865
    %v2867 = vand.u32 %v2271, 4294901760
    %v2868 = vsub.f32 %v2271, %v2867
    %v2869 = vand.u32 %v2868, 4294901760
    %2870 = vmatpush.msra.mxu0 %v2869
    %v2871 = vand.u32 %v486, 4294901760
    %2872 = vmatmul.f32.gmra.mxu0 %v2871
    %v2873 = vpop.f32.mrf.mxu0
    %v2874 = vadd.f32 %v2823, %v2873
    %v2875 = vand.u32 %v489, 4294901760
    %2876 = vmatmul.f32.gmra.mxu0 %v2875
    %v2877 = vpop.f32.mrf.mxu0
    %v2878 = vadd.f32 %v2829, %v2877
    %v2879 = vand.u32 %v492, 4294901760
    %2880 = vmatmul.f32.gmra.mxu0 %v2879
    %v2881 = vpop.f32.mrf.mxu0
    %v2882 = vadd.f32 %v2835, %v2881
    %v2883 = vand.u32 %v495, 4294901760
    %2884 = vmatmul.f32.gmra.mxu0 %v2883
    %v2885 = vpop.f32.mrf.mxu0
    %v2886 = vadd.f32 %v2841, %v2885
    %2887 = vdwg.mxu0
    %2888 = vmatpush.msra.mxu0 0.0
    %2889 = vmatpush.msra.mxu0 0.0
    %2890 = vmatpush.msra.mxu0 0.0
    %2891 = vmatpush.msra.mxu0 0.0
    %2892 = vmatpush.msra.mxu0 0.0
    %2893 = vmatpush.msra.mxu0 0.0
    %2894 = vmatpush.msra.mxu0 0.0
    %2895 = vmatpush.msra.mxu0 0.0
    %2896 = vmatpush.msra.mxu0 0.0
    %2897 = vmatpush.msra.mxu0 0.0
    %2898 = vmatpush.msra.mxu0 0.0
    %2899 = vmatpush.msra.mxu0 0.0
    %v2900 = vand.u32 %v2277, 4294901760
    %2901 = vmatpush.msra.mxu0 %v2900
    %v2902 = vand.u32 %v2275, 4294901760
    %2903 = vmatpush.msra.mxu0 %v2902
    %v2904 = vand.u32 %v2273, 4294901760
    %2905 = vmatpush.msra.mxu0 %v2904
    %v2906 = vand.u32 %v2271, 4294901760
    %2907 = vmatpush.msra.mxu0 %v2906
    %v2908 = vand.u32 %v486, 4294901760
    %2909 = vmatmul.f32.gmra.mxu0 %v2908
    %v2910 = vpop.f32.mrf.mxu0
    %v2911 = vadd.f32 %v2874, %v2910
    %v2912 = vand.u32 %v489, 4294901760
    %2913 = vmatmul.f32.gmra.mxu0 %v2912
    %v2914 = vpop.f32.mrf.mxu0
    %v2915 = vadd.f32 %v2878, %v2914
    %v2916 = vand.u32 %v492, 4294901760
    %2917 = vmatmul.f32.gmra.mxu0 %v2916
    %v2918 = vpop.f32.mrf.mxu0
    %v2919 = vadd.f32 %v2882, %v2918
    %v2920 = vand.u32 %v495, 4294901760
    %2921 = vmatmul.f32.gmra.mxu0 %v2920
    %v2922 = vpop.f32.mrf.mxu0
    %v2923 = vadd.f32 %v2886, %v2922
    %2924 = vdwg.mxu0
    %2925 = vmatpush.msra.mxu0 0.0
    %2926 = vmatpush.msra.mxu0 0.0
    %2927 = vmatpush.msra.mxu0 0.0
    %2928 = vmatpush.msra.mxu0 0.0
    %2929 = vmatpush.msra.mxu0 0.0
    %2930 = vmatpush.msra.mxu0 0.0
    %2931 = vmatpush.msra.mxu0 0.0
    %2932 = vmatpush.msra.mxu0 0.0
    %2933 = vmatpush.msra.mxu0 0.0
    %2934 = vmatpush.msra.mxu0 0.0
    %2935 = vmatpush.msra.mxu0 0.0
    %2936 = vmatpush.msra.mxu0 0.0
    %v2937 = vand.u32 %v2278, 4294901760
    %2938 = vmatpush.msra.mxu0 %v2937
    %v2939 = vand.u32 %v2276, 4294901760
    %2940 = vmatpush.msra.mxu0 %v2939
    %v2941 = vand.u32 %v2274, 4294901760
    %2942 = vmatpush.msra.mxu0 %v2941
    %v2943 = vand.u32 %v2272, 4294901760
    %2944 = vmatpush.msra.mxu0 %v2943
    %v2945 = vand.u32 %v486, 4294901760
    %v2946 = vsub.f32 %v486, %v2945
    %v2947 = vand.u32 %v2946, 4294901760
    %v2948 = vsub.f32 %v2946, %v2947
    %v2949 = vand.u32 %v2948, 4294901760
    %2950 = vmatmul.f32.gmra.mxu0 %v2949
    %v2951 = vpop.f32.mrf.mxu0
    %v2952 = vadd.f32 0.0, %v2951
    %v2953 = vand.u32 %v489, 4294901760
    %v2954 = vsub.f32 %v489, %v2953
    %v2955 = vand.u32 %v2954, 4294901760
    %v2956 = vsub.f32 %v2954, %v2955
    %v2957 = vand.u32 %v2956, 4294901760
    %2958 = vmatmul.f32.gmra.mxu0 %v2957
    %v2959 = vpop.f32.mrf.mxu0
    %v2960 = vadd.f32 0.0, %v2959
    %v2961 = vand.u32 %v492, 4294901760
    %v2962 = vsub.f32 %v492, %v2961
    %v2963 = vand.u32 %v2962, 4294901760
    %v2964 = vsub.f32 %v2962, %v2963
    %v2965 = vand.u32 %v2964, 4294901760
    %2966 = vmatmul.f32.gmra.mxu0 %v2965
    %v2967 = vpop.f32.mrf.mxu0
    %v2968 = vadd.f32 0.0, %v2967
    %v2969 = vand.u32 %v495, 4294901760
    %v2970 = vsub.f32 %v495, %v2969
    %v2971 = vand.u32 %v2970, 4294901760
    %v2972 = vsub.f32 %v2970, %v2971
    %v2973 = vand.u32 %v2972, 4294901760
    %2974 = vmatmul.f32.gmra.mxu0 %v2973
    %v2975 = vpop.f32.mrf.mxu0
    %v2976 = vadd.f32 0.0, %v2975
    %2977 = vdwg.mxu0
    %2978 = vmatpush.msra.mxu0 0.0
    %2979 = vmatpush.msra.mxu0 0.0
    %2980 = vmatpush.msra.mxu0 0.0
    %2981 = vmatpush.msra.mxu0 0.0
    %2982 = vmatpush.msra.mxu0 0.0
    %2983 = vmatpush.msra.mxu0 0.0
    %2984 = vmatpush.msra.mxu0 0.0
    %2985 = vmatpush.msra.mxu0 0.0
    %2986 = vmatpush.msra.mxu0 0.0
    %2987 = vmatpush.msra.mxu0 0.0
    %2988 = vmatpush.msra.mxu0 0.0
    %2989 = vmatpush.msra.mxu0 0.0
    %v2990 = vand.u32 %v2278, 4294901760
    %v2991 = vsub.f32 %v2278, %v2990
    %v2992 = vand.u32 %v2991, 4294901760
    %v2993 = vsub.f32 %v2991, %v2992
    %v2994 = vand.u32 %v2993, 4294901760
    %2995 = vmatpush.msra.mxu0 %v2994
    %v2996 = vand.u32 %v2276, 4294901760
    %v2997 = vsub.f32 %v2276, %v2996
    %v2998 = vand.u32 %v2997, 4294901760
    %v2999 = vsub.f32 %v2997, %v2998
    %v3000 = vand.u32 %v2999, 4294901760
    %3001 = vmatpush.msra.mxu0 %v3000
    %v3002 = vand.u32 %v2274, 4294901760
    %v3003 = vsub.f32 %v2274, %v3002
    %v3004 = vand.u32 %v3003, 4294901760
    %v3005 = vsub.f32 %v3003, %v3004
    %v3006 = vand.u32 %v3005, 4294901760
    %3007 = vmatpush.msra.mxu0 %v3006
    %v3008 = vand.u32 %v2272, 4294901760
    %v3009 = vsub.f32 %v2272, %v3008
    %v3010 = vand.u32 %v3009, 4294901760
    %v3011 = vsub.f32 %v3009, %v3010
    %v3012 = vand.u32 %v3011, 4294901760
    %3013 = vmatpush.msra.mxu0 %v3012
    %v3014 = vand.u32 %v486, 4294901760
    %3015 = vmatmul.f32.gmra.mxu0 %v3014
    %v3016 = vpop.f32.mrf.mxu0
    %v3017 = vadd.f32 %v2952, %v3016
    %v3018 = vand.u32 %v489, 4294901760
    %3019 = vmatmul.f32.gmra.mxu0 %v3018
    %v3020 = vpop.f32.mrf.mxu0
    %v3021 = vadd.f32 %v2960, %v3020
    %v3022 = vand.u32 %v492, 4294901760
    %3023 = vmatmul.f32.gmra.mxu0 %v3022
    %v3024 = vpop.f32.mrf.mxu0
    %v3025 = vadd.f32 %v2968, %v3024
    %v3026 = vand.u32 %v495, 4294901760
    %3027 = vmatmul.f32.gmra.mxu0 %v3026
    %v3028 = vpop.f32.mrf.mxu0
    %v3029 = vadd.f32 %v2976, %v3028
    %3030 = vdwg.mxu0
    %3031 = vmatpush.msra.mxu0 0.0
    %3032 = vmatpush.msra.mxu0 0.0
    %3033 = vmatpush.msra.mxu0 0.0
    %3034 = vmatpush.msra.mxu0 0.0
    %3035 = vmatpush.msra.mxu0 0.0
    %3036 = vmatpush.msra.mxu0 0.0
    %3037 = vmatpush.msra.mxu0 0.0
    %3038 = vmatpush.msra.mxu0 0.0
    %3039 = vmatpush.msra.mxu0 0.0
    %3040 = vmatpush.msra.mxu0 0.0
    %3041 = vmatpush.msra.mxu0 0.0
    %3042 = vmatpush.msra.mxu0 0.0
    %v3043 = vand.u32 %v2278, 4294901760
    %v3044 = vsub.f32 %v2278, %v3043
    %3045 = vmatpush.msra.mxu0 %v3044
    %v3046 = vand.u32 %v2276, 4294901760
    %v3047 = vsub.f32 %v2276, %v3046
    %3048 = vmatpush.msra.mxu0 %v3047
    %v3049 = vand.u32 %v2274, 4294901760
    %v3050 = vsub.f32 %v2274, %v3049
    %3051 = vmatpush.msra.mxu0 %v3050
    %v3052 = vand.u32 %v2272, 4294901760
    %v3053 = vsub.f32 %v2272, %v3052
    %3054 = vmatpush.msra.mxu0 %v3053
    %v3055 = vand.u32 %v486, 4294901760
    %v3056 = vsub.f32 %v486, %v3055
    %3057 = vmatmul.f32.gmra.mxu0 %v3056
    %v3058 = vpop.f32.mrf.mxu0
    %v3059 = vadd.f32 %v3017, %v3058
    %v3060 = vand.u32 %v489, 4294901760
    %v3061 = vsub.f32 %v489, %v3060
    %3062 = vmatmul.f32.gmra.mxu0 %v3061
    %v3063 = vpop.f32.mrf.mxu0
    %v3064 = vadd.f32 %v3021, %v3063
    %v3065 = vand.u32 %v492, 4294901760
    %v3066 = vsub.f32 %v492, %v3065
    %3067 = vmatmul.f32.gmra.mxu0 %v3066
    %v3068 = vpop.f32.mrf.mxu0
    %v3069 = vadd.f32 %v3025, %v3068
    %v3070 = vand.u32 %v495, 4294901760
    %v3071 = vsub.f32 %v495, %v3070
    %3072 = vmatmul.f32.gmra.mxu0 %v3071
    %v3073 = vpop.f32.mrf.mxu0
    %v3074 = vadd.f32 %v3029, %v3073
    %3075 = vdwg.mxu0
    %3076 = vmatpush.msra.mxu0 0.0
    %3077 = vmatpush.msra.mxu0 0.0
    %3078 = vmatpush.msra.mxu0 0.0
    %3079 = vmatpush.msra.mxu0 0.0
    %3080 = vmatpush.msra.mxu0 0.0
    %3081 = vmatpush.msra.mxu0 0.0
    %3082 = vmatpush.msra.mxu0 0.0
    %3083 = vmatpush.msra.mxu0 0.0
    %3084 = vmatpush.msra.mxu0 0.0
    %3085 = vmatpush.msra.mxu0 0.0
    %3086 = vmatpush.msra.mxu0 0.0
    %3087 = vmatpush.msra.mxu0 0.0
    %v3088 = vand.u32 %v2278, 4294901760
    %3089 = vmatpush.msra.mxu0 %v3088
    %v3090 = vand.u32 %v2276, 4294901760
    %3091 = vmatpush.msra.mxu0 %v3090
    %v3092 = vand.u32 %v2274, 4294901760
    %3093 = vmatpush.msra.mxu0 %v3092
    %v3094 = vand.u32 %v2272, 4294901760
    %3095 = vmatpush.msra.mxu0 %v3094
    %v3096 = vand.u32 %v486, 4294901760
    %v3097 = vsub.f32 %v486, %v3096
    %v3098 = vand.u32 %v3097, 4294901760
    %3099 = vmatmul.f32.gmra.mxu0 %v3098
    %v3100 = vpop.f32.mrf.mxu0
    %v3101 = vadd.f32 %v3059, %v3100
    %v3102 = vand.u32 %v489, 4294901760
    %v3103 = vsub.f32 %v489, %v3102
    %v3104 = vand.u32 %v3103, 4294901760
    %3105 = vmatmul.f32.gmra.mxu0 %v3104
    %v3106 = vpop.f32.mrf.mxu0
    %v3107 = vadd.f32 %v3064, %v3106
    %v3108 = vand.u32 %v492, 4294901760
    %v3109 = vsub.f32 %v492, %v3108
    %v3110 = vand.u32 %v3109, 4294901760
    %3111 = vmatmul.f32.gmra.mxu0 %v3110
    %v3112 = vpop.f32.mrf.mxu0
    %v3113 = vadd.f32 %v3069, %v3112
    %v3114 = vand.u32 %v495, 4294901760
    %v3115 = vsub.f32 %v495, %v3114
    %v3116 = vand.u32 %v3115, 4294901760
    %3117 = vmatmul.f32.gmra.mxu0 %v3116
    %v3118 = vpop.f32.mrf.mxu0
    %v3119 = vadd.f32 %v3074, %v3118
    %3120 = vdwg.mxu0
    %3121 = vmatpush.msra.mxu0 0.0
    %3122 = vmatpush.msra.mxu0 0.0
    %3123 = vmatpush.msra.mxu0 0.0
    %3124 = vmatpush.msra.mxu0 0.0
    %3125 = vmatpush.msra.mxu0 0.0
    %3126 = vmatpush.msra.mxu0 0.0
    %3127 = vmatpush.msra.mxu0 0.0
    %3128 = vmatpush.msra.mxu0 0.0
    %3129 = vmatpush.msra.mxu0 0.0
    %3130 = vmatpush.msra.mxu0 0.0
    %3131 = vmatpush.msra.mxu0 0.0
    %3132 = vmatpush.msra.mxu0 0.0
    %v3133 = vand.u32 %v2278, 4294901760
    %v3134 = vsub.f32 %v2278, %v3133
    %v3135 = vand.u32 %v3134, 4294901760
    %3136 = vmatpush.msra.mxu0 %v3135
    %v3137 = vand.u32 %v2276, 4294901760
    %v3138 = vsub.f32 %v2276, %v3137
    %v3139 = vand.u32 %v3138, 4294901760
    %3140 = vmatpush.msra.mxu0 %v3139
    %v3141 = vand.u32 %v2274, 4294901760
    %v3142 = vsub.f32 %v2274, %v3141
    %v3143 = vand.u32 %v3142, 4294901760
    %3144 = vmatpush.msra.mxu0 %v3143
    %v3145 = vand.u32 %v2272, 4294901760
    %v3146 = vsub.f32 %v2272, %v3145
    %v3147 = vand.u32 %v3146, 4294901760
    %3148 = vmatpush.msra.mxu0 %v3147
    %v3149 = vand.u32 %v486, 4294901760
    %3150 = vmatmul.f32.gmra.mxu0 %v3149
    %v3151 = vpop.f32.mrf.mxu0
    %v3152 = vadd.f32 %v3101, %v3151
    %v3153 = vand.u32 %v489, 4294901760
    %3154 = vmatmul.f32.gmra.mxu0 %v3153
    %v3155 = vpop.f32.mrf.mxu0
    %v3156 = vadd.f32 %v3107, %v3155
    %v3157 = vand.u32 %v492, 4294901760
    %3158 = vmatmul.f32.gmra.mxu0 %v3157
    %v3159 = vpop.f32.mrf.mxu0
    %v3160 = vadd.f32 %v3113, %v3159
    %v3161 = vand.u32 %v495, 4294901760
    %3162 = vmatmul.f32.gmra.mxu0 %v3161
    %v3163 = vpop.f32.mrf.mxu0
    %v3164 = vadd.f32 %v3119, %v3163
    %3165 = vdwg.mxu0
    %3166 = vmatpush.msra.mxu0 0.0
    %3167 = vmatpush.msra.mxu0 0.0
    %3168 = vmatpush.msra.mxu0 0.0
    %3169 = vmatpush.msra.mxu0 0.0
    %3170 = vmatpush.msra.mxu0 0.0
    %3171 = vmatpush.msra.mxu0 0.0
    %3172 = vmatpush.msra.mxu0 0.0
    %3173 = vmatpush.msra.mxu0 0.0
    %3174 = vmatpush.msra.mxu0 0.0
    %3175 = vmatpush.msra.mxu0 0.0
    %3176 = vmatpush.msra.mxu0 0.0
    %3177 = vmatpush.msra.mxu0 0.0
    %v3178 = vand.u32 %v2278, 4294901760
    %3179 = vmatpush.msra.mxu0 %v3178
    %v3180 = vand.u32 %v2276, 4294901760
    %3181 = vmatpush.msra.mxu0 %v3180
    %v3182 = vand.u32 %v2274, 4294901760
    %3183 = vmatpush.msra.mxu0 %v3182
    %v3184 = vand.u32 %v2272, 4294901760
    %3185 = vmatpush.msra.mxu0 %v3184
    %v3186 = vand.u32 %v486, 4294901760
    %3187 = vmatmul.f32.gmra.mxu0 %v3186
    %v3188 = vpop.f32.mrf.mxu0
    %v3189 = vadd.f32 %v3152, %v3188
    %v3190 = vand.u32 %v489, 4294901760
    %3191 = vmatmul.f32.gmra.mxu0 %v3190
    %v3192 = vpop.f32.mrf.mxu0
    %v3193 = vadd.f32 %v3156, %v3192
    %v3194 = vand.u32 %v492, 4294901760
    %3195 = vmatmul.f32.gmra.mxu0 %v3194
    %v3196 = vpop.f32.mrf.mxu0
    %v3197 = vadd.f32 %v3160, %v3196
    %v3198 = vand.u32 %v495, 4294901760
    %3199 = vmatmul.f32.gmra.mxu0 %v3198
    %v3200 = vpop.f32.mrf.mxu0
    %v3201 = vadd.f32 %v3164, %v3200
    %3202 = vdwg.mxu0
    %3203 = vmatpush.msra.mxu0 0.0
    %3204 = vmatpush.msra.mxu0 0.0
    %3205 = vmatpush.msra.mxu0 0.0
    %3206 = vmatpush.msra.mxu0 0.0
    %3207 = vmatpush.msra.mxu0 0.0
    %3208 = vmatpush.msra.mxu0 0.0
    %3209 = vmatpush.msra.mxu0 0.0
    %3210 = vmatpush.msra.mxu0 0.0
    %3211 = vmatpush.msra.mxu0 0.0
    %3212 = vmatpush.msra.mxu0 0.0
    %3213 = vmatpush.msra.mxu0 0.0
    %3214 = vmatpush.msra.mxu0 0.0
    %v3215 = vand.u32 %v2268, 4294901760
    %3216 = vmatpush.msra.mxu0 %v3215
    %v3217 = vand.u32 %v2266, 4294901760
    %3218 = vmatpush.msra.mxu0 %v3217
    %v3219 = vand.u32 %v2264, 4294901760
    %3220 = vmatpush.msra.mxu0 %v3219
    %v3221 = vand.u32 %v2262, 4294901760
    %3222 = vmatpush.msra.mxu0 %v3221
    %v3223 = vand.u32 %v1054, 4294901760
    %v3224 = vsub.f32 %v1054, %v3223
    %v3225 = vand.u32 %v3224, 4294901760
    %v3226 = vsub.f32 %v3224, %v3225
    %v3227 = vand.u32 %v3226, 4294901760
    %3228 = vmatmul.f32.gmra.mxu0 %v3227
    %v3229 = vpop.f32.mrf.mxu0
    %v3230 = vadd.f32 %v2911, %v3229
    %v3231 = vand.u32 %v1057, 4294901760
    %v3232 = vsub.f32 %v1057, %v3231
    %v3233 = vand.u32 %v3232, 4294901760
    %v3234 = vsub.f32 %v3232, %v3233
    %v3235 = vand.u32 %v3234, 4294901760
    %3236 = vmatmul.f32.gmra.mxu0 %v3235
    %v3237 = vpop.f32.mrf.mxu0
    %v3238 = vadd.f32 %v2915, %v3237
    %v3239 = vand.u32 %v1060, 4294901760
    %v3240 = vsub.f32 %v1060, %v3239
    %v3241 = vand.u32 %v3240, 4294901760
    %v3242 = vsub.f32 %v3240, %v3241
    %v3243 = vand.u32 %v3242, 4294901760
    %3244 = vmatmul.f32.gmra.mxu0 %v3243
    %v3245 = vpop.f32.mrf.mxu0
    %v3246 = vadd.f32 %v2919, %v3245
    %v3247 = vand.u32 %v1063, 4294901760
    %v3248 = vsub.f32 %v1063, %v3247
    %v3249 = vand.u32 %v3248, 4294901760
    %v3250 = vsub.f32 %v3248, %v3249
    %v3251 = vand.u32 %v3250, 4294901760
    %3252 = vmatmul.f32.gmra.mxu0 %v3251
    %v3253 = vpop.f32.mrf.mxu0
    %v3254 = vadd.f32 %v2923, %v3253
    %3255 = vdwg.mxu0
    %3256 = vmatpush.msra.mxu0 0.0
    %3257 = vmatpush.msra.mxu0 0.0
    %3258 = vmatpush.msra.mxu0 0.0
    %3259 = vmatpush.msra.mxu0 0.0
    %3260 = vmatpush.msra.mxu0 0.0
    %3261 = vmatpush.msra.mxu0 0.0
    %3262 = vmatpush.msra.mxu0 0.0
    %3263 = vmatpush.msra.mxu0 0.0
    %3264 = vmatpush.msra.mxu0 0.0
    %3265 = vmatpush.msra.mxu0 0.0
    %3266 = vmatpush.msra.mxu0 0.0
    %3267 = vmatpush.msra.mxu0 0.0
    %v3268 = vand.u32 %v2268, 4294901760
    %v3269 = vsub.f32 %v2268, %v3268
    %v3270 = vand.u32 %v3269, 4294901760
    %v3271 = vsub.f32 %v3269, %v3270
    %v3272 = vand.u32 %v3271, 4294901760
    %3273 = vmatpush.msra.mxu0 %v3272
    %v3274 = vand.u32 %v2266, 4294901760
    %v3275 = vsub.f32 %v2266, %v3274
    %v3276 = vand.u32 %v3275, 4294901760
    %v3277 = vsub.f32 %v3275, %v3276
    %v3278 = vand.u32 %v3277, 4294901760
    %3279 = vmatpush.msra.mxu0 %v3278
    %v3280 = vand.u32 %v2264, 4294901760
    %v3281 = vsub.f32 %v2264, %v3280
    %v3282 = vand.u32 %v3281, 4294901760
    %v3283 = vsub.f32 %v3281, %v3282
    %v3284 = vand.u32 %v3283, 4294901760
    %3285 = vmatpush.msra.mxu0 %v3284
    %v3286 = vand.u32 %v2262, 4294901760
    %v3287 = vsub.f32 %v2262, %v3286
    %v3288 = vand.u32 %v3287, 4294901760
    %v3289 = vsub.f32 %v3287, %v3288
    %v3290 = vand.u32 %v3289, 4294901760
    %3291 = vmatpush.msra.mxu0 %v3290
    %v3292 = vand.u32 %v1054, 4294901760
    %3293 = vmatmul.f32.gmra.mxu0 %v3292
    %v3294 = vpop.f32.mrf.mxu0
    %v3295 = vadd.f32 %v3230, %v3294
    %v3296 = vand.u32 %v1057, 4294901760
    %3297 = vmatmul.f32.gmra.mxu0 %v3296
    %v3298 = vpop.f32.mrf.mxu0
    %v3299 = vadd.f32 %v3238, %v3298
    %v3300 = vand.u32 %v1060, 4294901760
    %3301 = vmatmul.f32.gmra.mxu0 %v3300
    %v3302 = vpop.f32.mrf.mxu0
    %v3303 = vadd.f32 %v3246, %v3302
    %v3304 = vand.u32 %v1063, 4294901760
    %3305 = vmatmul.f32.gmra.mxu0 %v3304
    %v3306 = vpop.f32.mrf.mxu0
    %v3307 = vadd.f32 %v3254, %v3306
    %3308 = vdwg.mxu0
    %3309 = vmatpush.msra.mxu0 0.0
    %3310 = vmatpush.msra.mxu0 0.0
    %3311 = vmatpush.msra.mxu0 0.0
    %3312 = vmatpush.msra.mxu0 0.0
    %3313 = vmatpush.msra.mxu0 0.0
    %3314 = vmatpush.msra.mxu0 0.0
    %3315 = vmatpush.msra.mxu0 0.0
    %3316 = vmatpush.msra.mxu0 0.0
    %3317 = vmatpush.msra.mxu0 0.0
    %3318 = vmatpush.msra.mxu0 0.0
    %3319 = vmatpush.msra.mxu0 0.0
    %3320 = vmatpush.msra.mxu0 0.0
    %v3321 = vand.u32 %v2268, 4294901760
    %v3322 = vsub.f32 %v2268, %v3321
    %3323 = vmatpush.msra.mxu0 %v3322
    %v3324 = vand.u32 %v2266, 4294901760
    %v3325 = vsub.f32 %v2266, %v3324
    %3326 = vmatpush.msra.mxu0 %v3325
    %v3327 = vand.u32 %v2264, 4294901760
    %v3328 = vsub.f32 %v2264, %v3327
    %3329 = vmatpush.msra.mxu0 %v3328
    %v3330 = vand.u32 %v2262, 4294901760
    %v3331 = vsub.f32 %v2262, %v3330
    %3332 = vmatpush.msra.mxu0 %v3331
    %v3333 = vand.u32 %v1054, 4294901760
    %v3334 = vsub.f32 %v1054, %v3333
    %3335 = vmatmul.f32.gmra.mxu0 %v3334
    %v3336 = vpop.f32.mrf.mxu0
    %v3337 = vadd.f32 %v3295, %v3336
    %v3338 = vand.u32 %v1057, 4294901760
    %v3339 = vsub.f32 %v1057, %v3338
    %3340 = vmatmul.f32.gmra.mxu0 %v3339
    %v3341 = vpop.f32.mrf.mxu0
    %v3342 = vadd.f32 %v3299, %v3341
    %v3343 = vand.u32 %v1060, 4294901760
    %v3344 = vsub.f32 %v1060, %v3343
    %3345 = vmatmul.f32.gmra.mxu0 %v3344
    %v3346 = vpop.f32.mrf.mxu0
    %v3347 = vadd.f32 %v3303, %v3346
    %v3348 = vand.u32 %v1063, 4294901760
    %v3349 = vsub.f32 %v1063, %v3348
    %3350 = vmatmul.f32.gmra.mxu0 %v3349
    %v3351 = vpop.f32.mrf.mxu0
    %v3352 = vadd.f32 %v3307, %v3351
    %3353 = vdwg.mxu0
    %3354 = vmatpush.msra.mxu0 0.0
    %3355 = vmatpush.msra.mxu0 0.0
    %3356 = vmatpush.msra.mxu0 0.0
    %3357 = vmatpush.msra.mxu0 0.0
    %3358 = vmatpush.msra.mxu0 0.0
    %3359 = vmatpush.msra.mxu0 0.0
    %3360 = vmatpush.msra.mxu0 0.0
    %3361 = vmatpush.msra.mxu0 0.0
    %3362 = vmatpush.msra.mxu0 0.0
    %3363 = vmatpush.msra.mxu0 0.0
    %3364 = vmatpush.msra.mxu0 0.0
    %3365 = vmatpush.msra.mxu0 0.0
    %v3366 = vand.u32 %v2268, 4294901760
    %3367 = vmatpush.msra.mxu0 %v3366
    %v3368 = vand.u32 %v2266, 4294901760
    %3369 = vmatpush.msra.mxu0 %v3368
    %v3370 = vand.u32 %v2264, 4294901760
    %3371 = vmatpush.msra.mxu0 %v3370
    %v3372 = vand.u32 %v2262, 4294901760
    %3373 = vmatpush.msra.mxu0 %v3372
    %v3374 = vand.u32 %v1054, 4294901760
    %v3375 = vsub.f32 %v1054, %v3374
    %v3376 = vand.u32 %v3375, 4294901760
    %3377 = vmatmul.f32.gmra.mxu0 %v3376
    %v3378 = vpop.f32.mrf.mxu0
    %v3379 = vadd.f32 %v3337, %v3378
    %v3380 = vand.u32 %v1057, 4294901760
    %v3381 = vsub.f32 %v1057, %v3380
    %v3382 = vand.u32 %v3381, 4294901760
    %3383 = vmatmul.f32.gmra.mxu0 %v3382
    %v3384 = vpop.f32.mrf.mxu0
    %v3385 = vadd.f32 %v3342, %v3384
    %v3386 = vand.u32 %v1060, 4294901760
    %v3387 = vsub.f32 %v1060, %v3386
    %v3388 = vand.u32 %v3387, 4294901760
    %3389 = vmatmul.f32.gmra.mxu0 %v3388
    %v3390 = vpop.f32.mrf.mxu0
    %v3391 = vadd.f32 %v3347, %v3390
    %v3392 = vand.u32 %v1063, 4294901760
    %v3393 = vsub.f32 %v1063, %v3392
    %v3394 = vand.u32 %v3393, 4294901760
    %3395 = vmatmul.f32.gmra.mxu0 %v3394
    %v3396 = vpop.f32.mrf.mxu0
    %v3397 = vadd.f32 %v3352, %v3396
    %3398 = vdwg.mxu0
    %3399 = vmatpush.msra.mxu0 0.0
    %3400 = vmatpush.msra.mxu0 0.0
    %3401 = vmatpush.msra.mxu0 0.0
    %3402 = vmatpush.msra.mxu0 0.0
    %3403 = vmatpush.msra.mxu0 0.0
    %3404 = vmatpush.msra.mxu0 0.0
    %3405 = vmatpush.msra.mxu0 0.0
    %3406 = vmatpush.msra.mxu0 0.0
    %3407 = vmatpush.msra.mxu0 0.0
    %3408 = vmatpush.msra.mxu0 0.0
    %3409 = vmatpush.msra.mxu0 0.0
    %3410 = vmatpush.msra.mxu0 0.0
    %v3411 = vand.u32 %v2268, 4294901760
    %v3412 = vsub.f32 %v2268, %v3411
    %v3413 = vand.u32 %v3412, 4294901760
    %3414 = vmatpush.msra.mxu0 %v3413
    %v3415 = vand.u32 %v2266, 4294901760
    %v3416 = vsub.f32 %v2266, %v3415
    %v3417 = vand.u32 %v3416, 4294901760
    %3418 = vmatpush.msra.mxu0 %v3417
    %v3419 = vand.u32 %v2264, 4294901760
    %v3420 = vsub.f32 %v2264, %v3419
    %v3421 = vand.u32 %v3420, 4294901760
    %3422 = vmatpush.msra.mxu0 %v3421
    %v3423 = vand.u32 %v2262, 4294901760
    %v3424 = vsub.f32 %v2262, %v3423
    %v3425 = vand.u32 %v3424, 4294901760
    %3426 = vmatpush.msra.mxu0 %v3425
    %v3427 = vand.u32 %v1054, 4294901760
    %3428 = vmatmul.f32.gmra.mxu0 %v3427
    %v3429 = vpop.f32.mrf.mxu0
    %v3430 = vadd.f32 %v3379, %v3429
    %v3431 = vand.u32 %v1057, 4294901760
    %3432 = vmatmul.f32.gmra.mxu0 %v3431
    %v3433 = vpop.f32.mrf.mxu0
    %v3434 = vadd.f32 %v3385, %v3433
    %v3435 = vand.u32 %v1060, 4294901760
    %3436 = vmatmul.f32.gmra.mxu0 %v3435
    %v3437 = vpop.f32.mrf.mxu0
    %v3438 = vadd.f32 %v3391, %v3437
    %v3439 = vand.u32 %v1063, 4294901760
    %3440 = vmatmul.f32.gmra.mxu0 %v3439
    %v3441 = vpop.f32.mrf.mxu0
    %v3442 = vadd.f32 %v3397, %v3441
    %3443 = vdwg.mxu0
    %3444 = vmatpush.msra.mxu0 0.0
    %3445 = vmatpush.msra.mxu0 0.0
    %3446 = vmatpush.msra.mxu0 0.0
    %3447 = vmatpush.msra.mxu0 0.0
    %3448 = vmatpush.msra.mxu0 0.0
    %3449 = vmatpush.msra.mxu0 0.0
    %3450 = vmatpush.msra.mxu0 0.0
    %3451 = vmatpush.msra.mxu0 0.0
    %3452 = vmatpush.msra.mxu0 0.0
    %3453 = vmatpush.msra.mxu0 0.0
    %3454 = vmatpush.msra.mxu0 0.0
    %3455 = vmatpush.msra.mxu0 0.0
    %v3456 = vand.u32 %v2268, 4294901760
    %3457 = vmatpush.msra.mxu0 %v3456
    %v3458 = vand.u32 %v2266, 4294901760
    %3459 = vmatpush.msra.mxu0 %v3458
    %v3460 = vand.u32 %v2264, 4294901760
    %3461 = vmatpush.msra.mxu0 %v3460
    %v3462 = vand.u32 %v2262, 4294901760
    %3463 = vmatpush.msra.mxu0 %v3462
    %v3464 = vand.u32 %v1054, 4294901760
    %3465 = vmatmul.f32.gmra.mxu0 %v3464
    %v3466 = vpop.f32.mrf.mxu0
    %v3467 = vadd.f32 %v3430, %v3466
    %v3468 = vand.u32 %v1057, 4294901760
    %3469 = vmatmul.f32.gmra.mxu0 %v3468
    %v3470 = vpop.f32.mrf.mxu0
    %v3471 = vadd.f32 %v3434, %v3470
    %v3472 = vand.u32 %v1060, 4294901760
    %3473 = vmatmul.f32.gmra.mxu0 %v3472
    %v3474 = vpop.f32.mrf.mxu0
    %v3475 = vadd.f32 %v3438, %v3474
    %v3476 = vand.u32 %v1063, 4294901760
    %3477 = vmatmul.f32.gmra.mxu0 %v3476
    %v3478 = vpop.f32.mrf.mxu0
    %v3479 = vadd.f32 %v3442, %v3478
    %3480 = vdwg.mxu0
    %3481 = vmatpush.msra.mxu0 0.0
    %3482 = vmatpush.msra.mxu0 0.0
    %3483 = vmatpush.msra.mxu0 0.0
    %3484 = vmatpush.msra.mxu0 0.0
    %3485 = vmatpush.msra.mxu0 0.0
    %3486 = vmatpush.msra.mxu0 0.0
    %3487 = vmatpush.msra.mxu0 0.0
    %3488 = vmatpush.msra.mxu0 0.0
    %3489 = vmatpush.msra.mxu0 0.0
    %3490 = vmatpush.msra.mxu0 0.0
    %3491 = vmatpush.msra.mxu0 0.0
    %3492 = vmatpush.msra.mxu0 0.0
    %v3493 = vand.u32 %v2269, 4294901760
    %3494 = vmatpush.msra.mxu0 %v3493
    %v3495 = vand.u32 %v2267, 4294901760
    %3496 = vmatpush.msra.mxu0 %v3495
    %v3497 = vand.u32 %v2265, 4294901760
    %3498 = vmatpush.msra.mxu0 %v3497
    %v3499 = vand.u32 %v2263, 4294901760
    %3500 = vmatpush.msra.mxu0 %v3499
    %v3501 = vand.u32 %v1054, 4294901760
    %v3502 = vsub.f32 %v1054, %v3501
    %v3503 = vand.u32 %v3502, 4294901760
    %v3504 = vsub.f32 %v3502, %v3503
    %v3505 = vand.u32 %v3504, 4294901760
    %3506 = vmatmul.f32.gmra.mxu0 %v3505
    %v3507 = vpop.f32.mrf.mxu0
    %v3508 = vadd.f32 %v3189, %v3507
    %v3509 = vand.u32 %v1057, 4294901760
    %v3510 = vsub.f32 %v1057, %v3509
    %v3511 = vand.u32 %v3510, 4294901760
    %v3512 = vsub.f32 %v3510, %v3511
    %v3513 = vand.u32 %v3512, 4294901760
    %3514 = vmatmul.f32.gmra.mxu0 %v3513
    %v3515 = vpop.f32.mrf.mxu0
    %v3516 = vadd.f32 %v3193, %v3515
    %v3517 = vand.u32 %v1060, 4294901760
    %v3518 = vsub.f32 %v1060, %v3517
    %v3519 = vand.u32 %v3518, 4294901760
    %v3520 = vsub.f32 %v3518, %v3519
    %v3521 = vand.u32 %v3520, 4294901760
    %3522 = vmatmul.f32.gmra.mxu0 %v3521
    %v3523 = vpop.f32.mrf.mxu0
    %v3524 = vadd.f32 %v3197, %v3523
    %v3525 = vand.u32 %v1063, 4294901760
    %v3526 = vsub.f32 %v1063, %v3525
    %v3527 = vand.u32 %v3526, 4294901760
    %v3528 = vsub.f32 %v3526, %v3527
    %v3529 = vand.u32 %v3528, 4294901760
    %3530 = vmatmul.f32.gmra.mxu0 %v3529
    %v3531 = vpop.f32.mrf.mxu0
    %v3532 = vadd.f32 %v3201, %v3531
    %3533 = vdwg.mxu0
    %3534 = vmatpush.msra.mxu0 0.0
    %3535 = vmatpush.msra.mxu0 0.0
    %3536 = vmatpush.msra.mxu0 0.0
    %3537 = vmatpush.msra.mxu0 0.0
    %3538 = vmatpush.msra.mxu0 0.0
    %3539 = vmatpush.msra.mxu0 0.0
    %3540 = vmatpush.msra.mxu0 0.0
    %3541 = vmatpush.msra.mxu0 0.0
    %3542 = vmatpush.msra.mxu0 0.0
    %3543 = vmatpush.msra.mxu0 0.0
    %3544 = vmatpush.msra.mxu0 0.0
    %3545 = vmatpush.msra.mxu0 0.0
    %v3546 = vand.u32 %v2269, 4294901760
    %v3547 = vsub.f32 %v2269, %v3546
    %v3548 = vand.u32 %v3547, 4294901760
    %v3549 = vsub.f32 %v3547, %v3548
    %v3550 = vand.u32 %v3549, 4294901760
    %3551 = vmatpush.msra.mxu0 %v3550
    %v3552 = vand.u32 %v2267, 4294901760
    %v3553 = vsub.f32 %v2267, %v3552
    %v3554 = vand.u32 %v3553, 4294901760
    %v3555 = vsub.f32 %v3553, %v3554
    %v3556 = vand.u32 %v3555, 4294901760
    %3557 = vmatpush.msra.mxu0 %v3556
    %v3558 = vand.u32 %v2265, 4294901760
    %v3559 = vsub.f32 %v2265, %v3558
    %v3560 = vand.u32 %v3559, 4294901760
    %v3561 = vsub.f32 %v3559, %v3560
    %v3562 = vand.u32 %v3561, 4294901760
    %3563 = vmatpush.msra.mxu0 %v3562
    %v3564 = vand.u32 %v2263, 4294901760
    %v3565 = vsub.f32 %v2263, %v3564
    %v3566 = vand.u32 %v3565, 4294901760
    %v3567 = vsub.f32 %v3565, %v3566
    %v3568 = vand.u32 %v3567, 4294901760
    %3569 = vmatpush.msra.mxu0 %v3568
    %v3570 = vand.u32 %v1054, 4294901760
    %3571 = vmatmul.f32.gmra.mxu0 %v3570
    %v3572 = vpop.f32.mrf.mxu0
    %v3573 = vadd.f32 %v3508, %v3572
    %v3574 = vand.u32 %v1057, 4294901760
    %3575 = vmatmul.f32.gmra.mxu0 %v3574
    %v3576 = vpop.f32.mrf.mxu0
    %v3577 = vadd.f32 %v3516, %v3576
    %v3578 = vand.u32 %v1060, 4294901760
    %3579 = vmatmul.f32.gmra.mxu0 %v3578
    %v3580 = vpop.f32.mrf.mxu0
    %v3581 = vadd.f32 %v3524, %v3580
    %v3582 = vand.u32 %v1063, 4294901760
    %3583 = vmatmul.f32.gmra.mxu0 %v3582
    %v3584 = vpop.f32.mrf.mxu0
    %v3585 = vadd.f32 %v3532, %v3584
    %3586 = vdwg.mxu0
    %3587 = vmatpush.msra.mxu0 0.0
    %3588 = vmatpush.msra.mxu0 0.0
    %3589 = vmatpush.msra.mxu0 0.0
    %3590 = vmatpush.msra.mxu0 0.0
    %3591 = vmatpush.msra.mxu0 0.0
    %3592 = vmatpush.msra.mxu0 0.0
    %3593 = vmatpush.msra.mxu0 0.0
    %3594 = vmatpush.msra.mxu0 0.0
    %3595 = vmatpush.msra.mxu0 0.0
    %3596 = vmatpush.msra.mxu0 0.0
    %3597 = vmatpush.msra.mxu0 0.0
    %3598 = vmatpush.msra.mxu0 0.0
    %v3599 = vand.u32 %v2269, 4294901760
    %v3600 = vsub.f32 %v2269, %v3599
    %3601 = vmatpush.msra.mxu0 %v3600
    %v3602 = vand.u32 %v2267, 4294901760
    %v3603 = vsub.f32 %v2267, %v3602
    %3604 = vmatpush.msra.mxu0 %v3603
    %v3605 = vand.u32 %v2265, 4294901760
    %v3606 = vsub.f32 %v2265, %v3605
    %3607 = vmatpush.msra.mxu0 %v3606
    %v3608 = vand.u32 %v2263, 4294901760
    %v3609 = vsub.f32 %v2263, %v3608
    %3610 = vmatpush.msra.mxu0 %v3609
    %v3611 = vand.u32 %v1054, 4294901760
    %v3612 = vsub.f32 %v1054, %v3611
    %3613 = vmatmul.f32.gmra.mxu0 %v3612
    %v3614 = vpop.f32.mrf.mxu0
    %v3615 = vadd.f32 %v3573, %v3614
    %v3616 = vand.u32 %v1057, 4294901760
    %v3617 = vsub.f32 %v1057, %v3616
    %3618 = vmatmul.f32.gmra.mxu0 %v3617
    %v3619 = vpop.f32.mrf.mxu0
    %v3620 = vadd.f32 %v3577, %v3619
    %v3621 = vand.u32 %v1060, 4294901760
    %v3622 = vsub.f32 %v1060, %v3621
    %3623 = vmatmul.f32.gmra.mxu0 %v3622
    %v3624 = vpop.f32.mrf.mxu0
    %v3625 = vadd.f32 %v3581, %v3624
    %v3626 = vand.u32 %v1063, 4294901760
    %v3627 = vsub.f32 %v1063, %v3626
    %3628 = vmatmul.f32.gmra.mxu0 %v3627
    %v3629 = vpop.f32.mrf.mxu0
    %v3630 = vadd.f32 %v3585, %v3629
    %3631 = vdwg.mxu0
    %3632 = vmatpush.msra.mxu0 0.0
    %3633 = vmatpush.msra.mxu0 0.0
    %3634 = vmatpush.msra.mxu0 0.0
    %3635 = vmatpush.msra.mxu0 0.0
    %3636 = vmatpush.msra.mxu0 0.0
    %3637 = vmatpush.msra.mxu0 0.0
    %3638 = vmatpush.msra.mxu0 0.0
    %3639 = vmatpush.msra.mxu0 0.0
    %3640 = vmatpush.msra.mxu0 0.0
    %3641 = vmatpush.msra.mxu0 0.0
    %3642 = vmatpush.msra.mxu0 0.0
    %3643 = vmatpush.msra.mxu0 0.0
    %v3644 = vand.u32 %v2269, 4294901760
    %3645 = vmatpush.msra.mxu0 %v3644
    %v3646 = vand.u32 %v2267, 4294901760
    %3647 = vmatpush.msra.mxu0 %v3646
    %v3648 = vand.u32 %v2265, 4294901760
    %3649 = vmatpush.msra.mxu0 %v3648
    %v3650 = vand.u32 %v2263, 4294901760
    %3651 = vmatpush.msra.mxu0 %v3650
    %v3652 = vand.u32 %v1054, 4294901760
    %v3653 = vsub.f32 %v1054, %v3652
    %v3654 = vand.u32 %v3653, 4294901760
    %3655 = vmatmul.f32.gmra.mxu0 %v3654
    %v3656 = vpop.f32.mrf.mxu0
    %v3657 = vadd.f32 %v3615, %v3656
    %v3658 = vand.u32 %v1057, 4294901760
    %v3659 = vsub.f32 %v1057, %v3658
    %v3660 = vand.u32 %v3659, 4294901760
    %3661 = vmatmul.f32.gmra.mxu0 %v3660
    %v3662 = vpop.f32.mrf.mxu0
    %v3663 = vadd.f32 %v3620, %v3662
    %v3664 = vand.u32 %v1060, 4294901760
    %v3665 = vsub.f32 %v1060, %v3664
    %v3666 = vand.u32 %v3665, 4294901760
    %3667 = vmatmul.f32.gmra.mxu0 %v3666
    %v3668 = vpop.f32.mrf.mxu0
    %v3669 = vadd.f32 %v3625, %v3668
    %v3670 = vand.u32 %v1063, 4294901760
    %v3671 = vsub.f32 %v1063, %v3670
    %v3672 = vand.u32 %v3671, 4294901760
    %3673 = vmatmul.f32.gmra.mxu0 %v3672
    %v3674 = vpop.f32.mrf.mxu0
    %v3675 = vadd.f32 %v3630, %v3674
    %3676 = vdwg.mxu0
    %3677 = vmatpush.msra.mxu0 0.0
    %3678 = vmatpush.msra.mxu0 0.0
    %3679 = vmatpush.msra.mxu0 0.0
    %3680 = vmatpush.msra.mxu0 0.0
    %3681 = vmatpush.msra.mxu0 0.0
    %3682 = vmatpush.msra.mxu0 0.0
    %3683 = vmatpush.msra.mxu0 0.0
    %3684 = vmatpush.msra.mxu0 0.0
    %3685 = vmatpush.msra.mxu0 0.0
    %3686 = vmatpush.msra.mxu0 0.0
    %3687 = vmatpush.msra.mxu0 0.0
    %3688 = vmatpush.msra.mxu0 0.0
    %v3689 = vand.u32 %v2269, 4294901760
    %v3690 = vsub.f32 %v2269, %v3689
    %v3691 = vand.u32 %v3690, 4294901760
    %3692 = vmatpush.msra.mxu0 %v3691
    %v3693 = vand.u32 %v2267, 4294901760
    %v3694 = vsub.f32 %v2267, %v3693
    %v3695 = vand.u32 %v3694, 4294901760
    %3696 = vmatpush.msra.mxu0 %v3695
    %v3697 = vand.u32 %v2265, 4294901760
    %v3698 = vsub.f32 %v2265, %v3697
    %v3699 = vand.u32 %v3698, 4294901760
    %3700 = vmatpush.msra.mxu0 %v3699
    %v3701 = vand.u32 %v2263, 4294901760
    %v3702 = vsub.f32 %v2263, %v3701
    %v3703 = vand.u32 %v3702, 4294901760
    %3704 = vmatpush.msra.mxu0 %v3703
    %v3705 = vand.u32 %v1054, 4294901760
    %3706 = vmatmul.f32.gmra.mxu0 %v3705
    %v3707 = vpop.f32.mrf.mxu0
    %v3708 = vadd.f32 %v3657, %v3707
    %v3709 = vand.u32 %v1057, 4294901760
    %3710 = vmatmul.f32.gmra.mxu0 %v3709
    %v3711 = vpop.f32.mrf.mxu0
    %v3712 = vadd.f32 %v3663, %v3711
    %v3713 = vand.u32 %v1060, 4294901760
    %3714 = vmatmul.f32.gmra.mxu0 %v3713
    %v3715 = vpop.f32.mrf.mxu0
    %v3716 = vadd.f32 %v3669, %v3715
    %v3717 = vand.u32 %v1063, 4294901760
    %3718 = vmatmul.f32.gmra.mxu0 %v3717
    %v3719 = vpop.f32.mrf.mxu0
    %v3720 = vadd.f32 %v3675, %v3719
    %3721 = vdwg.mxu0
    %3722 = vmatpush.msra.mxu0 0.0
    %3723 = vmatpush.msra.mxu0 0.0
    %3724 = vmatpush.msra.mxu0 0.0
    %3725 = vmatpush.msra.mxu0 0.0
    %3726 = vmatpush.msra.mxu0 0.0
    %3727 = vmatpush.msra.mxu0 0.0
    %3728 = vmatpush.msra.mxu0 0.0
    %3729 = vmatpush.msra.mxu0 0.0
    %3730 = vmatpush.msra.mxu0 0.0
    %3731 = vmatpush.msra.mxu0 0.0
    %3732 = vmatpush.msra.mxu0 0.0
    %3733 = vmatpush.msra.mxu0 0.0
    %v3734 = vand.u32 %v2269, 4294901760
    %3735 = vmatpush.msra.mxu0 %v3734
    %v3736 = vand.u32 %v2267, 4294901760
    %3737 = vmatpush.msra.mxu0 %v3736
    %v3738 = vand.u32 %v2265, 4294901760
    %3739 = vmatpush.msra.mxu0 %v3738
    %v3740 = vand.u32 %v2263, 4294901760
    %3741 = vmatpush.msra.mxu0 %v3740
    %v3742 = vand.u32 %v1054, 4294901760
    %3743 = vmatmul.f32.gmra.mxu0 %v3742
    %v3744 = vpop.f32.mrf.mxu0
    %v3745 = vadd.f32 %v3708, %v3744
    %v3746 = vand.u32 %v1057, 4294901760
    %3747 = vmatmul.f32.gmra.mxu0 %v3746
    %v3748 = vpop.f32.mrf.mxu0
    %v3749 = vadd.f32 %v3712, %v3748
    %v3750 = vand.u32 %v1060, 4294901760
    %3751 = vmatmul.f32.gmra.mxu0 %v3750
    %v3752 = vpop.f32.mrf.mxu0
    %v3753 = vadd.f32 %v3716, %v3752
    %v3754 = vand.u32 %v1063, 4294901760
    %3755 = vmatmul.f32.gmra.mxu0 %v3754
    %v3756 = vpop.f32.mrf.mxu0
    %v3757 = vadd.f32 %v3720, %v3756
    %3758 = vdwg.mxu0
    %v3759 = vadd.f32 %v3467, %v1624
    %v3760 = vadd.f32 %v3745, %v1624
    %v3761 = vadd.f32 %v3471, %v1629
    %v3762 = vadd.f32 %v3749, %v1629
    %v3763 = vadd.f32 %v3475, %v1634
    %v3764 = vadd.f32 %v3753, %v1634
    %v3765 = vadd.f32 %v3479, %v1639
    %v3766 = vadd.f32 %v3757, %v1639
    %v3767 = vmul.f32 %v3759, 0.5
    %v3768 = vmul.f32 %v3760, 0.5
    %v3769 = vmul.f32 %v3761, 0.5
    %v3770 = vmul.f32 %v3762, 0.5
    %v3771 = vmul.f32 %v3763, 0.5
    %v3772 = vmul.f32 %v3764, 0.5
    %v3773 = vmul.f32 %v3765, 0.5
    %v3774 = vmul.f32 %v3766, 0.5
    %v3775 = vmul.f32 %v3759, 0.044715
    %v3776 = vmul.f32 %v3760, 0.044715
    %v3777 = vmul.f32 %v3761, 0.044715
    %v3778 = vmul.f32 %v3762, 0.044715
    %v3779 = vmul.f32 %v3763, 0.044715
    %v3780 = vmul.f32 %v3764, 0.044715
    %v3781 = vmul.f32 %v3765, 0.044715
    %v3782 = vmul.f32 %v3766, 0.044715
    %v3783 = vmul.f32 %v3775, %v3759
    %v3784 = vmul.f32 %v3776, %v3760
    %v3785 = vmul.f32 %v3777, %v3761
    %v3786 = vmul.f32 %v3778, %v3762
    %v3787 = vmul.f32 %v3779, %v3763
    %v3788 = vmul.f32 %v3780, %v3764
    %v3789 = vmul.f32 %v3781, %v3765
    %v3790 = vmul.f32 %v3782, %v3766
    %v3791 = vmul.f32 %v3783, %v3759
    %v3792 = vmul.f32 %v3784, %v3760
    %v3793 = vmul.f32 %v3785, %v3761
    %v3794 = vmul.f32 %v3786, %v3762
    %v3795 = vmul.f32 %v3787, %v3763
    %v3796 = vmul.f32 %v3788, %v3764
    %v3797 = vmul.f32 %v3789, %v3765
    %v3798 = vmul.f32 %v3790, %v3766
    %v3799 = vadd.f32 %v3759, %v3791
    %v3800 = vadd.f32 %v3760, %v3792
    %v3801 = vadd.f32 %v3761, %v3793
    %v3802 = vadd.f32 %v3762, %v3794
    %v3803 = vadd.f32 %v3763, %v3795
    %v3804 = vadd.f32 %v3764, %v3796
    %v3805 = vadd.f32 %v3765, %v3797
    %v3806 = vadd.f32 %v3766, %v3798
    %v3807 = vmul.f32 %v3799, 0.7978846
    %v3808 = vmul.f32 %v3800, 0.7978846
    %v3809 = vmul.f32 %v3801, 0.7978846
    %v3810 = vmul.f32 %v3802, 0.7978846
    %v3811 = vmul.f32 %v3803, 0.7978846
    %v3812 = vmul.f32 %v3804, 0.7978846
    %v3813 = vmul.f32 %v3805, 0.7978846
    %v3814 = vmul.f32 %v3806, 0.7978846
    %v3815 = vtanh.pop %v3807
    %v3816 = vtanh.pop %v3808
    %v3817 = vtanh.pop %v3809
    %v3818 = vtanh.pop %v3810
    %v3819 = vtanh.pop %v3811
    %v3820 = vtanh.pop %v3812
    %v3821 = vtanh.pop %v3813
    %v3822 = vtanh.pop %v3814
    %v3823 = vadd.f32 %v3815, 1.0
    %v3824 = vadd.f32 %v3816, 1.0
    %v3825 = vadd.f32 %v3817, 1.0
    %v3826 = vadd.f32 %v3818, 1.0
    %v3827 = vadd.f32 %v3819, 1.0
    %v3828 = vadd.f32 %v3820, 1.0
    %v3829 = vadd.f32 %v3821, 1.0
    %v3830 = vadd.f32 %v3822, 1.0
    %v3831 = vmul.f32 %v3767, %v3823
    %v3832 = vmul.f32 %v3768, %v3824
    %v3833 = vmul.f32 %v3769, %v3825
    %v3834 = vmul.f32 %v3770, %v3826
    %v3835 = vmul.f32 %v3771, %v3827
    %v3836 = vmul.f32 %v3772, %v3828
    %v3837 = vmul.f32 %v3773, %v3829
    %v3838 = vmul.f32 %v3774, %v3830
    %3839 = vmatpush.msra.mxu0 0.0
    %3840 = vmatpush.msra.mxu0 0.0
    %3841 = vmatpush.msra.mxu0 0.0
    %3842 = vmatpush.msra.mxu0 0.0
    %3843 = vmatpush.msra.mxu0 0.0
    %3844 = vmatpush.msra.mxu0 0.0
    %3845 = vmatpush.msra.mxu0 0.0
    %3846 = vmatpush.msra.mxu0 0.0
    %3847 = vmatpush.msra.mxu0 0.0
    %3848 = vmatpush.msra.mxu0 0.0
    %3849 = vmatpush.msra.mxu0 0.0
    %3850 = vmatpush.msra.mxu0 0.0
    %v3851 = vand.u32 %v3837, 4294901760
    %3852 = vmatpush.msra.mxu0 %v3851
    %v3853 = vand.u32 %v3835, 4294901760
    %3854 = vmatpush.msra.mxu0 %v3853
    %v3855 = vand.u32 %v3833, 4294901760
    %3856 = vmatpush.msra.mxu0 %v3855
    %v3857 = vand.u32 %v3831, 4294901760
    %3858 = vmatpush.msra.mxu0 %v3857
    %v3859 = vand.u32 %v1727, 4294901760
    %v3860 = vsub.f32 %v1727, %v3859
    %v3861 = vand.u32 %v3860, 4294901760
    %v3862 = vsub.f32 %v3860, %v3861
    %v3863 = vand.u32 %v3862, 4294901760
    %3864 = vmatmul.f32.gmra.mxu0 %v3863
    %v3865 = vpop.f32.mrf.mxu0
    %v3866 = vadd.f32 %v1724, %v3865
    %3867 = vdwg.mxu0
    %3868 = vmatpush.msra.mxu0 0.0
    %3869 = vmatpush.msra.mxu0 0.0
    %3870 = vmatpush.msra.mxu0 0.0
    %3871 = vmatpush.msra.mxu0 0.0
    %3872 = vmatpush.msra.mxu0 0.0
    %3873 = vmatpush.msra.mxu0 0.0
    %3874 = vmatpush.msra.mxu0 0.0
    %3875 = vmatpush.msra.mxu0 0.0
    %3876 = vmatpush.msra.mxu0 0.0
    %3877 = vmatpush.msra.mxu0 0.0
    %3878 = vmatpush.msra.mxu0 0.0
    %3879 = vmatpush.msra.mxu0 0.0
    %v3880 = vand.u32 %v3837, 4294901760
    %v3881 = vsub.f32 %v3837, %v3880
    %v3882 = vand.u32 %v3881, 4294901760
    %v3883 = vsub.f32 %v3881, %v3882
    %v3884 = vand.u32 %v3883, 4294901760
    %3885 = vmatpush.msra.mxu0 %v3884
    %v3886 = vand.u32 %v3835, 4294901760
    %v3887 = vsub.f32 %v3835, %v3886
    %v3888 = vand.u32 %v3887, 4294901760
    %v3889 = vsub.f32 %v3887, %v3888
    %v3890 = vand.u32 %v3889, 4294901760
    %3891 = vmatpush.msra.mxu0 %v3890
    %v3892 = vand.u32 %v3833, 4294901760
    %v3893 = vsub.f32 %v3833, %v3892
    %v3894 = vand.u32 %v3893, 4294901760
    %v3895 = vsub.f32 %v3893, %v3894
    %v3896 = vand.u32 %v3895, 4294901760
    %3897 = vmatpush.msra.mxu0 %v3896
    %v3898 = vand.u32 %v3831, 4294901760
    %v3899 = vsub.f32 %v3831, %v3898
    %v3900 = vand.u32 %v3899, 4294901760
    %v3901 = vsub.f32 %v3899, %v3900
    %v3902 = vand.u32 %v3901, 4294901760
    %3903 = vmatpush.msra.mxu0 %v3902
    %v3904 = vand.u32 %v1727, 4294901760
    %3905 = vmatmul.f32.gmra.mxu0 %v3904
    %v3906 = vpop.f32.mrf.mxu0
    %v3907 = vadd.f32 %v3866, %v3906
    %3908 = vdwg.mxu0
    %3909 = vmatpush.msra.mxu0 0.0
    %3910 = vmatpush.msra.mxu0 0.0
    %3911 = vmatpush.msra.mxu0 0.0
    %3912 = vmatpush.msra.mxu0 0.0
    %3913 = vmatpush.msra.mxu0 0.0
    %3914 = vmatpush.msra.mxu0 0.0
    %3915 = vmatpush.msra.mxu0 0.0
    %3916 = vmatpush.msra.mxu0 0.0
    %3917 = vmatpush.msra.mxu0 0.0
    %3918 = vmatpush.msra.mxu0 0.0
    %3919 = vmatpush.msra.mxu0 0.0
    %3920 = vmatpush.msra.mxu0 0.0
    %v3921 = vand.u32 %v3837, 4294901760
    %v3922 = vsub.f32 %v3837, %v3921
    %3923 = vmatpush.msra.mxu0 %v3922
    %v3924 = vand.u32 %v3835, 4294901760
    %v3925 = vsub.f32 %v3835, %v3924
    %3926 = vmatpush.msra.mxu0 %v3925
    %v3927 = vand.u32 %v3833, 4294901760
    %v3928 = vsub.f32 %v3833, %v3927
    %3929 = vmatpush.msra.mxu0 %v3928
    %v3930 = vand.u32 %v3831, 4294901760
    %v3931 = vsub.f32 %v3831, %v3930
    %3932 = vmatpush.msra.mxu0 %v3931
    %v3933 = vand.u32 %v1727, 4294901760
    %v3934 = vsub.f32 %v1727, %v3933
    %3935 = vmatmul.f32.gmra.mxu0 %v3934
    %v3936 = vpop.f32.mrf.mxu0
    %v3937 = vadd.f32 %v3907, %v3936
    %3938 = vdwg.mxu0
    %3939 = vmatpush.msra.mxu0 0.0
    %3940 = vmatpush.msra.mxu0 0.0
    %3941 = vmatpush.msra.mxu0 0.0
    %3942 = vmatpush.msra.mxu0 0.0
    %3943 = vmatpush.msra.mxu0 0.0
    %3944 = vmatpush.msra.mxu0 0.0
    %3945 = vmatpush.msra.mxu0 0.0
    %3946 = vmatpush.msra.mxu0 0.0
    %3947 = vmatpush.msra.mxu0 0.0
    %3948 = vmatpush.msra.mxu0 0.0
    %3949 = vmatpush.msra.mxu0 0.0
    %3950 = vmatpush.msra.mxu0 0.0
    %v3951 = vand.u32 %v3837, 4294901760
    %3952 = vmatpush.msra.mxu0 %v3951
    %v3953 = vand.u32 %v3835, 4294901760
    %3954 = vmatpush.msra.mxu0 %v3953
    %v3955 = vand.u32 %v3833, 4294901760
    %3956 = vmatpush.msra.mxu0 %v3955
    %v3957 = vand.u32 %v3831, 4294901760
    %3958 = vmatpush.msra.mxu0 %v3957
    %v3959 = vand.u32 %v1727, 4294901760
    %v3960 = vsub.f32 %v1727, %v3959
    %v3961 = vand.u32 %v3960, 4294901760
    %3962 = vmatmul.f32.gmra.mxu0 %v3961
    %v3963 = vpop.f32.mrf.mxu0
    %v3964 = vadd.f32 %v3937, %v3963
    %3965 = vdwg.mxu0
    %3966 = vmatpush.msra.mxu0 0.0
    %3967 = vmatpush.msra.mxu0 0.0
    %3968 = vmatpush.msra.mxu0 0.0
    %3969 = vmatpush.msra.mxu0 0.0
    %3970 = vmatpush.msra.mxu0 0.0
    %3971 = vmatpush.msra.mxu0 0.0
    %3972 = vmatpush.msra.mxu0 0.0
    %3973 = vmatpush.msra.mxu0 0.0
    %3974 = vmatpush.msra.mxu0 0.0
    %3975 = vmatpush.msra.mxu0 0.0
    %3976 = vmatpush.msra.mxu0 0.0
    %3977 = vmatpush.msra.mxu0 0.0
    %v3978 = vand.u32 %v3837, 4294901760
    %v3979 = vsub.f32 %v3837, %v3978
    %v3980 = vand.u32 %v3979, 4294901760
    %3981 = vmatpush.msra.mxu0 %v3980
    %v3982 = vand.u32 %v3835, 4294901760
    %v3983 = vsub.f32 %v3835, %v3982
    %v3984 = vand.u32 %v3983, 4294901760
    %3985 = vmatpush.msra.mxu0 %v3984
    %v3986 = vand.u32 %v3833, 4294901760
    %v3987 = vsub.f32 %v3833, %v3986
    %v3988 = vand.u32 %v3987, 4294901760
    %3989 = vmatpush.msra.mxu0 %v3988
    %v3990 = vand.u32 %v3831, 4294901760
    %v3991 = vsub.f32 %v3831, %v3990
    %v3992 = vand.u32 %v3991, 4294901760
    %3993 = vmatpush.msra.mxu0 %v3992
    %v3994 = vand.u32 %v1727, 4294901760
    %3995 = vmatmul.f32.gmra.mxu0 %v3994
    %v3996 = vpop.f32.mrf.mxu0
    %v3997 = vadd.f32 %v3964, %v3996
    %3998 = vdwg.mxu0
    %3999 = vmatpush.msra.mxu0 0.0
    %4000 = vmatpush.msra.mxu0 0.0
    %4001 = vmatpush.msra.mxu0 0.0
    %4002 = vmatpush.msra.mxu0 0.0
    %4003 = vmatpush.msra.mxu0 0.0
    %4004 = vmatpush.msra.mxu0 0.0
    %4005 = vmatpush.msra.mxu0 0.0
    %4006 = vmatpush.msra.mxu0 0.0
    %4007 = vmatpush.msra.mxu0 0.0
    %4008 = vmatpush.msra.mxu0 0.0
    %4009 = vmatpush.msra.mxu0 0.0
    %4010 = vmatpush.msra.mxu0 0.0
    %v4011 = vand.u32 %v3837, 4294901760
    %4012 = vmatpush.msra.mxu0 %v4011
    %v4013 = vand.u32 %v3835, 4294901760
    %4014 = vmatpush.msra.mxu0 %v4013
    %v4015 = vand.u32 %v3833, 4294901760
    %4016 = vmatpush.msra.mxu0 %v4015
    %v4017 = vand.u32 %v3831, 4294901760
    %4018 = vmatpush.msra.mxu0 %v4017
    %v4019 = vand.u32 %v1727, 4294901760
    %4020 = vmatmul.f32.gmra.mxu0 %v4019
    %v4021 = vpop.f32.mrf.mxu0
    %v4022 = vadd.f32 %v3997, %v4021
    %4023 = vdwg.mxu0
    %4024 = vmatpush.msra.mxu0 0.0
    %4025 = vmatpush.msra.mxu0 0.0
    %4026 = vmatpush.msra.mxu0 0.0
    %4027 = vmatpush.msra.mxu0 0.0
    %4028 = vmatpush.msra.mxu0 0.0
    %4029 = vmatpush.msra.mxu0 0.0
    %4030 = vmatpush.msra.mxu0 0.0
    %4031 = vmatpush.msra.mxu0 0.0
    %4032 = vmatpush.msra.mxu0 0.0
    %4033 = vmatpush.msra.mxu0 0.0
    %4034 = vmatpush.msra.mxu0 0.0
    %4035 = vmatpush.msra.mxu0 0.0
    %v4036 = vand.u32 %v3838, 4294901760
    %4037 = vmatpush.msra.mxu0 %v4036
    %v4038 = vand.u32 %v3836, 4294901760
    %4039 = vmatpush.msra.mxu0 %v4038
    %v4040 = vand.u32 %v3834, 4294901760
    %4041 = vmatpush.msra.mxu0 %v4040
    %v4042 = vand.u32 %v3832, 4294901760
    %4043 = vmatpush.msra.mxu0 %v4042
    %v4044 = vand.u32 %v1727, 4294901760
    %v4045 = vsub.f32 %v1727, %v4044
    %v4046 = vand.u32 %v4045, 4294901760
    %v4047 = vsub.f32 %v4045, %v4046
    %v4048 = vand.u32 %v4047, 4294901760
    %4049 = vmatmul.f32.gmra.mxu0 %v4048
    %v4050 = vpop.f32.mrf.mxu0
    %v4051 = vadd.f32 %v1724, %v4050
    %4052 = vdwg.mxu0
    %4053 = vmatpush.msra.mxu0 0.0
    %4054 = vmatpush.msra.mxu0 0.0
    %4055 = vmatpush.msra.mxu0 0.0
    %4056 = vmatpush.msra.mxu0 0.0
    %4057 = vmatpush.msra.mxu0 0.0
    %4058 = vmatpush.msra.mxu0 0.0
    %4059 = vmatpush.msra.mxu0 0.0
    %4060 = vmatpush.msra.mxu0 0.0
    %4061 = vmatpush.msra.mxu0 0.0
    %4062 = vmatpush.msra.mxu0 0.0
    %4063 = vmatpush.msra.mxu0 0.0
    %4064 = vmatpush.msra.mxu0 0.0
    %v4065 = vand.u32 %v3838, 4294901760
    %v4066 = vsub.f32 %v3838, %v4065
    %v4067 = vand.u32 %v4066, 4294901760
    %v4068 = vsub.f32 %v4066, %v4067
    %v4069 = vand.u32 %v4068, 4294901760
    %4070 = vmatpush.msra.mxu0 %v4069
    %v4071 = vand.u32 %v3836, 4294901760
    %v4072 = vsub.f32 %v3836, %v4071
    %v4073 = vand.u32 %v4072, 4294901760
    %v4074 = vsub.f32 %v4072, %v4073
    %v4075 = vand.u32 %v4074, 4294901760
    %4076 = vmatpush.msra.mxu0 %v4075
    %v4077 = vand.u32 %v3834, 4294901760
    %v4078 = vsub.f32 %v3834, %v4077
    %v4079 = vand.u32 %v4078, 4294901760
    %v4080 = vsub.f32 %v4078, %v4079
    %v4081 = vand.u32 %v4080, 4294901760
    %4082 = vmatpush.msra.mxu0 %v4081
    %v4083 = vand.u32 %v3832, 4294901760
    %v4084 = vsub.f32 %v3832, %v4083
    %v4085 = vand.u32 %v4084, 4294901760
    %v4086 = vsub.f32 %v4084, %v4085
    %v4087 = vand.u32 %v4086, 4294901760
    %4088 = vmatpush.msra.mxu0 %v4087
    %v4089 = vand.u32 %v1727, 4294901760
    %4090 = vmatmul.f32.gmra.mxu0 %v4089
    %v4091 = vpop.f32.mrf.mxu0
    %v4092 = vadd.f32 %v4051, %v4091
    %4093 = vdwg.mxu0
    %4094 = vmatpush.msra.mxu0 0.0
    %4095 = vmatpush.msra.mxu0 0.0
    %4096 = vmatpush.msra.mxu0 0.0
    %4097 = vmatpush.msra.mxu0 0.0
    %4098 = vmatpush.msra.mxu0 0.0
    %4099 = vmatpush.msra.mxu0 0.0
    %4100 = vmatpush.msra.mxu0 0.0
    %4101 = vmatpush.msra.mxu0 0.0
    %4102 = vmatpush.msra.mxu0 0.0
    %4103 = vmatpush.msra.mxu0 0.0
    %4104 = vmatpush.msra.mxu0 0.0
    %4105 = vmatpush.msra.mxu0 0.0
    %v4106 = vand.u32 %v3838, 4294901760
    %v4107 = vsub.f32 %v3838, %v4106
    %4108 = vmatpush.msra.mxu0 %v4107
    %v4109 = vand.u32 %v3836, 4294901760
    %v4110 = vsub.f32 %v3836, %v4109
    %4111 = vmatpush.msra.mxu0 %v4110
    %v4112 = vand.u32 %v3834, 4294901760
    %v4113 = vsub.f32 %v3834, %v4112
    %4114 = vmatpush.msra.mxu0 %v4113
    %v4115 = vand.u32 %v3832, 4294901760
    %v4116 = vsub.f32 %v3832, %v4115
    %4117 = vmatpush.msra.mxu0 %v4116
    %v4118 = vand.u32 %v1727, 4294901760
    %v4119 = vsub.f32 %v1727, %v4118
    %4120 = vmatmul.f32.gmra.mxu0 %v4119
    %v4121 = vpop.f32.mrf.mxu0
    %v4122 = vadd.f32 %v4092, %v4121
    %4123 = vdwg.mxu0
    %4124 = vmatpush.msra.mxu0 0.0
    %4125 = vmatpush.msra.mxu0 0.0
    %4126 = vmatpush.msra.mxu0 0.0
    %4127 = vmatpush.msra.mxu0 0.0
    %4128 = vmatpush.msra.mxu0 0.0
    %4129 = vmatpush.msra.mxu0 0.0
    %4130 = vmatpush.msra.mxu0 0.0
    %4131 = vmatpush.msra.mxu0 0.0
    %4132 = vmatpush.msra.mxu0 0.0
    %4133 = vmatpush.msra.mxu0 0.0
    %4134 = vmatpush.msra.mxu0 0.0
    %4135 = vmatpush.msra.mxu0 0.0
    %v4136 = vand.u32 %v3838, 4294901760
    %4137 = vmatpush.msra.mxu0 %v4136
    %v4138 = vand.u32 %v3836, 4294901760
    %4139 = vmatpush.msra.mxu0 %v4138
    %v4140 = vand.u32 %v3834, 4294901760
    %4141 = vmatpush.msra.mxu0 %v4140
    %v4142 = vand.u32 %v3832, 4294901760
    %4143 = vmatpush.msra.mxu0 %v4142
    %v4144 = vand.u32 %v1727, 4294901760
    %v4145 = vsub.f32 %v1727, %v4144
    %v4146 = vand.u32 %v4145, 4294901760
    %4147 = vmatmul.f32.gmra.mxu0 %v4146
    %v4148 = vpop.f32.mrf.mxu0
    %v4149 = vadd.f32 %v4122, %v4148
    %4150 = vdwg.mxu0
    %4151 = vmatpush.msra.mxu0 0.0
    %4152 = vmatpush.msra.mxu0 0.0
    %4153 = vmatpush.msra.mxu0 0.0
    %4154 = vmatpush.msra.mxu0 0.0
    %4155 = vmatpush.msra.mxu0 0.0
    %4156 = vmatpush.msra.mxu0 0.0
    %4157 = vmatpush.msra.mxu0 0.0
    %4158 = vmatpush.msra.mxu0 0.0
    %4159 = vmatpush.msra.mxu0 0.0
    %4160 = vmatpush.msra.mxu0 0.0
    %4161 = vmatpush.msra.mxu0 0.0
    %4162 = vmatpush.msra.mxu0 0.0
    %v4163 = vand.u32 %v3838, 4294901760
    %v4164 = vsub.f32 %v3838, %v4163
    %v4165 = vand.u32 %v4164, 4294901760
    %4166 = vmatpush.msra.mxu0 %v4165
    %v4167 = vand.u32 %v3836, 4294901760
    %v4168 = vsub.f32 %v3836, %v4167
    %v4169 = vand.u32 %v4168, 4294901760
    %4170 = vmatpush.msra.mxu0 %v4169
    %v4171 = vand.u32 %v3834, 4294901760
    %v4172 = vsub.f32 %v3834, %v4171
    %v4173 = vand.u32 %v4172, 4294901760
    %4174 = vmatpush.msra.mxu0 %v4173
    %v4175 = vand.u32 %v3832, 4294901760
    %v4176 = vsub.f32 %v3832, %v4175
    %v4177 = vand.u32 %v4176, 4294901760
    %4178 = vmatpush.msra.mxu0 %v4177
    %v4179 = vand.u32 %v1727, 4294901760
    %4180 = vmatmul.f32.gmra.mxu0 %v4179
    %v4181 = vpop.f32.mrf.mxu0
    %v4182 = vadd.f32 %v4149, %v4181
    %4183 = vdwg.mxu0
    %4184 = vmatpush.msra.mxu0 0.0
    %4185 = vmatpush.msra.mxu0 0.0
    %4186 = vmatpush.msra.mxu0 0.0
    %4187 = vmatpush.msra.mxu0 0.0
    %4188 = vmatpush.msra.mxu0 0.0
    %4189 = vmatpush.msra.mxu0 0.0
    %4190 = vmatpush.msra.mxu0 0.0
    %4191 = vmatpush.msra.mxu0 0.0
    %4192 = vmatpush.msra.mxu0 0.0
    %4193 = vmatpush.msra.mxu0 0.0
    %4194 = vmatpush.msra.mxu0 0.0
    %4195 = vmatpush.msra.mxu0 0.0
    %v4196 = vand.u32 %v3838, 4294901760
    %4197 = vmatpush.msra.mxu0 %v4196
    %v4198 = vand.u32 %v3836, 4294901760
    %4199 = vmatpush.msra.mxu0 %v4198
    %v4200 = vand.u32 %v3834, 4294901760
    %4201 = vmatpush.msra.mxu0 %v4200
    %v4202 = vand.u32 %v3832, 4294901760
    %4203 = vmatpush.msra.mxu0 %v4202
    %v4204 = vand.u32 %v1727, 4294901760
    %4205 = vmatmul.f32.gmra.mxu0 %v4204
    %v4206 = vpop.f32.mrf.mxu0
    %v4207 = vadd.f32 %v4182, %v4206
    %4208 = vdwg.mxu0
    %v4209 = vxor.u32 %v4022, 2147483648
    %v4210 = vxor.u32 %v4207, 2147483648
    %v4211 = vmul.f32 %v4209, 1.442695
    %v4212 = vpow.pop %v4211
    %v4213 = vmul.f32 %v4210, 1.442695
    %v4214 = vpow.pop %v4213
    %v4215 = vadd.f32 %v4212, 1.0
    %v4216 = vadd.f32 %v4214, 1.0
    %v4217 = vrcp.pop %v4215
    %v4218 = vmul.f32 %v4215, %v4217
    %v4219 = vsub.f32 1.0, %v4218
    %v4220 = vmul.f32 %v4217, %v4219
    %v4221 = vadd.f32 %v4217, %v4220
    %vm4222 = vweird.f32 %v4215
    %vm4223 = vweird.f32 %v4217
    %vm4224 = vmor %vm4222, %vm4223
    %v4225 = vsel %vm4224, %v4217, %v4221
    %v4226 = vand.u32 2147483647, %v4215
    %vm4227 = vcmp.eq.f32.partialorder %v4226, 8.507059e+37
    %v4228 = vand.u32 %v4215, 2147483648
    %v4229 = vor.u32 1.1754944e-38, %v4228
    %v4230 = vsel %vm4227, %v4229, %v4225
    %v4231 = vmul.f32 1.0, %v4230
    %v4232 = vrcp.pop %v4216
    %v4233 = vmul.f32 %v4216, %v4232
    %v4234 = vsub.f32 1.0, %v4233
    %v4235 = vmul.f32 %v4232, %v4234
    %v4236 = vadd.f32 %v4232, %v4235
    %vm4237 = vweird.f32 %v4216
    %vm4238 = vweird.f32 %v4232
    %vm4239 = vmor %vm4237, %vm4238
    %v4240 = vsel %vm4239, %v4232, %v4236
    %v4241 = vand.u32 2147483647, %v4216
    %vm4242 = vcmp.eq.f32.partialorder %v4241, 8.507059e+37
    %v4243 = vand.u32 %v4216, 2147483648
    %v4244 = vor.u32 1.1754944e-38, %v4243
    %v4245 = vsel %vm4242, %v4244, %v4240
    %v4246 = vmul.f32 1.0, %v4245
    %4248 = vset.pattern.permute.xlu0 0
    %4249 = vperm.xlu0 %4248, %v2601
    %v4250 = vpop.permute.xlu0 %4249
    %4253 = vset.pattern.permute.xlu0 0
    %4254 = vperm.xlu0 %4253, %v2616
    %v4255 = vpop.permute.xlu0 %4254
    %4258 = vset.pattern.permute.xlu0 0
    %4259 = vperm.xlu0 %4258, %v2631
    %v4260 = vpop.permute.xlu0 %4259
    %4263 = vset.pattern.permute.xlu0 0
    %4264 = vperm.xlu0 %4263, %v2646
    %v4265 = vpop.permute.xlu0 %4264
    %v4267 = vperm.slane %v4231, 1
    %v4268 = vperm.slane %v4246, 1
    %v4269 = vadd.f32 %v4250, %v4267
    %v4270 = vadd.f32 %v4250, %v4268
    %v4271 = vadd.f32 %v4255, %v4267
    %v4272 = vadd.f32 %v4255, %v4268
    %v4273 = vadd.f32 %v4260, %v4267
    %v4274 = vadd.f32 %v4260, %v4268
    %v4275 = vadd.f32 %v4265, %v4267
    %v4276 = vadd.f32 %v4265, %v4268
    %v4277 = vmul.f32 %v4269, 0.5
    %v4278 = vmul.f32 %v4270, 0.5
    %v4279 = vmul.f32 %v4271, 0.5
    %v4280 = vmul.f32 %v4272, 0.5
    %v4281 = vmul.f32 %v4273, 0.5
    %v4282 = vmul.f32 %v4274, 0.5
    %v4283 = vmul.f32 %v4275, 0.5
    %v4284 = vmul.f32 %v4276, 0.5
    %v4285 = vmul.f32 %v4277, %v2271
    %v4286 = vmul.f32 %v4278, %v2272
    %v4287 = vmul.f32 %v4279, %v2273
    %v4288 = vmul.f32 %v4280, %v2274
    %v4289 = vmul.f32 %v4281, %v2275
    %v4290 = vmul.f32 %v4282, %v2276
    %v4291 = vmul.f32 %v4283, %v2277
    %v4292 = vmul.f32 %v4284, %v2278
    %v4293 = vadd.f32 %v2262, %v4285
    %v4294 = vadd.f32 %v2263, %v4286
    %v4295 = vadd.f32 %v2264, %v4287
    %v4296 = vadd.f32 %v2265, %v4288
    %v4297 = vadd.f32 %v2266, %v4289
    %v4298 = vadd.f32 %v2267, %v4290
    %v4299 = vadd.f32 %v2268, %v4291
    %v4300 = vadd.f32 %v2269, %v4292
    %s4301 = scalar_lea.vmem [#allocation7], 64
    %4302 = vst [vmem:[%s4301] sm:$0xff] %v4293
    %4303 = vst [vmem:[%s4301 + $0x8] sm:$0xff] %v4294
    %4304 = vst [vmem:[%s4301 + $0x10] sm:$0xff] %v4295
    %4305 = vst [vmem:[%s4301 + $0x18] sm:$0xff] %v4296
    %4306 = vst [vmem:[%s4301 + $0x20] sm:$0xff] %v4297
    %4307 = vst [vmem:[%s4301 + $0x28] sm:$0xff] %v4298
    %4308 = vst [vmem:[%s4301 + $0x30] sm:$0xff] %v4299
    %4309 = vst [vmem:[%s4301 + $0x38] sm:$0xff] %v4300
    %4311 = vset.pattern.permute.xlu0 0
    %4312 = vperm.xlu0 %4311, %v2541
    %v4313 = vpop.permute.xlu0 %4312
    %4316 = vset.pattern.permute.xlu0 0
    %4317 = vperm.xlu0 %4316, %v2556
    %v4318 = vpop.permute.xlu0 %4317
    %4321 = vset.pattern.permute.xlu0 0
    %4322 = vperm.xlu0 %4321, %v2571
    %v4323 = vpop.permute.xlu0 %4322
    %4326 = vset.pattern.permute.xlu0 0
    %4327 = vperm.xlu0 %4326, %v2586
    %v4328 = vpop.permute.xlu0 %4327
    %v4330 = vperm.slane %v4231, 0
    %v4331 = vperm.slane %v4246, 0
    %v4332 = vadd.f32 %v4313, %v4330
    %v4333 = vadd.f32 %v4313, %v4331
    %v4334 = vadd.f32 %v4318, %v4330
    %v4335 = vadd.f32 %v4318, %v4331
    %v4336 = vadd.f32 %v4323, %v4330
    %v4337 = vadd.f32 %v4323, %v4331
    %v4338 = vadd.f32 %v4328, %v4330
    %v4339 = vadd.f32 %v4328, %v4331
    %v4340 = vmul.f32 %v4332, 0.5
    %v4341 = vmul.f32 %v4333, 0.5
    %v4342 = vmul.f32 %v4334, 0.5
    %v4343 = vmul.f32 %v4335, 0.5
    %v4344 = vmul.f32 %v4336, 0.5
    %v4345 = vmul.f32 %v4337, 0.5
    %v4346 = vmul.f32 %v4338, 0.5
    %v4347 = vmul.f32 %v4339, 0.5
    %v4348 = vmul.f32 %v4340, %v2262
    %v4349 = vmul.f32 %v4341, %v2263
    %v4350 = vmul.f32 %v4342, %v2264
    %v4351 = vmul.f32 %v4343, %v2265
    %v4352 = vmul.f32 %v4344, %v2266
    %v4353 = vmul.f32 %v4345, %v2267
    %v4354 = vmul.f32 %v4346, %v2268
    %v4355 = vmul.f32 %v4347, %v2269
    %v4356 = vadd.f32 %v2271, %v4348
    %v4357 = vadd.f32 %v2272, %v4349
    %v4358 = vadd.f32 %v2273, %v4350
    %v4359 = vadd.f32 %v2274, %v4351
    %v4360 = vadd.f32 %v2275, %v4352
    %v4361 = vadd.f32 %v2276, %v4353
    %v4362 = vadd.f32 %v2277, %v4354
    %v4363 = vadd.f32 %v2278, %v4355
    %s4364 = scalar_lea.vmem [#allocation8], 64
    %4365 = vst [vmem:[%s4364] sm:$0xff] %v4356
    %4366 = vst [vmem:[%s4364 + $0x8] sm:$0xff] %v4357
    %4367 = vst [vmem:[%s4364 + $0x10] sm:$0xff] %v4358
    %4368 = vst [vmem:[%s4364 + $0x18] sm:$0xff] %v4359
    %4369 = vst [vmem:[%s4364 + $0x20] sm:$0xff] %v4360
    %4370 = vst [vmem:[%s4364 + $0x28] sm:$0xff] %v4361
    %4371 = vst [vmem:[%s4364 + $0x30] sm:$0xff] %v4362
    %4372 = vst [vmem:[%s4364 + $0x38] sm:$0xff] %v4363
    // Predicated region
    $region26: #{tpu_custom_call.1} parent=1 // pred_check
      _
    $region27: #{tpu_custom_call.1} parent=1 // pred_check_branch
      %4374 = sbr.rel (0) target = $region29
    $region28: #{tpu_custom_call.1} parent=1 // pred_region
      %4376 = vsyncadd [#allocation4], 0
      %s4377 = sshll.u32 [#allocation7], 4
      %s4378 = int_to_ptr.vmem [resolvable:$true] %s4377
      %s4379 = sshll.u32 %s4, 4
      %s4380 = int_to_ptr.hbm [resolvable:$true] %s4379
      %4385 = dma.vmem_to_hbm [thread:$0]  %s4378, 2048, %s4380, [#allocation4], 256, 256, 16
    $region29: #{tpu_custom_call.1} parent=1 // pred_fallthru
      _
    // Predicated region
    $region30: #{tpu_custom_call.1} parent=1 // pred_check
      _
    $region31: #{tpu_custom_call.1} parent=1 // pred_check_branch
      %4387 = sbr.rel (0) target = $region33
    $region32: #{tpu_custom_call.1} parent=1 // pred_region
      %4389 = vsyncadd [#allocation9], 0
      %s4390 = sshll.u32 [#allocation8], 4
      %s4391 = int_to_ptr.vmem [resolvable:$true] %s4390
      %s4392 = sshll.u32 %s5, 4
      %s4393 = int_to_ptr.hbm [resolvable:$true] %s4392
      %4398 = dma.vmem_to_hbm [thread:$0]  %s4391, 2048, %s4393, [#allocation9], 256, 256, 16
    $region33: #{tpu_custom_call.1} parent=1 // pred_fallthru
      _
    // Predicated region
    $region34: #{tpu_custom_call.1} parent=1 // pred_check
      _
    $region35: #{tpu_custom_call.1} parent=1 // pred_check_branch
      %4400 = sbr.rel (0) target = $region37
    $region36: #{tpu_custom_call.1} parent=1 // pred_region
      %4402 = dma.done [#allocation4], 2048
    $region37: #{tpu_custom_call.1} parent=1 // pred_fallthru
      _
    // Predicated region
    $region38: #{tpu_custom_call.1} parent=1 // pred_check
      _
    $region39: #{tpu_custom_call.1} parent=1 // pred_check_branch
      %4404 = sbr.rel (0) target = $region41
    $region40: #{tpu_custom_call.1} parent=1 // pred_region
      %4406 = dma.done [#allocation9], 2048
    $region41: #{tpu_custom_call.1} parent=1 // pred_fallthru
      _
    %4407 = vsyncpa [#allocation3], 1
    %4408 = vsyncpa [#allocation6], 1
    %4409 = vsyncpa [#allocation4], 1
    %4410 = vsyncpa [#allocation9], 1

</llo_original>
